<compile_context>
chip_gen: v5e
topology: v5e:2x2
jax: 0.10.0
libtpu: 0.0.40
codegen_flags: <defaults>
</compile_context>

<pallas_src>
import functools

import jax
import jax.numpy as jnp
import numpy as np
from jax.experimental import pallas as pl
from jax.experimental.pallas import tpu as pltpu

LN_EPS = 1e-6
_INV_SQRT2 = 0.7071067811865476
_NEG_INF = -1e9

# MXU operand dtype (bf16 MXU on v5e/v6e/v7x). Accumulation and all VPU/EUP
# epilogue math (LayerNorm stats, softmax, residuals) stay float32.
MATMUL_DTYPE = jnp.bfloat16


# ---------------------------------------------------------------------------
# Chip-derived VMEM budget and tile-size selection.
# ---------------------------------------------------------------------------
def _vmem_budget_bytes():
    """~75% of physical VMEM: ~96 MiB on v5e/v6e, ~48 MiB on v7x."""
    phys = 64 * 1024 * 1024            # conservative fallback (v7x-sized)
    try:
        phys = int(pltpu.get_tpu_info().vmem_capacity_bytes)
    except Exception:
        pass
    return (phys * 3) // 4


def _mha_step_bytes(bb, L, D, H, dk, dv, cross, return_attn):
    """Rough per-grid-step VMEM estimate (double-buffered IO + live temps)."""
    f32, bf16, db = 4, 2, 2
    b = bb * L * D * f32 * db                        # q input blocks
    if cross:
        b += bb * L * D * f32 * db                   # separate kv block stream
    b += bb * L * L * bf16 * db                      # additive mask bias
    b += bb * L * D * f32 * db                       # output
    if return_attn:
        b += bb * H * L * L * bf16 * db              # attention probabilities
    b += (3 * D * H * max(dk, dv) + H * dv * D + 3 * D) * f32 * db   # weights
    live = 6 * bb * L * H * max(dk, dv) * f32        # Q/K/V + head-split copies
    live += 3 * bb * H * L * L * f32                 # scores / exp / attn
    live += 4 * bb * L * D * f32                     # qn / residual / ctx / o
    return b + live


def _ffn_step_bytes(tm, D, d_inner, has_mask):
    f32, db = 4, 2
    b = tm * D * f32 * db * 2                        # x in + out
    if has_mask:
        b += tm * f32 * db
    b += (2 * D * d_inner + d_inner + 3 * D) * f32 * db
    live = 2 * tm * d_inner * f32 + 3 * tm * D * f32
    return b + live


def _pick_batch_block(batch, n_stack, bytes_fn, budget):
    """Largest divisor bb of `batch` fitting the VMEM budget while keeping
    >= 2 parallel grid steps overall (v7x has 2 TensorCores)."""
    best = 1
    for cand in range(1, batch + 1):
        if batch % cand:
            continue
        if batch > 1 and n_stack * (batch // cand) < 2:
            continue
        if bytes_fn(cand) <= budget:
            best = cand
    return best


def _pick_row_tile(n, bytes_fn, budget):
    cands = (2048, 1024, 512, 256, 128, 64, 32, 16, 8)
    for need_two in (True, False):
        for t in cands:
            if n % t:
                continue
            if need_two and n // t < 2:
                continue
            if bytes_fn(t) <= budget:
                return t
    return n


# ---------------------------------------------------------------------------
# In-kernel math helpers.
# ---------------------------------------------------------------------------
def _mm(a, b):
    """Matmul with bf16 MXU operands and f32 accumulation."""
    return jnp.dot(a.astype(MATMUL_DTYPE), b.astype(MATMUL_DTYPE),
                   preferred_element_type=jnp.float32)


def _layernorm(x, gamma, beta):
    mu = jnp.mean(x, axis=-1, keepdims=True)
    var = jnp.mean((x - mu) ** 2, axis=-1, keepdims=True)
    return (x - mu) * jax.lax.rsqrt(var + LN_EPS) * gamma + beta


def _split_heads(x, bb, seq, n_head, d_h):
    # (bb*seq, H*d_h) -> (bb*H, seq, d_h): heads become the batch dim of the
    # 3-D batched dot_general.
    return jnp.swapaxes(x.reshape(bb, seq, n_head, d_h), 1, 2).reshape(
        bb * n_head, seq, d_h)


def _merge_heads(x, bb, seq, n_head, d_h):
    # (bb*H, seq, d_h) -> (bb*seq, H*d_h)
    return jnp.swapaxes(x.reshape(bb, n_head, seq, d_h), 1, 2).reshape(
        bb * seq, n_head * d_h)


# ---------------------------------------------------------------------------
# Pallas kernel: pre-norm multi-head attention (normalize_before=True).
# One grid step == (one stacked attention module, bb batch rows).
# ---------------------------------------------------------------------------
def mha_kernel(*refs, n_head, d_k, d_v, cross, return_attn):
    i = 0
    q_ref = refs[i]; i += 1
    if cross:
        kv_ref = refs[i]; i += 1          # same HBM array, index-mapped to 1-s
    else:
        kv_ref = q_ref                    # self-attention: single DMA stream
    bias_ref = refs[i]; i += 1
    wq_ref, wk_ref, wv_ref, wfc_ref, bfc_ref, g_ref, b_ref = refs[i:i + 7]
    i += 7
    out_ref = refs[i]; i += 1
    attn_ref = refs[i] if return_attn else None

    _, bb, Lq, D = q_ref.shape
    Lk = kv_ref.shape[2]
    H = n_head

    q = q_ref[0]                                    # (bb, Lq, D)
    kv = kv_ref[0]                                  # (bb, Lk, D)
    bias = bias_ref[...].astype(jnp.float32)        # (bb, Lq, Lk) additive mask

    residual = q
    # normalize_before=True: layer-norm applied to q only (matches reference).
    qn = _layernorm(q, g_ref[0], b_ref[0])

    # Projections on the flattened (bb*L, D) slab (large M for the MXU).
    qn2 = qn.reshape(bb * Lq, D)
    kv2 = kv.reshape(bb * Lk, D)
    scale = 1.0 / (float(d_k) ** 0.5)
    Q = _mm(qn2, wq_ref[0]) * scale                 # (bb*Lq, H*dk), scaled once
    K = _mm(kv2, wk_ref[0])                         # (bb*Lk, H*dk)
    V = _mm(kv2, wv_ref[0])                         # (bb*Lk, H*dv)

    Qh = _split_heads(Q, bb, Lq, H, d_k)            # (bb*H, Lq, dk)
    Kh = _split_heads(K, bb, Lk, H, d_k)
    Vh = _split_heads(V, bb, Lk, H, d_v)

    # Head-batched score matmul (single 3-D dot_general, batch = bb*H).
    # NOTE: with tiny d_k the MXU K-dim is underfilled; acceptable while the
    # VALU has slack (see review), revisit if production d_k stays this small.
    scores = jnp.einsum("bqd,bkd->bqk",
                        Qh.astype(MATMUL_DTYPE), Kh.astype(MATMUL_DTYPE),
                        preferred_element_type=jnp.float32)
    scores = scores.reshape(bb, H, Lq, Lk) + bias[:, None, :, :]
    scores = scores - jnp.max(scores, axis=-1, keepdims=True)
    e = jnp.exp(scores)
    denom = jnp.sum(e, axis=-1, keepdims=True)
    attn = e * pl.reciprocal(denom, approx=True)    # EUP reciprocal (free slot)
    attn3 = attn.reshape(bb * H, Lq, Lk)            # leading-dim reshape: free

    # Head-batched attn @ V, merge heads, output projection, residual add.
    ctx = jnp.einsum("bqk,bkd->bqd",
                     attn3.astype(MATMUL_DTYPE), Vh.astype(MATMUL_DTYPE),
                     preferred_element_type=jnp.float32)      # (bb*H, Lq, dv)
    ctx = _merge_heads(ctx, bb, Lq, H, d_v)                   # (bb*Lq, H*dv)
    o = _mm(ctx, wfc_ref[0]) + bfc_ref[0]                     # (bb*Lq, D)
    out_ref[0] = o.reshape(bb, Lq, D) + residual              # dropout == id

    if return_attn:
        # Layout-preserving (bb, H*Lq, Lk) bf16 store — no transpose; the
        # wrapper reshapes to (B, H, Lq, Lk).
        attn_ref[0] = attn3.reshape(bb, H * Lq, Lk).astype(attn_ref.dtype)


def multi_head_attention(x_stack, mask_bias, params_list, *,
                         n_head, d_k, d_v, cross, return_attn):
    """x_stack: (S, B, L, D) stacked attention-module inputs sharing one
    additive mask bias (B, L, L) bf16. If cross=True, module s attends with
    q = x_stack[s] and kv = x_stack[1-s] (no kv copy materialized); otherwise
    q = kv = x_stack[s]."""
    S, B, L, D = x_stack.shape
    budget = _vmem_budget_bytes()
    bb = _pick_batch_block(
        B, S,
        lambda c: _mha_step_bytes(c, L, D, n_head, d_k, d_v, cross, return_attn),
        budget)
    nb = B // bb

    wq = jnp.stack([p["wq"] for p in params_list], axis=0)
    wk = jnp.stack([p["wk"] for p in params_list], axis=0)
    wv = jnp.stack([p["wv"] for p in params_list], axis=0)
    wfc = jnp.stack([p["wfc"] for p in params_list], axis=0)
    bfc = jnp.stack([p["bfc"] for p in params_list], axis=0)
    ln_g = jnp.stack([p["ln_g"] for p in params_list], axis=0)
    ln_b = jnp.stack([p["ln_b"] for p in params_list], axis=0)

    kern = functools.partial(mha_kernel, n_head=n_head, d_k=d_k, d_v=d_v,
                             cross=cross, return_attn=return_attn)

    x_spec = pl.BlockSpec((1, bb, L, D), lambda s, b: (s, b, 0, 0))
    in_specs = [x_spec]
    operands = [x_stack]
    if cross:
        # Same array, swapped module index: kv of module s is module 1-s.
        in_specs.append(pl.BlockSpec((1, bb, L, D), lambda s, b: (1 - s, b, 0, 0)))
        operands.append(x_stack)
    in_specs += [
        pl.BlockSpec((bb, L, L), lambda s, b: (b, 0, 0)),      # bias shared over s
        pl.BlockSpec((1, D, n_head * d_k), lambda s, b: (s, 0, 0)),
        pl.BlockSpec((1, D, n_head * d_k), lambda s, b: (s, 0, 0)),
        pl.BlockSpec((1, D, n_head * d_v), lambda s, b: (s, 0, 0)),
        pl.BlockSpec((1, n_head * d_v, D), lambda s, b: (s, 0, 0)),
        pl.BlockSpec((1, 1, D), lambda s, b: (s, 0, 0)),
        pl.BlockSpec((1, 1, D), lambda s, b: (s, 0, 0)),
        pl.BlockSpec((1, 1, D), lambda s, b: (s, 0, 0)),
    ]
    operands += [mask_bias, wq, wk, wv, wfc, bfc, ln_g, ln_b]

    out_specs = pl.BlockSpec((1, bb, L, D), lambda s, b: (s, b, 0, 0))
    out_shape = jax.ShapeDtypeStruct((S, B, L, D), jnp.float32)
    if return_attn:
        out_specs = (out_specs,
                     pl.BlockSpec((1, bb, n_head * L, L), lambda s, b: (s, b, 0, 0)))
        out_shape = (out_shape,
                     jax.ShapeDtypeStruct((S, B, n_head * L, L), jnp.bfloat16))

    res = pl.pallas_call(
        kern,
        out_shape=out_shape,
        grid=(S, nb),
        in_specs=in_specs,
        out_specs=out_specs,
        compiler_params=pltpu.CompilerParams(
            dimension_semantics=("parallel", "parallel"),
            vmem_limit_bytes=budget),
    )(*operands)

    if return_attn:
        out, attn_ld = res
        attn = attn_ld.reshape(S, B, n_head, L, L)   # bf16, reshape only
        return out, attn
    return res, None


# ---------------------------------------------------------------------------
# Pallas kernel: position-wise feed-forward (pre-LN, exact GELU, residual),
# with the non_pad_mask multiplies fused in; gridded over (B*L) row tiles.
# ---------------------------------------------------------------------------
def ffn_kernel(*refs, has_mask):
    i = 0
    x_ref = refs[i]; i += 1
    m_ref = None
    if has_mask:
        m_ref = refs[i]; i += 1
    w1_ref, b1_ref, w2_ref, b2_ref, g_ref, b_ref = refs[i:i + 6]
    out_ref = refs[i + 6]

    x = x_ref[...]                              # (TM, D)
    if has_mask:
        x = x * m_ref[...]                      # enc_output *= non_pad_mask
    residual = x
    xn = _layernorm(x, g_ref[...], b_ref[...])
    h = _mm(xn, w1_ref[...]) + b1_ref[...]
    h = 0.5 * h * (1.0 + jax.lax.erf(h * _INV_SQRT2))   # exact GELU (F.gelu)
    y = _mm(h, w2_ref[...]) + b2_ref[...] + residual    # dropout == identity
    if has_mask:
        y = y * m_ref[...]                      # trailing non_pad_mask multiply
    out_ref[...] = y


def pos_ffn(x, p, non_pad_mask=None):
    B, L, D = x.shape
    N = B * L
    d_inner = p["w1"].shape[1]
    has_mask = non_pad_mask is not None
    budget = _vmem_budget_bytes()
    tm = _pick_row_tile(N, lambda t: _ffn_step_bytes(t, D, d_inner, has_mask),
                        budget)

    operands = [x.reshape(N, D)]
    in_specs = [pl.BlockSpec((tm, D), lambda i: (i, 0))]
    if has_mask:
        operands.append(non_pad_mask.reshape(N, 1))
        in_specs.append(pl.BlockSpec((tm, 1), lambda i: (i, 0)))
    operands += [p["w1"], p["b1"], p["w2"], p["b2"], p["ln_g"], p["ln_b"]]
    in_specs += [
        pl.BlockSpec((D, d_inner), lambda i: (0, 0)),
        pl.BlockSpec((1, d_inner), lambda i: (0, 0)),
        pl.BlockSpec((d_inner, D), lambda i: (0, 0)),
        pl.BlockSpec((1, D), lambda i: (0, 0)),
        pl.BlockSpec((1, D), lambda i: (0, 0)),
        pl.BlockSpec((1, D), lambda i: (0, 0)),
    ]

    out = pl.pallas_call(
        functools.partial(ffn_kernel, has_mask=has_mask),
        out_shape=jax.ShapeDtypeStruct((N, D), jnp.float32),
        grid=(N // tm,),
        in_specs=in_specs,
        out_specs=pl.BlockSpec((tm, D), lambda i: (i, 0)),
        compiler_params=pltpu.CompilerParams(
            dimension_semantics=("parallel",),
            vmem_limit_bytes=budget),
    )(*operands)
    return out.reshape(B, L, D)


# ---------------------------------------------------------------------------
# modEncLayer forward (glue in plain JAX; all hot paths in the Pallas kernels).
# ---------------------------------------------------------------------------
def _mask_bias(mask):
    # masked_fill(mask, -1e9) expressed as an additive bias; bf16 halves the
    # mask HBM stream. (For fully-masked rows the additive form softmaxes the
    # raw scores instead of going uniform — such rows never occur here.)
    return jnp.where(mask > 0, jnp.float32(_NEG_INF), jnp.float32(0.0)).astype(
        jnp.bfloat16)


def mod_enc_layer(enc_input, params, non_pad_mask, slf_attn_mask,
                  *, rep_num, n_head, d_k, d_v):
    B, all_len, D = enc_input.shape
    time_mark_len = all_len - rep_num
    time_len = time_mark_len // 2
    mark_len = time_mark_len // 2
    half_rep = rep_num // 2

    time_mark_eve = enc_input[:, :all_len - rep_num]
    time_mark_rep = enc_input[:, all_len - rep_num:]
    time_enc = jnp.concatenate(
        [time_mark_eve[:, :time_len], time_mark_rep[:, :half_rep]], axis=1)
    mark_enc = jnp.concatenate(
        [time_mark_eve[:, time_len:], time_mark_rep[:, half_rep:]], axis=1)
    one_mask = slf_attn_mask[:, time_len:time_mark_len + half_rep,
                             time_len:time_mark_len + half_rep]

    # Two independent cross-attentions (time->mark, mark->time) in ONE
    # pallas_call: a single stacked input, kv selected by the BlockSpec
    # index_map (1-s) — no kv_stack copy materialized in HBM.
    x_stack = jnp.stack([time_enc, mark_enc], axis=0)
    cross_out, _ = multi_head_attention(
        x_stack, _mask_bias(one_mask),
        [params["time_mlt_attn"], params["mark_mlt_attn"]],
        n_head=n_head, d_k=d_k, d_v=d_v, cross=True, return_attn=False)
    time_out, mark_out = cross_out[0], cross_out[1]

    time_eve = time_out[:, :time_len]
    time_rep = time_out[:, time_len:]
    mark_eve = mark_out[:, :mark_len]
    mark_rep = mark_out[:, mark_len:]
    cat_output = jnp.concatenate([time_eve, mark_eve, time_rep, mark_rep], axis=1)

    # Self-attention (q = k = v — single input operand); returns attention
    # probabilities (stored bf16, layout-preserving).
    enc_out_s, enc_slf_attn_s = multi_head_attention(
        cat_output[None], _mask_bias(slf_attn_mask),
        [params["slf_attn"]],
        n_head=n_head, d_k=d_k, d_v=d_v, cross=False, return_attn=True)
    enc_output = enc_out_s[0]
    enc_slf_attn = enc_slf_attn_s[0]

    # FFN with the non_pad_mask multiplies fused into the kernel.
    enc_output = pos_ffn(enc_output, params["pos_ffn"], non_pad_mask)
    return enc_output, enc_slf_attn


# ---------------------------------------------------------------------------
# Pure-JAX reference (same bf16-operand / f32-accumulation precision policy).
# ---------------------------------------------------------------------------
def mha_ref(q, kv, mask, p, n_head, d_k, d_v):
    B, Lq, D = q.shape
    Lk = kv.shape[1]
    residual = q
    qn = _layernorm(q, p["ln_g"], p["ln_b"])
    Q = (_mm(qn, p["wq"]) / (float(d_k) ** 0.5)).reshape(
        B, Lq, n_head, d_k).transpose(0, 2, 1, 3)
    K = _mm(kv, p["wk"]).reshape(B, Lk, n_head, d_k).transpose(0, 2, 1, 3)
    V = _mm(kv, p["wv"]).reshape(B, Lk, n_head, d_v).transpose(0, 2, 1, 3)
    scores = jnp.einsum("bhqd,bhkd->bhqk",
                        Q.astype(MATMUL_DTYPE), K.astype(MATMUL_DTYPE),
                        preferred_element_type=jnp.float32)
    scores = jnp.where(mask[:, None] > 0, _NEG_INF, scores)
    attn = jax.nn.softmax(scores, axis=-1)
    ctx = jnp.einsum("bhqk,bhkd->bhqd",
                     attn.astype(MATMUL_DTYPE), V.astype(MATMUL_DTYPE),
                     preferred_element_type=jnp.float32)
    ctx = ctx.transpose(0, 2, 1, 3).reshape(B, Lq, n_head * d_v)
    o = _mm(ctx, p["wfc"]) + p["bfc"]
    return o + residual, attn


def ffn_ref(x, p):
    residual = x
    xn = _layernorm(x, p["ln_g"], p["ln_b"])
    h = _mm(xn, p["w1"]) + p["b1"]
    h = 0.5 * h * (1.0 + jax.lax.erf(h * _INV_SQRT2))
    return _mm(h, p["w2"]) + p["b2"] + residual


def mod_enc_layer_ref(enc_input, params, non_pad_mask, slf_attn_mask,
                      *, rep_num, n_head, d_k, d_v):
    B, all_len, D = enc_input.shape
    time_mark_len = all_len - rep_num
    time_len = time_mark_len // 2
    mark_len = time_mark_len // 2
    half_rep = rep_num // 2
    time_mark_eve = enc_input[:, :all_len - rep_num]
    time_mark_rep = enc_input[:, all_len - rep_num:]
    time_enc = jnp.concatenate(
        [time_mark_eve[:, :time_len], time_mark_rep[:, :half_rep]], axis=1)
    mark_enc = jnp.concatenate(
        [time_mark_eve[:, time_len:], time_mark_rep[:, half_rep:]], axis=1)
    one_mask = slf_attn_mask[:, time_len:time_mark_len + half_rep,
                             time_len:time_mark_len + half_rep]
    time_out, _ = mha_ref(time_enc, mark_enc, one_mask,
                          params["time_mlt_attn"], n_head, d_k, d_v)
    mark_out, _ = mha_ref(mark_enc, time_enc, one_mask,
                          params["mark_mlt_attn"], n_head, d_k, d_v)
    cat_output = jnp.concatenate([time_out[:, :time_len], mark_out[:, :mark_len],
                                  time_out[:, time_len:], mark_out[:, mark_len:]],
                                 axis=1)
    enc_output, enc_slf_attn = mha_ref(cat_output, cat_output, slf_attn_mask,
                                       params["slf_attn"], n_head, d_k, d_v)
    enc_output = enc_output * non_pad_mask
    enc_output = ffn_ref(enc_output, params["pos_ffn"])
    enc_output = enc_output * non_pad_mask
    return enc_output, enc_slf_attn


# ---------------------------------------------------------------------------
# Deterministic parameter init (shapes follow the PyTorch module's __init__).
# ---------------------------------------------------------------------------
def init_mha_params(key, d_model, n_head, d_k, d_v):
    ks = jax.random.split(key, 5)
    s_in = 1.0 / np.sqrt(d_model)
    s_fc = 1.0 / np.sqrt(n_head * d_v)
    return {
        "wq": (jax.random.normal(ks[0], (d_model, n_head * d_k)) * s_in).astype(jnp.float32),
        "wk": (jax.random.normal(ks[1], (d_model, n_head * d_k)) * s_in).astype(jnp.float32),
        "wv": (jax.random.normal(ks[2], (d_model, n_head * d_v)) * s_in).astype(jnp.float32),
        "wfc": (jax.random.normal(ks[3], (n_head * d_v, d_model)) * s_fc).astype(jnp.float32),
        "bfc": (jax.random.normal(ks[4], (1, d_model)) * 0.01).astype(jnp.float32),
        "ln_g": jnp.ones((1, d_model), jnp.float32),
        "ln_b": jnp.zeros((1, d_model), jnp.float32),
    }


def init_ffn_params(key, d_model, d_inner):
    ks = jax.random.split(key, 4)
    return {
        "w1": (jax.random.normal(ks[0], (d_model, d_inner)) / np.sqrt(d_model)).astype(jnp.float32),
        "b1": (jax.random.normal(ks[1], (1, d_inner)) * 0.01).astype(jnp.float32),
        "w2": (jax.random.normal(ks[2], (d_inner, d_model)) / np.sqrt(d_inner)).astype(jnp.float32),
        "b2": (jax.random.normal(ks[3], (1, d_model)) * 0.01).astype(jnp.float32),
        "ln_g": jnp.ones((1, d_model), jnp.float32),
        "ln_b": jnp.zeros((1, d_model), jnp.float32),
    }


def init_params(key, d_model, d_inner, n_head, d_k, d_v):
    ks = jax.random.split(key, 4)
    return {
        "slf_attn": init_mha_params(ks[0], d_model, n_head, d_k, d_v),
        "time_mlt_attn": init_mha_params(ks[1], d_model, n_head, d_k, d_v),
        "mark_mlt_attn": init_mha_params(ks[2], d_model, n_head, d_k, d_v),
        "pos_ffn": init_ffn_params(ks[3], d_model, d_inner),
    }


if __name__ == "__main__":
    # Small shapes consistent with the forward: all_len = 2*time_len + rep_num.
    B, all_len, rep_num = 2, 16, 4
    d_model, d_inner, n_head, d_k, d_v = 32, 64, 4, 8, 8

    key = jax.random.PRNGKey(0)
    k_x, k_np, k_p = jax.random.split(key, 3)
    enc_input = jax.random.normal(k_x, (B, all_len, d_model), jnp.float32)
    # Subsequent (causal) mask: 1.0 == masked (matches masked_fill semantics).
    causal = jnp.triu(jnp.ones((all_len, all_len), jnp.float32), k=1)
    slf_attn_mask = jnp.broadcast_to(causal, (B, all_len, all_len))
    non_pad_mask = (jax.random.uniform(k_np, (B, all_len, 1)) > 0.2).astype(jnp.float32)
    params = init_params(k_p, d_model, d_inner, n_head, d_k, d_v)

    fwd = jax.jit(functools.partial(mod_enc_layer,
                                    rep_num=rep_num, n_head=n_head,
                                    d_k=d_k, d_v=d_v))
    enc_output, enc_slf_attn = fwd(enc_input, params, non_pad_mask, slf_attn_mask)
    jax.block_until_ready((enc_output, enc_slf_attn))

    # Tolerance covers bf16 MXU operand rounding, the bf16 attn store, and the
    # approximate EUP reciprocal in the softmax denominator; structural bugs
    # (masking, residual, layout plumbing) would produce O(1) errors.
    ref_out, ref_attn = mod_enc_layer_ref(
        enc_input, params, non_pad_mask, slf_attn_mask,
        rep_num=rep_num, n_head=n_head, d_k=d_k, d_v=d_v)
    np.testing.assert_allclose(np.asarray(enc_output), np.asarray(ref_out),
                               rtol=2e-2, atol=2e-2)
    np.testing.assert_allclose(np.asarray(enc_slf_attn, dtype=np.float32),
                               np.asarray(ref_attn), rtol=2e-2, atol=2e-2)
    print("KERNEL_OK")
</pallas_src>

<mosaic_0001>
module attributes {stable_mosaic.version = 11 : i64} {
  func.func @mha_kernel(%arg0: i32, %arg1: i32, %arg2: memref<1x2x8x32xf32, #tpu.memory_space<vmem>>, %arg3: memref<1x2x8x32xf32, #tpu.memory_space<vmem>>, %arg4: memref<2x8x8xbf16, #tpu.memory_space<vmem>>, %arg5: memref<1x32x32xf32, #tpu.memory_space<vmem>>, %arg6: memref<1x32x32xf32, #tpu.memory_space<vmem>>, %arg7: memref<1x32x32xf32, #tpu.memory_space<vmem>>, %arg8: memref<1x32x32xf32, #tpu.memory_space<vmem>>, %arg9: memref<1x1x32xf32, #tpu.memory_space<vmem>>, %arg10: memref<1x1x32xf32, #tpu.memory_space<vmem>>, %arg11: memref<1x1x32xf32, #tpu.memory_space<vmem>>, %arg12: memref<1x2x8x32xf32, #tpu.memory_space<vmem>>) attributes {dimension_semantics = [#tpu.dimension_semantics<parallel>, #tpu.dimension_semantics<parallel>], iteration_bounds = array<i64: 2, 1>, scalar_prefetch = 0 : i64, scratch_operands = 0 : i64, tpu.core_type = #tpu.core_type<tc>, window_params = [{transform_indices = @transform_0, window_bounds = array<i64: 1, 2, 8, 32>}, {transform_indices = @transform_1, window_bounds = array<i64: 1, 2, 8, 32>}, {transform_indices = @transform_2, window_bounds = array<i64: 2, 8, 8>}, {transform_indices = @transform_3, window_bounds = array<i64: 1, 32, 32>}, {transform_indices = @transform_4, window_bounds = array<i64: 1, 32, 32>}, {transform_indices = @transform_5, window_bounds = array<i64: 1, 32, 32>}, {transform_indices = @transform_6, window_bounds = array<i64: 1, 32, 32>}, {transform_indices = @transform_7, window_bounds = array<i64: 1, 1, 32>}, {transform_indices = @transform_8, window_bounds = array<i64: 1, 1, 32>}, {transform_indices = @transform_9, window_bounds = array<i64: 1, 1, 32>}, {transform_indices = @transform_10, window_bounds = array<i64: 1, 2, 8, 32>}]} {
    %c0 = arith.constant 0 : index
    %c0_0 = arith.constant 0 : index
    %c0_1 = arith.constant 0 : index
    %c0_2 = arith.constant 0 : index
    %0 = vector.load %arg2[%c0, %c0_0, %c0_1, %c0_2] : memref<1x2x8x32xf32, #tpu.memory_space<vmem>>, vector<1x2x8x32xf32>
    %1 = vector.shape_cast %0 : vector<1x2x8x32xf32> to vector<2x8x32xf32>
    %c0_3 = arith.constant 0 : index
    %c0_4 = arith.constant 0 : index
    %c0_5 = arith.constant 0 : index
    %c0_6 = arith.constant 0 : index
    %2 = vector.load %arg3[%c0_3, %c0_4, %c0_5, %c0_6] : memref<1x2x8x32xf32, #tpu.memory_space<vmem>>, vector<1x2x8x32xf32>
    %3 = vector.shape_cast %2 : vector<1x2x8x32xf32> to vector<2x8x32xf32>
    %c0_7 = arith.constant 0 : index
    %c0_8 = arith.constant 0 : index
    %c0_9 = arith.constant 0 : index
    %4 = vector.load %arg4[%c0_7, %c0_8, %c0_9] : memref<2x8x8xbf16, #tpu.memory_space<vmem>>, vector<2x8x8xbf16>
    %5 = arith.extf %4 : vector<2x8x8xbf16> to vector<2x8x8xf32>
    %c0_10 = arith.constant 0 : index
    %c0_11 = arith.constant 0 : index
    %c0_12 = arith.constant 0 : index
    %6 = vector.load %arg10[%c0_10, %c0_11, %c0_12] : memref<1x1x32xf32, #tpu.memory_space<vmem>>, vector<1x1x32xf32>
    %7 = vector.shape_cast %6 : vector<1x1x32xf32> to vector<1x32xf32>
    %c0_13 = arith.constant 0 : index
    %c0_14 = arith.constant 0 : index
    %c0_15 = arith.constant 0 : index
    %8 = vector.load %arg11[%c0_13, %c0_14, %c0_15] : memref<1x1x32xf32, #tpu.memory_space<vmem>>, vector<1x1x32xf32>
    %9 = vector.shape_cast %8 : vector<1x1x32xf32> to vector<1x32xf32>
    %cst = arith.constant dense<0.000000e+00> : vector<2x8xf32>
    %10 = vector.multi_reduction <add>, %1, %cst [2] : vector<2x8x32xf32> to vector<2x8xf32>
    %11 = vector.shape_cast %10 : vector<2x8xf32> to vector<2x8x1xf32>
    %cst_16 = arith.constant 3.200000e+01 : f32
    %12 = vector.broadcast %cst_16 : f32 to vector<2x8x1xf32>
    %13 = arith.divf %11, %12 : vector<2x8x1xf32>
    %14 = vector.broadcast %13 : vector<2x8x1xf32> to vector<2x8x32xf32>
    %15 = arith.subf %1, %14 : vector<2x8x32xf32>
    %16 = arith.mulf %15, %15 : vector<2x8x32xf32>
    %cst_17 = arith.constant dense<0.000000e+00> : vector<2x8xf32>
    %17 = vector.multi_reduction <add>, %16, %cst_17 [2] : vector<2x8x32xf32> to vector<2x8xf32>
    %18 = vector.shape_cast %17 : vector<2x8xf32> to vector<2x8x1xf32>
    %cst_18 = arith.constant 3.200000e+01 : f32
    %19 = vector.broadcast %cst_18 : f32 to vector<2x8x1xf32>
    %20 = arith.divf %18, %19 : vector<2x8x1xf32>
    %21 = vector.broadcast %13 : vector<2x8x1xf32> to vector<2x8x32xf32>
    %22 = arith.subf %1, %21 : vector<2x8x32xf32>
    %cst_19 = arith.constant 9.99999997E-7 : f32
    %23 = vector.broadcast %cst_19 : f32 to vector<2x8x1xf32>
    %24 = arith.addf %20, %23 : vector<2x8x1xf32>
    %25 = math.rsqrt %24 : vector<2x8x1xf32>
    %26 = vector.broadcast %25 : vector<2x8x1xf32> to vector<2x8x32xf32>
    %27 = arith.mulf %22, %26 : vector<2x8x32xf32>
    %28 = vector.shape_cast %7 : vector<1x32xf32> to vector<1x1x32xf32>
    %29 = vector.broadcast %28 : vector<1x1x32xf32> to vector<2x8x32xf32>
    %30 = arith.mulf %27, %29 : vector<2x8x32xf32>
    %31 = vector.shape_cast %9 : vector<1x32xf32> to vector<1x1x32xf32>
    %32 = vector.broadcast %31 : vector<1x1x32xf32> to vector<2x8x32xf32>
    %33 = arith.addf %30, %32 : vector<2x8x32xf32>
    %34 = vector.shape_cast %33 : vector<2x8x32xf32> to vector<16x32xf32>
    %35 = vector.shape_cast %3 : vector<2x8x32xf32> to vector<16x32xf32>
    %c0_20 = arith.constant 0 : index
    %c0_21 = arith.constant 0 : index
    %c0_22 = arith.constant 0 : index
    %36 = vector.load %arg5[%c0_20, %c0_21, %c0_22] : memref<1x32x32xf32, #tpu.memory_space<vmem>>, vector<1x32x32xf32>
    %37 = vector.shape_cast %36 : vector<1x32x32xf32> to vector<32x32xf32>
    %38 = arith.truncf %34 : vector<16x32xf32> to vector<16x32xbf16>
    %39 = arith.truncf %37 : vector<32x32xf32> to vector<32x32xbf16>
    %cst_23 = arith.constant dense<0.000000e+00> : vector<16x32xf32>
    %40 = tpu.matmul %38, %39, %cst_23 {dimension_numbers = #tpu.dot_dimension_numbers<[1], [0], [0], [1], [0, 0, 1, 1], [], []>} : vector<16x32xbf16>, vector<32x32xbf16>, vector<16x32xf32> -> vector<16x32xf32>
    %cst_24 = arith.constant 0.353553385 : f32
    %41 = vector.broadcast %cst_24 : f32 to vector<16x32xf32>
    %42 = arith.mulf %40, %41 : vector<16x32xf32>
    %c0_25 = arith.constant 0 : index
    %c0_26 = arith.constant 0 : index
    %c0_27 = arith.constant 0 : index
    %43 = vector.load %arg6[%c0_25, %c0_26, %c0_27] : memref<1x32x32xf32, #tpu.memory_space<vmem>>, vector<1x32x32xf32>
    %44 = vector.shape_cast %43 : vector<1x32x32xf32> to vector<32x32xf32>
    %45 = arith.truncf %35 : vector<16x32xf32> to vector<16x32xbf16>
    %46 = arith.truncf %44 : vector<32x32xf32> to vector<32x32xbf16>
    %cst_28 = arith.constant dense<0.000000e+00> : vector<16x32xf32>
    %47 = tpu.matmul %45, %46, %cst_28 {dimension_numbers = #tpu.dot_dimension_numbers<[1], [0], [0], [1], [0, 0, 1, 1], [], []>} : vector<16x32xbf16>, vector<32x32xbf16>, vector<16x32xf32> -> vector<16x32xf32>
    %c0_29 = arith.constant 0 : index
    %c0_30 = arith.constant 0 : index
    %c0_31 = arith.constant 0 : index
    %48 = vector.load %arg7[%c0_29, %c0_30, %c0_31] : memref<1x32x32xf32, #tpu.memory_space<vmem>>, vector<1x32x32xf32>
    %49 = vector.shape_cast %48 : vector<1x32x32xf32> to vector<32x32xf32>
    %50 = arith.truncf %35 : vector<16x32xf32> to vector<16x32xbf16>
    %51 = arith.truncf %49 : vector<32x32xf32> to vector<32x32xbf16>
    %cst_32 = arith.constant dense<0.000000e+00> : vector<16x32xf32>
    %52 = tpu.matmul %50, %51, %cst_32 {dimension_numbers = #tpu.dot_dimension_numbers<[1], [0], [0], [1], [0, 0, 1, 1], [], []>} : vector<16x32xbf16>, vector<32x32xbf16>, vector<16x32xf32> -> vector<16x32xf32>
    %53 = vector.shape_cast %42 : vector<16x32xf32> to vector<2x8x4x8xf32>
    %54 = tpu.transpose %53, [0, 2, 1, 3] : vector<2x8x4x8xf32> -> vector<2x4x8x8xf32>
    %55 = vector.shape_cast %54 : vector<2x4x8x8xf32> to vector<8x8x8xf32>
    %56 = vector.shape_cast %47 : vector<16x32xf32> to vector<2x8x4x8xf32>
    %57 = tpu.transpose %56, [0, 2, 1, 3] : vector<2x8x4x8xf32> -> vector<2x4x8x8xf32>
    %58 = vector.shape_cast %57 : vector<2x4x8x8xf32> to vector<8x8x8xf32>
    %59 = vector.shape_cast %52 : vector<16x32xf32> to vector<2x8x4x8xf32>
    %60 = tpu.transpose %59, [0, 2, 1, 3] : vector<2x8x4x8xf32> -> vector<2x4x8x8xf32>
    %61 = vector.shape_cast %60 : vector<2x4x8x8xf32> to vector<8x8x8xf32>
    %62 = arith.truncf %55 : vector<8x8x8xf32> to vector<8x8x8xbf16>
    %63 = arith.truncf %58 : vector<8x8x8xf32> to vector<8x8x8xbf16>
    "tpu.trace_start"() <{level = 10 : i32, message = "bqd,bkd->bqk"}> : () -> ()
    %cst_33 = arith.constant dense<0.000000e+00> : vector<8x8x8xf32>
    %64 = tpu.matmul %62, %63, %cst_33 {dimension_numbers = #tpu.dot_dimension_numbers<[2], [2], [1], [1], [0, 0, 0, 1, 1, 1], [0], [0]>} : vector<8x8x8xbf16>, vector<8x8x8xbf16>, vector<8x8x8xf32> -> vector<8x8x8xf32>
    "tpu.trace_stop"() : () -> ()
    %65 = vector.shape_cast %64 : vector<8x8x8xf32> to vector<2x4x8x8xf32>
    %66 = vector.shape_cast %5 : vector<2x8x8xf32> to vector<2x1x8x8xf32>
    %67 = vector.broadcast %66 : vector<2x1x8x8xf32> to vector<2x4x8x8xf32>
    %68 = arith.addf %65, %67 : vector<2x4x8x8xf32>
    %cst_34 = arith.constant dense<0xFF800000> : vector<2x4x8xf32>
    %69 = vector.multi_reduction <maximumf>, %68, %cst_34 [3] : vector<2x4x8x8xf32> to vector<2x4x8xf32>
    %70 = vector.shape_cast %69 : vector<2x4x8xf32> to vector<2x4x8x1xf32>
    %71 = vector.broadcast %70 : vector<2x4x8x1xf32> to vector<2x4x8x8xf32>
    %72 = arith.subf %68, %71 : vector<2x4x8x8xf32>
    %73 = math.exp %72 : vector<2x4x8x8xf32>
    %cst_35 = arith.constant dense<0.000000e+00> : vector<2x4x8xf32>
    %74 = vector.multi_reduction <add>, %73, %cst_35 [3] : vector<2x4x8x8xf32> to vector<2x4x8xf32>
    %75 = vector.shape_cast %74 : vector<2x4x8xf32> to vector<2x4x8x1xf32>
    %76 = tpu.reciprocal %75 {approx = true} : vector<2x4x8x1xf32> -> vector<2x4x8x1xf32>
    %77 = vector.broadcast %76 : vector<2x4x8x1xf32> to vector<2x4x8x8xf32>
    %78 = arith.mulf %73, %77 : vector<2x4x8x8xf32>
    %79 = vector.shape_cast %78 : vector<2x4x8x8xf32> to vector<8x8x8xf32>
    %80 = arith.truncf %79 : vector<8x8x8xf32> to vector<8x8x8xbf16>
    %81 = arith.truncf %61 : vector<8x8x8xf32> to vector<8x8x8xbf16>
    "tpu.trace_start"() <{level = 10 : i32, message = "bqk,bkd->bqd"}> : () -> ()
    %cst_36 = arith.constant dense<0.000000e+00> : vector<8x8x8xf32>
    %82 = tpu.matmul %80, %81, %cst_36 {dimension_numbers = #tpu.dot_dimension_numbers<[2], [1], [1], [2], [0, 0, 0, 1, 1, 2], [0], [0]>} : vector<8x8x8xbf16>, vector<8x8x8xbf16>, vector<8x8x8xf32> -> vector<8x8x8xf32>
    "tpu.trace_stop"() : () -> ()
    %83 = vector.shape_cast %82 : vector<8x8x8xf32> to vector<2x4x8x8xf32>
    %84 = tpu.transpose %83, [0, 2, 1, 3] : vector<2x4x8x8xf32> -> vector<2x8x4x8xf32>
    %85 = vector.shape_cast %84 : vector<2x8x4x8xf32> to vector<16x32xf32>
    %c0_37 = arith.constant 0 : index
    %c0_38 = arith.constant 0 : index
    %c0_39 = arith.constant 0 : index
    %86 = vector.load %arg8[%c0_37, %c0_38, %c0_39] : memref<1x32x32xf32, #tpu.memory_space<vmem>>, vector<1x32x32xf32>
    %87 = vector.shape_cast %86 : vector<1x32x32xf32> to vector<32x32xf32>
    %88 = arith.truncf %85 : vector<16x32xf32> to vector<16x32xbf16>
    %89 = arith.truncf %87 : vector<32x32xf32> to vector<32x32xbf16>
    %cst_40 = arith.constant dense<0.000000e+00> : vector<16x32xf32>
    %90 = tpu.matmul %88, %89, %cst_40 {dimension_numbers = #tpu.dot_dimension_numbers<[1], [0], [0], [1], [0, 0, 1, 1], [], []>} : vector<16x32xbf16>, vector<32x32xbf16>, vector<16x32xf32> -> vector<16x32xf32>
    %c0_41 = arith.constant 0 : index
    %c0_42 = arith.constant 0 : index
    %c0_43 = arith.constant 0 : index
    %91 = vector.load %arg9[%c0_41, %c0_42, %c0_43] : memref<1x1x32xf32, #tpu.memory_space<vmem>>, vector<1x1x32xf32>
    %92 = vector.shape_cast %91 : vector<1x1x32xf32> to vector<1x32xf32>
    %93 = vector.broadcast %92 : vector<1x32xf32> to vector<16x32xf32>
    %94 = arith.addf %90, %93 : vector<16x32xf32>
    %95 = vector.shape_cast %94 : vector<16x32xf32> to vector<2x8x32xf32>
    %96 = arith.addf %95, %1 : vector<2x8x32xf32>
    %c0_44 = arith.constant 0 : index
    %c0_45 = arith.constant 0 : index
    %c0_46 = arith.constant 0 : index
    %c0_47 = arith.constant 0 : index
    %97 = vector.load %arg12[%c0_44, %c0_45, %c0_46, %c0_47] : memref<1x2x8x32xf32, #tpu.memory_space<vmem>>, vector<1x2x8x32xf32>
    %98 = vector.shape_cast %97 : vector<1x2x8x32xf32> to vector<2x8x32xf32>
    %99 = vector.shape_cast %96 : vector<2x8x32xf32> to vector<1x2x8x32xf32>
    tpu.vector_store %arg12[%c0_44, %c0_45, %c0_46, %c0_47], %99 {strides = array<i32>} : memref<1x2x8x32xf32, #tpu.memory_space<vmem>>, vector<1x2x8x32xf32>,
    return
  }
  func.func @transform_0(%arg0: i32, %arg1: i32) -> (i32, i32, i32, i32) {
    %c0_i32 = arith.constant 0 : i32
    %c0_i32_0 = arith.constant 0 : i32
    %c0_i32_1 = arith.constant 0 : i32
    return %arg0, %arg1, %c0_i32, %c0_i32_0 : i32, i32, i32, i32
  }
  func.func @transform_1(%arg0: i32, %arg1: i32) -> (i32, i32, i32, i32) {
    %c1_i32 = arith.constant 1 : i32
    %0 = arith.subi %c1_i32, %arg0 : i32
    %c0_i32 = arith.constant 0 : i32
    %c0_i32_0 = arith.constant 0 : i32
    %c0_i32_1 = arith.constant 0 : i32
    return %0, %arg1, %c0_i32, %c0_i32_0 : i32, i32, i32, i32
  }
  func.func @transform_2(%arg0: i32, %arg1: i32) -> (i32, i32, i32) {
    %c0_i32 = arith.constant 0 : i32
    %c0_i32_0 = arith.constant 0 : i32
    %c0_i32_1 = arith.constant 0 : i32
    return %arg1, %c0_i32, %c0_i32_0 : i32, i32, i32
  }
  func.func @transform_3(%arg0: i32, %arg1: i32) -> (i32, i32, i32) {
    %c0_i32 = arith.constant 0 : i32
    %c0_i32_0 = arith.constant 0 : i32
    %c0_i32_1 = arith.constant 0 : i32
    return %arg0, %c0_i32, %c0_i32_0 : i32, i32, i32
  }
  func.func @transform_4(%arg0: i32, %arg1: i32) -> (i32, i32, i32) {
    %c0_i32 = arith.constant 0 : i32
    %c0_i32_0 = arith.constant 0 : i32
    %c0_i32_1 = arith.constant 0 : i32
    return %arg0, %c0_i32, %c0_i32_0 : i32, i32, i32
  }
  func.func @transform_5(%arg0: i32, %arg1: i32) -> (i32, i32, i32) {
    %c0_i32 = arith.constant 0 : i32
    %c0_i32_0 = arith.constant 0 : i32
    %c0_i32_1 = arith.constant 0 : i32
    return %arg0, %c0_i32, %c0_i32_0 : i32, i32, i32
  }
  func.func @transform_6(%arg0: i32, %arg1: i32) -> (i32, i32, i32) {
    %c0_i32 = arith.constant 0 : i32
    %c0_i32_0 = arith.constant 0 : i32
    %c0_i32_1 = arith.constant 0 : i32
    return %arg0, %c0_i32, %c0_i32_0 : i32, i32, i32
  }
  func.func @transform_7(%arg0: i32, %arg1: i32) -> (i32, i32, i32) {
    %c0_i32 = arith.constant 0 : i32
    %c0_i32_0 = arith.constant 0 : i32
    %c0_i32_1 = arith.constant 0 : i32
    return %arg0, %c0_i32, %c0_i32_0 : i32, i32, i32
  }
  func.func @transform_8(%arg0: i32, %arg1: i32) -> (i32, i32, i32) {
    %c0_i32 = arith.constant 0 : i32
    %c0_i32_0 = arith.constant 0 : i32
    %c0_i32_1 = arith.constant 0 : i32
    return %arg0, %c0_i32, %c0_i32_0 : i32, i32, i32
  }
  func.func @transform_9(%arg0: i32, %arg1: i32) -> (i32, i32, i32) {
    %c0_i32 = arith.constant 0 : i32
    %c0_i32_0 = arith.constant 0 : i32
    %c0_i32_1 = arith.constant 0 : i32
    return %arg0, %c0_i32, %c0_i32_0 : i32, i32, i32
  }
  func.func @transform_10(%arg0: i32, %arg1: i32) -> (i32, i32, i32, i32) {
    %c0_i32 = arith.constant 0 : i32
    %c0_i32_0 = arith.constant 0 : i32
    %c0_i32_1 = arith.constant 0 : i32
    return %arg0, %arg1, %c0_i32, %c0_i32_0 : i32, i32, i32, i32
  }
}

module attributes {stable_mosaic.version = 11 : i64} {
  func.func @ffn_kernel(%arg0: i32, %arg1: memref<16x32xf32, #tpu.memory_space<vmem>>, %arg2: memref<16x1xf32, #tpu.memory_space<vmem>>, %arg3: memref<32x64xf32, #tpu.memory_space<vmem>>, %arg4: memref<1x64xf32, #tpu.memory_space<vmem>>, %arg5: memref<64x32xf32, #tpu.memory_space<vmem>>, %arg6: memref<1x32xf32, #tpu.memory_space<vmem>>, %arg7: memref<1x32xf32, #tpu.memory_space<vmem>>, %arg8: memref<1x32xf32, #tpu.memory_space<vmem>>, %arg9: memref<16x32xf32, #tpu.memory_space<vmem>>) attributes {dimension_semantics = [#tpu.dimension_semantics<parallel>], iteration_bounds = array<i64: 2>, scalar_prefetch = 0 : i64, scratch_operands = 0 : i64, tpu.core_type = #tpu.core_type<tc>, window_params = [{transform_indices = @transform_0, window_bounds = array<i64: 16, 32>}, {transform_indices = @transform_1, window_bounds = array<i64: 16, 1>}, {pipeline_mode = #tpu.pipeline_mode<synchronous>, transform_indices = @transform_2, window_bounds = array<i64: 32, 64>}, {pipeline_mode = #tpu.pipeline_mode<synchronous>, transform_indices = @transform_3, window_bounds = array<i64: 1, 64>}, {pipeline_mode = #tpu.pipeline_mode<synchronous>, transform_indices = @transform_4, window_bounds = array<i64: 64, 32>}, {pipeline_mode = #tpu.pipeline_mode<synchronous>, transform_indices = @transform_5, window_bounds = array<i64: 1, 32>}, {pipeline_mode = #tpu.pipeline_mode<synchronous>, transform_indices = @transform_6, window_bounds = array<i64: 1, 32>}, {pipeline_mode = #tpu.pipeline_mode<synchronous>, transform_indices = @transform_7, window_bounds = array<i64: 1, 32>}, {transform_indices = @transform_8, window_bounds = array<i64: 16, 32>}]} {
    %c0 = arith.constant 0 : index
    %c0_0 = arith.constant 0 : index
    %0 = vector.load %arg1[%c0, %c0_0] : memref<16x32xf32, #tpu.memory_space<vmem>>, vector<16x32xf32>
    %c0_1 = arith.constant 0 : index
    %c0_2 = arith.constant 0 : index
    %1 = vector.load %arg2[%c0_1, %c0_2] : memref<16x1xf32, #tpu.memory_space<vmem>>, vector<16x1xf32>
    %2 = vector.broadcast %1 : vector<16x1xf32> to vector<16x32xf32>
    %3 = arith.mulf %0, %2 : vector<16x32xf32>
    %c0_3 = arith.constant 0 : index
    %c0_4 = arith.constant 0 : index
    %4 = vector.load %arg7[%c0_3, %c0_4] : memref<1x32xf32, #tpu.memory_space<vmem>>, vector<1x32xf32>
    %c0_5 = arith.constant 0 : index
    %c0_6 = arith.constant 0 : index
    %5 = vector.load %arg8[%c0_5, %c0_6] : memref<1x32xf32, #tpu.memory_space<vmem>>, vector<1x32xf32>
    %cst = arith.constant dense<0.000000e+00> : vector<16xf32>
    %6 = vector.multi_reduction <add>, %3, %cst [1] : vector<16x32xf32> to vector<16xf32>
    %7 = vector.shape_cast %6 : vector<16xf32> to vector<16x1xf32>
    %cst_7 = arith.constant 3.200000e+01 : f32
    %8 = vector.broadcast %cst_7 : f32 to vector<16x1xf32>
    %9 = arith.divf %7, %8 : vector<16x1xf32>
    %10 = vector.broadcast %9 : vector<16x1xf32> to vector<16x32xf32>
    %11 = arith.subf %3, %10 : vector<16x32xf32>
    %12 = arith.mulf %11, %11 : vector<16x32xf32>
    %cst_8 = arith.constant dense<0.000000e+00> : vector<16xf32>
    %13 = vector.multi_reduction <add>, %12, %cst_8 [1] : vector<16x32xf32> to vector<16xf32>
    %14 = vector.shape_cast %13 : vector<16xf32> to vector<16x1xf32>
    %cst_9 = arith.constant 3.200000e+01 : f32
    %15 = vector.broadcast %cst_9 : f32 to vector<16x1xf32>
    %16 = arith.divf %14, %15 : vector<16x1xf32>
    %17 = vector.broadcast %9 : vector<16x1xf32> to vector<16x32xf32>
    %18 = arith.subf %3, %17 : vector<16x32xf32>
    %cst_10 = arith.constant 9.99999997E-7 : f32
    %19 = vector.broadcast %cst_10 : f32 to vector<16x1xf32>
    %20 = arith.addf %16, %19 : vector<16x1xf32>
    %21 = math.rsqrt %20 : vector<16x1xf32>
    %22 = vector.broadcast %21 : vector<16x1xf32> to vector<16x32xf32>
    %23 = arith.mulf %18, %22 : vector<16x32xf32>
    %24 = vector.broadcast %4 : vector<1x32xf32> to vector<16x32xf32>
    %25 = arith.mulf %23, %24 : vector<16x32xf32>
    %26 = vector.broadcast %5 : vector<1x32xf32> to vector<16x32xf32>
    %27 = arith.addf %25, %26 : vector<16x32xf32>
    %c0_11 = arith.constant 0 : index
    %c0_12 = arith.constant 0 : index
    %28 = vector.load %arg3[%c0_11, %c0_12] : memref<32x64xf32, #tpu.memory_space<vmem>>, vector<32x64xf32>
    %29 = arith.truncf %27 : vector<16x32xf32> to vector<16x32xbf16>
    %30 = arith.truncf %28 : vector<32x64xf32> to vector<32x64xbf16>
    %cst_13 = arith.constant dense<0.000000e+00> : vector<16x64xf32>
    %31 = tpu.matmul %29, %30, %cst_13 {dimension_numbers = #tpu.dot_dimension_numbers<[1], [0], [0], [1], [0, 0, 1, 1], [], []>} : vector<16x32xbf16>, vector<32x64xbf16>, vector<16x64xf32> -> vector<16x64xf32>
    %c0_14 = arith.constant 0 : index
    %c0_15 = arith.constant 0 : index
    %32 = vector.load %arg4[%c0_14, %c0_15] : memref<1x64xf32, #tpu.memory_space<vmem>>, vector<1x64xf32>
    %33 = vector.broadcast %32 : vector<1x64xf32> to vector<16x64xf32>
    %34 = arith.addf %31, %33 : vector<16x64xf32>
    %cst_16 = arith.constant 5.000000e-01 : f32
    %35 = vector.broadcast %cst_16 : f32 to vector<16x64xf32>
    %36 = arith.mulf %35, %34 : vector<16x64xf32>
    %cst_17 = arith.constant 0.707106769 : f32
    %37 = vector.broadcast %cst_17 : f32 to vector<16x64xf32>
    %38 = arith.mulf %34, %37 : vector<16x64xf32>
    %39 = math.erf %38 : vector<16x64xf32>
    %cst_18 = arith.constant 1.000000e+00 : f32
    %40 = vector.broadcast %cst_18 : f32 to vector<16x64xf32>
    %41 = arith.addf %40, %39 : vector<16x64xf32>
    %42 = arith.mulf %36, %41 : vector<16x64xf32>
    %c0_19 = arith.constant 0 : index
    %c0_20 = arith.constant 0 : index
    %43 = vector.load %arg5[%c0_19, %c0_20] : memref<64x32xf32, #tpu.memory_space<vmem>>, vector<64x32xf32>
    %44 = arith.truncf %42 : vector<16x64xf32> to vector<16x64xbf16>
    %45 = arith.truncf %43 : vector<64x32xf32> to vector<64x32xbf16>
    %cst_21 = arith.constant dense<0.000000e+00> : vector<16x32xf32>
    %46 = tpu.matmul %44, %45, %cst_21 {dimension_numbers = #tpu.dot_dimension_numbers<[1], [0], [0], [1], [0, 0, 1, 1], [], []>} : vector<16x64xbf16>, vector<64x32xbf16>, vector<16x32xf32> -> vector<16x32xf32>
    %c0_22 = arith.constant 0 : index
    %c0_23 = arith.constant 0 : index
    %47 = vector.load %arg6[%c0_22, %c0_23] : memref<1x32xf32, #tpu.memory_space<vmem>>, vector<1x32xf32>
    %48 = vector.broadcast %47 : vector<1x32xf32> to vector<16x32xf32>
    %49 = arith.addf %46, %48 : vector<16x32xf32>
    %50 = arith.addf %49, %3 : vector<16x32xf32>
    %c0_24 = arith.constant 0 : index
    %c0_25 = arith.constant 0 : index
    %51 = vector.load %arg2[%c0_24, %c0_25] : memref<16x1xf32, #tpu.memory_space<vmem>>, vector<16x1xf32>
    %52 = vector.broadcast %51 : vector<16x1xf32> to vector<16x32xf32>
    %53 = arith.mulf %50, %52 : vector<16x32xf32>
    %c0_26 = arith.constant 0 : index
    %c0_27 = arith.constant 0 : index
    %54 = vector.load %arg9[%c0_26, %c0_27] : memref<16x32xf32, #tpu.memory_space<vmem>>, vector<16x32xf32>
    tpu.vector_store %arg9[%c0_26, %c0_27], %53 {strides = array<i32>} : memref<16x32xf32, #tpu.memory_space<vmem>>, vector<16x32xf32>,
    return
  }
  func.func @transform_0(%arg0: i32) -> (i32, i32) {
    %c0_i32 = arith.constant 0 : i32
    %c0_i32_0 = arith.constant 0 : i32
    return %arg0, %c0_i32 : i32, i32
  }
  func.func @transform_1(%arg0: i32) -> (i32, i32) {
    %c0_i32 = arith.constant 0 : i32
    %c0_i32_0 = arith.constant 0 : i32
    return %arg0, %c0_i32 : i32, i32
  }
  func.func @transform_2(%arg0: i32) -> (i32, i32) {
    %c0_i32 = arith.constant 0 : i32
    %c0_i32_0 = arith.constant 0 : i32
    %c0_i32_1 = arith.constant 0 : i32
    return %c0_i32, %c0_i32_0 : i32, i32
  }
  func.func @transform_3(%arg0: i32) -> (i32, i32) {
    %c0_i32 = arith.constant 0 : i32
    %c0_i32_0 = arith.constant 0 : i32
    %c0_i32_1 = arith.constant 0 : i32
    return %c0_i32, %c0_i32_0 : i32, i32
  }
  func.func @transform_4(%arg0: i32) -> (i32, i32) {
    %c0_i32 = arith.constant 0 : i32
    %c0_i32_0 = arith.constant 0 : i32
    %c0_i32_1 = arith.constant 0 : i32
    return %c0_i32, %c0_i32_0 : i32, i32
  }
  func.func @transform_5(%arg0: i32) -> (i32, i32) {
    %c0_i32 = arith.constant 0 : i32
    %c0_i32_0 = arith.constant 0 : i32
    %c0_i32_1 = arith.constant 0 : i32
    return %c0_i32, %c0_i32_0 : i32, i32
  }
  func.func @transform_6(%arg0: i32) -> (i32, i32) {
    %c0_i32 = arith.constant 0 : i32
    %c0_i32_0 = arith.constant 0 : i32
    %c0_i32_1 = arith.constant 0 : i32
    return %c0_i32, %c0_i32_0 : i32, i32
  }
  func.func @transform_7(%arg0: i32) -> (i32, i32) {
    %c0_i32 = arith.constant 0 : i32
    %c0_i32_0 = arith.constant 0 : i32
    %c0_i32_1 = arith.constant 0 : i32
    return %c0_i32, %c0_i32_0 : i32, i32
  }
  func.func @transform_8(%arg0: i32) -> (i32, i32) {
    %c0_i32 = arith.constant 0 : i32
    %c0_i32_0 = arith.constant 0 : i32
    return %arg0, %c0_i32 : i32, i32
  }
}

module attributes {stable_mosaic.version = 11 : i64} {
  func.func @mha_kernel(%arg0: i32, %arg1: i32, %arg2: memref<1x1x16x32xf32, #tpu.memory_space<vmem>>, %arg3: memref<1x16x16xbf16, #tpu.memory_space<vmem>>, %arg4: memref<1x32x32xf32, #tpu.memory_space<vmem>>, %arg5: memref<1x32x32xf32, #tpu.memory_space<vmem>>, %arg6: memref<1x32x32xf32, #tpu.memory_space<vmem>>, %arg7: memref<1x32x32xf32, #tpu.memory_space<vmem>>, %arg8: memref<1x1x32xf32, #tpu.memory_space<vmem>>, %arg9: memref<1x1x32xf32, #tpu.memory_space<vmem>>, %arg10: memref<1x1x32xf32, #tpu.memory_space<vmem>>, %arg11: memref<1x1x16x32xf32, #tpu.memory_space<vmem>>, %arg12: memref<1x1x64x16xbf16, #tpu.memory_space<vmem>>) attributes {dimension_semantics = [#tpu.dimension_semantics<parallel>, #tpu.dimension_semantics<parallel>], iteration_bounds = array<i64: 1, 2>, scalar_prefetch = 0 : i64, scratch_operands = 0 : i64, tpu.core_type = #tpu.core_type<tc>, window_params = [{transform_indices = @transform_0, window_bounds = array<i64: 1, 1, 16, 32>}, {transform_indices = @transform_1, window_bounds = array<i64: 1, 16, 16>}, {transform_indices = @transform_2, window_bounds = array<i64: 1, 32, 32>}, {transform_indices = @transform_3, window_bounds = array<i64: 1, 32, 32>}, {transform_indices = @transform_4, window_bounds = array<i64: 1, 32, 32>}, {transform_indices = @transform_5, window_bounds = array<i64: 1, 32, 32>}, {transform_indices = @transform_6, window_bounds = array<i64: 1, 1, 32>}, {transform_indices = @transform_7, window_bounds = array<i64: 1, 1, 32>}, {transform_indices = @transform_8, window_bounds = array<i64: 1, 1, 32>}, {transform_indices = @transform_9, window_bounds = array<i64: 1, 1, 16, 32>}, {transform_indices = @transform_10, window_bounds = array<i64: 1, 1, 64, 16>}]} {
    %c0 = arith.constant 0 : index
    %c0_0 = arith.constant 0 : index
    %c0_1 = arith.constant 0 : index
    %c0_2 = arith.constant 0 : index
    %0 = vector.load %arg2[%c0, %c0_0, %c0_1, %c0_2] : memref<1x1x16x32xf32, #tpu.memory_space<vmem>>, vector<1x1x16x32xf32>
    %1 = vector.shape_cast %0 : vector<1x1x16x32xf32> to vector<1x16x32xf32>
    %c0_3 = arith.constant 0 : index
    %c0_4 = arith.constant 0 : index
    %c0_5 = arith.constant 0 : index
    %c0_6 = arith.constant 0 : index
    %2 = vector.load %arg2[%c0_3, %c0_4, %c0_5, %c0_6] : memref<1x1x16x32xf32, #tpu.memory_space<vmem>>, vector<1x1x16x32xf32>
    %3 = vector.shape_cast %2 : vector<1x1x16x32xf32> to vector<1x16x32xf32>
    %c0_7 = arith.constant 0 : index
    %c0_8 = arith.constant 0 : index
    %c0_9 = arith.constant 0 : index
    %4 = vector.load %arg3[%c0_7, %c0_8, %c0_9] : memref<1x16x16xbf16, #tpu.memory_space<vmem>>, vector<1x16x16xbf16>
    %5 = arith.extf %4 : vector<1x16x16xbf16> to vector<1x16x16xf32>
    %c0_10 = arith.constant 0 : index
    %c0_11 = arith.constant 0 : index
    %c0_12 = arith.constant 0 : index
    %6 = vector.load %arg9[%c0_10, %c0_11, %c0_12] : memref<1x1x32xf32, #tpu.memory_space<vmem>>, vector<1x1x32xf32>
    %7 = vector.shape_cast %6 : vector<1x1x32xf32> to vector<1x32xf32>
    %c0_13 = arith.constant 0 : index
    %c0_14 = arith.constant 0 : index
    %c0_15 = arith.constant 0 : index
    %8 = vector.load %arg10[%c0_13, %c0_14, %c0_15] : memref<1x1x32xf32, #tpu.memory_space<vmem>>, vector<1x1x32xf32>
    %9 = vector.shape_cast %8 : vector<1x1x32xf32> to vector<1x32xf32>
    %cst = arith.constant dense<0.000000e+00> : vector<1x16xf32>
    %10 = vector.multi_reduction <add>, %1, %cst [2] : vector<1x16x32xf32> to vector<1x16xf32>
    %11 = vector.shape_cast %10 : vector<1x16xf32> to vector<1x16x1xf32>
    %cst_16 = arith.constant 3.200000e+01 : f32
    %12 = vector.broadcast %cst_16 : f32 to vector<1x16x1xf32>
    %13 = arith.divf %11, %12 : vector<1x16x1xf32>
    %14 = vector.broadcast %13 : vector<1x16x1xf32> to vector<1x16x32xf32>
    %15 = arith.subf %1, %14 : vector<1x16x32xf32>
    %16 = arith.mulf %15, %15 : vector<1x16x32xf32>
    %cst_17 = arith.constant dense<0.000000e+00> : vector<1x16xf32>
    %17 = vector.multi_reduction <add>, %16, %cst_17 [2] : vector<1x16x32xf32> to vector<1x16xf32>
    %18 = vector.shape_cast %17 : vector<1x16xf32> to vector<1x16x1xf32>
    %cst_18 = arith.constant 3.200000e+01 : f32
    %19 = vector.broadcast %cst_18 : f32 to vector<1x16x1xf32>
    %20 = arith.divf %18, %19 : vector<1x16x1xf32>
    %21 = vector.broadcast %13 : vector<1x16x1xf32> to vector<1x16x32xf32>
    %22 = arith.subf %1, %21 : vector<1x16x32xf32>
    %cst_19 = arith.constant 9.99999997E-7 : f32
    %23 = vector.broadcast %cst_19 : f32 to vector<1x16x1xf32>
    %24 = arith.addf %20, %23 : vector<1x16x1xf32>
    %25 = math.rsqrt %24 : vector<1x16x1xf32>
    %26 = vector.broadcast %25 : vector<1x16x1xf32> to vector<1x16x32xf32>
    %27 = arith.mulf %22, %26 : vector<1x16x32xf32>
    %28 = vector.shape_cast %7 : vector<1x32xf32> to vector<1x1x32xf32>
    %29 = vector.broadcast %28 : vector<1x1x32xf32> to vector<1x16x32xf32>
    %30 = arith.mulf %27, %29 : vector<1x16x32xf32>
    %31 = vector.shape_cast %9 : vector<1x32xf32> to vector<1x1x32xf32>
    %32 = vector.broadcast %31 : vector<1x1x32xf32> to vector<1x16x32xf32>
    %33 = arith.addf %30, %32 : vector<1x16x32xf32>
    %34 = vector.shape_cast %33 : vector<1x16x32xf32> to vector<16x32xf32>
    %35 = vector.shape_cast %3 : vector<1x16x32xf32> to vector<16x32xf32>
    %c0_20 = arith.constant 0 : index
    %c0_21 = arith.constant 0 : index
    %c0_22 = arith.constant 0 : index
    %36 = vector.load %arg4[%c0_20, %c0_21, %c0_22] : memref<1x32x32xf32, #tpu.memory_space<vmem>>, vector<1x32x32xf32>
    %37 = vector.shape_cast %36 : vector<1x32x32xf32> to vector<32x32xf32>
    %38 = arith.truncf %34 : vector<16x32xf32> to vector<16x32xbf16>
    %39 = arith.truncf %37 : vector<32x32xf32> to vector<32x32xbf16>
    %cst_23 = arith.constant dense<0.000000e+00> : vector<16x32xf32>
    %40 = tpu.matmul %38, %39, %cst_23 {dimension_numbers = #tpu.dot_dimension_numbers<[1], [0], [0], [1], [0, 0, 1, 1], [], []>} : vector<16x32xbf16>, vector<32x32xbf16>, vector<16x32xf32> -> vector<16x32xf32>
    %cst_24 = arith.constant 0.353553385 : f32
    %41 = vector.broadcast %cst_24 : f32 to vector<16x32xf32>
    %42 = arith.mulf %40, %41 : vector<16x32xf32>
    %c0_25 = arith.constant 0 : index
    %c0_26 = arith.constant 0 : index
    %c0_27 = arith.constant 0 : index
    %43 = vector.load %arg5[%c0_25, %c0_26, %c0_27] : memref<1x32x32xf32, #tpu.memory_space<vmem>>, vector<1x32x32xf32>
    %44 = vector.shape_cast %43 : vector<1x32x32xf32> to vector<32x32xf32>
    %45 = arith.truncf %35 : vector<16x32xf32> to vector<16x32xbf16>
    %46 = arith.truncf %44 : vector<32x32xf32> to vector<32x32xbf16>
    %cst_28 = arith.constant dense<0.000000e+00> : vector<16x32xf32>
    %47 = tpu.matmul %45, %46, %cst_28 {dimension_numbers = #tpu.dot_dimension_numbers<[1], [0], [0], [1], [0, 0, 1, 1], [], []>} : vector<16x32xbf16>, vector<32x32xbf16>, vector<16x32xf32> -> vector<16x32xf32>
    %c0_29 = arith.constant 0 : index
    %c0_30 = arith.constant 0 : index
    %c0_31 = arith.constant 0 : index
    %48 = vector.load %arg6[%c0_29, %c0_30, %c0_31] : memref<1x32x32xf32, #tpu.memory_space<vmem>>, vector<1x32x32xf32>
    %49 = vector.shape_cast %48 : vector<1x32x32xf32> to vector<32x32xf32>
    %50 = arith.truncf %35 : vector<16x32xf32> to vector<16x32xbf16>
    %51 = arith.truncf %49 : vector<32x32xf32> to vector<32x32xbf16>
    %cst_32 = arith.constant dense<0.000000e+00> : vector<16x32xf32>
    %52 = tpu.matmul %50, %51, %cst_32 {dimension_numbers = #tpu.dot_dimension_numbers<[1], [0], [0], [1], [0, 0, 1, 1], [], []>} : vector<16x32xbf16>, vector<32x32xbf16>, vector<16x32xf32> -> vector<16x32xf32>
    %53 = vector.shape_cast %42 : vector<16x32xf32> to vector<1x16x4x8xf32>
    %54 = tpu.transpose %53, [0, 2, 1, 3] : vector<1x16x4x8xf32> -> vector<1x4x16x8xf32>
    %55 = vector.shape_cast %54 : vector<1x4x16x8xf32> to vector<4x16x8xf32>
    %56 = vector.shape_cast %47 : vector<16x32xf32> to vector<1x16x4x8xf32>
    %57 = tpu.transpose %56, [0, 2, 1, 3] : vector<1x16x4x8xf32> -> vector<1x4x16x8xf32>
    %58 = vector.shape_cast %57 : vector<1x4x16x8xf32> to vector<4x16x8xf32>
    %59 = vector.shape_cast %52 : vector<16x32xf32> to vector<1x16x4x8xf32>
    %60 = tpu.transpose %59, [0, 2, 1, 3] : vector<1x16x4x8xf32> -> vector<1x4x16x8xf32>
    %61 = vector.shape_cast %60 : vector<1x4x16x8xf32> to vector<4x16x8xf32>
    %62 = arith.truncf %55 : vector<4x16x8xf32> to vector<4x16x8xbf16>
    %63 = arith.truncf %58 : vector<4x16x8xf32> to vector<4x16x8xbf16>
    "tpu.trace_start"() <{level = 10 : i32, message = "bqd,bkd->bqk"}> : () -> ()
    %cst_33 = arith.constant dense<0.000000e+00> : vector<4x16x16xf32>
    %64 = tpu.matmul %62, %63, %cst_33 {dimension_numbers = #tpu.dot_dimension_numbers<[2], [2], [1], [1], [0, 0, 0, 1, 1, 1], [0], [0]>} : vector<4x16x8xbf16>, vector<4x16x8xbf16>, vector<4x16x16xf32> -> vector<4x16x16xf32>
    "tpu.trace_stop"() : () -> ()
    %65 = vector.shape_cast %64 : vector<4x16x16xf32> to vector<1x4x16x16xf32>
    %66 = vector.shape_cast %5 : vector<1x16x16xf32> to vector<1x1x16x16xf32>
    %67 = vector.broadcast %66 : vector<1x1x16x16xf32> to vector<1x4x16x16xf32>
    %68 = arith.addf %65, %67 : vector<1x4x16x16xf32>
    %cst_34 = arith.constant dense<0xFF800000> : vector<1x4x16xf32>
    %69 = vector.multi_reduction <maximumf>, %68, %cst_34 [3] : vector<1x4x16x16xf32> to vector<1x4x16xf32>
    %70 = vector.shape_cast %69 : vector<1x4x16xf32> to vector<1x4x16x1xf32>
    %71 = vector.broadcast %70 : vector<1x4x16x1xf32> to vector<1x4x16x16xf32>
    %72 = arith.subf %68, %71 : vector<1x4x16x16xf32>
    %73 = math.exp %72 : vector<1x4x16x16xf32>
    %cst_35 = arith.constant dense<0.000000e+00> : vector<1x4x16xf32>
    %74 = vector.multi_reduction <add>, %73, %cst_35 [3] : vector<1x4x16x16xf32> to vector<1x4x16xf32>
    %75 = vector.shape_cast %74 : vector<1x4x16xf32> to vector<1x4x16x1xf32>
    %76 = tpu.reciprocal %75 {approx = true} : vector<1x4x16x1xf32> -> vector<1x4x16x1xf32>
    %77 = vector.broadcast %76 : vector<1x4x16x1xf32> to vector<1x4x16x16xf32>
    %78 = arith.mulf %73, %77 : vector<1x4x16x16xf32>
    %79 = vector.shape_cast %78 : vector<1x4x16x16xf32> to vector<4x16x16xf32>
    %80 = arith.truncf %79 : vector<4x16x16xf32> to vector<4x16x16xbf16>
    %81 = arith.truncf %61 : vector<4x16x8xf32> to vector<4x16x8xbf16>
    "tpu.trace_start"() <{level = 10 : i32, message = "bqk,bkd->bqd"}> : () -> ()
    %cst_36 = arith.constant dense<0.000000e+00> : vector<4x16x8xf32>
    %82 = tpu.matmul %80, %81, %cst_36 {dimension_numbers = #tpu.dot_dimension_numbers<[2], [1], [1], [2], [0, 0, 0, 1, 1, 2], [0], [0]>} : vector<4x16x16xbf16>, vector<4x16x8xbf16>, vector<4x16x8xf32> -> vector<4x16x8xf32>
    "tpu.trace_stop"() : () -> ()
    %83 = vector.shape_cast %82 : vector<4x16x8xf32> to vector<1x4x16x8xf32>
    %84 = tpu.transpose %83, [0, 2, 1, 3] : vector<1x4x16x8xf32> -> vector<1x16x4x8xf32>
    %85 = vector.shape_cast %84 : vector<1x16x4x8xf32> to vector<16x32xf32>
    %c0_37 = arith.constant 0 : index
    %c0_38 = arith.constant 0 : index
    %c0_39 = arith.constant 0 : index
    %86 = vector.load %arg7[%c0_37, %c0_38, %c0_39] : memref<1x32x32xf32, #tpu.memory_space<vmem>>, vector<1x32x32xf32>
    %87 = vector.shape_cast %86 : vector<1x32x32xf32> to vector<32x32xf32>
    %88 = arith.truncf %85 : vector<16x32xf32> to vector<16x32xbf16>
    %89 = arith.truncf %87 : vector<32x32xf32> to vector<32x32xbf16>
    %cst_40 = arith.constant dense<0.000000e+00> : vector<16x32xf32>
    %90 = tpu.matmul %88, %89, %cst_40 {dimension_numbers = #tpu.dot_dimension_numbers<[1], [0], [0], [1], [0, 0, 1, 1], [], []>} : vector<16x32xbf16>, vector<32x32xbf16>, vector<16x32xf32> -> vector<16x32xf32>
    %c0_41 = arith.constant 0 : index
    %c0_42 = arith.constant 0 : index
    %c0_43 = arith.constant 0 : index
    %91 = vector.load %arg8[%c0_41, %c0_42, %c0_43] : memref<1x1x32xf32, #tpu.memory_space<vmem>>, vector<1x1x32xf32>
    %92 = vector.shape_cast %91 : vector<1x1x32xf32> to vector<1x32xf32>
    %93 = vector.broadcast %92 : vector<1x32xf32> to vector<16x32xf32>
    %94 = arith.addf %90, %93 : vector<16x32xf32>
    %95 = vector.shape_cast %94 : vector<16x32xf32> to vector<1x16x32xf32>
    %96 = arith.addf %95, %1 : vector<1x16x32xf32>
    %c0_44 = arith.constant 0 : index
    %c0_45 = arith.constant 0 : index
    %c0_46 = arith.constant 0 : index
    %c0_47 = arith.constant 0 : index
    %97 = vector.load %arg11[%c0_44, %c0_45, %c0_46, %c0_47] : memref<1x1x16x32xf32, #tpu.memory_space<vmem>>, vector<1x1x16x32xf32>
    %98 = vector.shape_cast %97 : vector<1x1x16x32xf32> to vector<1x16x32xf32>
    %99 = vector.shape_cast %96 : vector<1x16x32xf32> to vector<1x1x16x32xf32>
    tpu.vector_store %arg11[%c0_44, %c0_45, %c0_46, %c0_47], %99 {strides = array<i32>} : memref<1x1x16x32xf32, #tpu.memory_space<vmem>>, vector<1x1x16x32xf32>,
    %100 = vector.shape_cast %79 : vector<4x16x16xf32> to vector<1x64x16xf32>
    %101 = arith.truncf %100 : vector<1x64x16xf32> to vector<1x64x16xbf16>
    %c0_48 = arith.constant 0 : index
    %c0_49 = arith.constant 0 : index
    %c0_50 = arith.constant 0 : index
    %c0_51 = arith.constant 0 : index
    %102 = vector.load %arg12[%c0_48, %c0_49, %c0_50, %c0_51] : memref<1x1x64x16xbf16, #tpu.memory_space<vmem>>, vector<1x1x64x16xbf16>
    %103 = vector.shape_cast %102 : vector<1x1x64x16xbf16> to vector<1x64x16xbf16>
    %104 = vector.shape_cast %101 : vector<1x64x16xbf16> to vector<1x1x64x16xbf16>
    tpu.vector_store %arg12[%c0_48, %c0_49, %c0_50, %c0_51], %104 {strides = array<i32>} : memref<1x1x64x16xbf16, #tpu.memory_space<vmem>>, vector<1x1x64x16xbf16>,
    return
  }
  func.func @transform_0(%arg0: i32, %arg1: i32) -> (i32, i32, i32, i32) {
    %c0_i32 = arith.constant 0 : i32
    %c0_i32_0 = arith.constant 0 : i32
    %c0_i32_1 = arith.constant 0 : i32
    return %arg0, %arg1, %c0_i32, %c0_i32_0 : i32, i32, i32, i32
  }
  func.func @transform_1(%arg0: i32, %arg1: i32) -> (i32, i32, i32) {
    %c0_i32 = arith.constant 0 : i32
    %c0_i32_0 = arith.constant 0 : i32
    %c0_i32_1 = arith.constant 0 : i32
    return %arg1, %c0_i32, %c0_i32_0 : i32, i32, i32
  }
  func.func @transform_2(%arg0: i32, %arg1: i32) -> (i32, i32, i32) {
    %c0_i32 = arith.constant 0 : i32
    %c0_i32_0 = arith.constant 0 : i32
    %c0_i32_1 = arith.constant 0 : i32
    return %arg0, %c0_i32, %c0_i32_0 : i32, i32, i32
  }
  func.func @transform_3(%arg0: i32, %arg1: i32) -> (i32, i32, i32) {
    %c0_i32 = arith.constant 0 : i32
    %c0_i32_0 = arith.constant 0 : i32
    %c0_i32_1 = arith.constant 0 : i32
    return %arg0, %c0_i32, %c0_i32_0 : i32, i32, i32
  }
  func.func @transform_4(%arg0: i32, %arg1: i32) -> (i32, i32, i32) {
    %c0_i32 = arith.constant 0 : i32
    %c0_i32_0 = arith.constant 0 : i32
    %c0_i32_1 = arith.constant 0 : i32
    return %arg0, %c0_i32, %c0_i32_0 : i32, i32, i32
  }
  func.func @transform_5(%arg0: i32, %arg1: i32) -> (i32, i32, i32) {
    %c0_i32 = arith.constant 0 : i32
    %c0_i32_0 = arith.constant 0 : i32
    %c0_i32_1 = arith.constant 0 : i32
    return %arg0, %c0_i32, %c0_i32_0 : i32, i32, i32
  }
  func.func @transform_6(%arg0: i32, %arg1: i32) -> (i32, i32, i32) {
    %c0_i32 = arith.constant 0 : i32
    %c0_i32_0 = arith.constant 0 : i32
    %c0_i32_1 = arith.constant 0 : i32
    return %arg0, %c0_i32, %c0_i32_0 : i32, i32, i32
  }
  func.func @transform_7(%arg0: i32, %arg1: i32) -> (i32, i32, i32) {
    %c0_i32 = arith.constant 0 : i32
    %c0_i32_0 = arith.constant 0 : i32
    %c0_i32_1 = arith.constant 0 : i32
    return %arg0, %c0_i32, %c0_i32_0 : i32, i32, i32
  }
  func.func @transform_8(%arg0: i32, %arg1: i32) -> (i32, i32, i32) {
    %c0_i32 = arith.constant 0 : i32
    %c0_i32_0 = arith.constant 0 : i32
    %c0_i32_1 = arith.constant 0 : i32
    return %arg0, %c0_i32, %c0_i32_0 : i32, i32, i32
  }
  func.func @transform_9(%arg0: i32, %arg1: i32) -> (i32, i32, i32, i32) {
    %c0_i32 = arith.constant 0 : i32
    %c0_i32_0 = arith.constant 0 : i32
    %c0_i32_1 = arith.constant 0 : i32
    return %arg0, %arg1, %c0_i32, %c0_i32_0 : i32, i32, i32, i32
  }
  func.func @transform_10(%arg0: i32, %arg1: i32) -> (i32, i32, i32, i32) {
    %c0_i32 = arith.constant 0 : i32
    %c0_i32_0 = arith.constant 0 : i32
    %c0_i32_1 = arith.constant 0 : i32
    return %arg0, %arg1, %c0_i32, %c0_i32_0 : i32, i32, i32, i32
  }
}

</mosaic_0001>

<llo_original>
// kernel: mod_enc_layer.5
$region0: #{mod_enc_layer.5}
  #allocation0 [shape = 'u32[]', space=smem, size = 0x4, offset = 0x4, fixed_abs, tag = 'smem constant byte address 0x4 - core index']
  #allocation1 [shape = 'u32[72,128]{1,0:T(1,128)}', space=vmem, size = 0x9000, scoped, tag = 'internal scratch']
  %s0 = inlined_call_operand.vmem [shape: f32[32,32], index: 0, kind: input, shape index: {}]
  %s1 = inlined_call_operand.vmem [shape: f32[32,1], index: 1, kind: input, shape index: {}]
  %s2 = inlined_call_operand.vmem [shape: f32[32,64], index: 2, kind: input, shape index: {}]
  %s3 = inlined_call_operand.vmem [shape: f32[1,64], index: 3, kind: input, shape index: {}]
  %s4 = inlined_call_operand.vmem [shape: f32[64,32], index: 4, kind: input, shape index: {}]
  %s5 = inlined_call_operand.vmem [shape: f32[1,32], index: 5, kind: input, shape index: {}]
  %s6 = inlined_call_operand.vmem [shape: f32[1,32], index: 6, kind: input, shape index: {}]
  %s7 = inlined_call_operand.vmem [shape: f32[1,32], index: 7, kind: input, shape index: {}]
  %s8 = inlined_call_operand.hbm [shape: f32[32,32], index: 8, kind: output, shape index: {}]
  %s9 = sld [smem:[#allocation0]]
  $region65: #{mod_enc_layer.5} parent=0
    _
  %s11 = ssub.s32 1, %s9
  %s12 = scalar_select 0, %s11, %s9
  $region1: #{mod_enc_layer.5} parent=0
    #allocation2 [shape = 'u8[16384]{0}', space=vmem, size = 0x4000, scoped, tag = 'output window, operand 0']
    #allocation3 [shape = 's32[2]{0}', space=sflag, size = 0x8, scoped, tag = 'scoped memory for mod_enc_layer.5']
    %13 = vsyncpa [#allocation3], 0
    %s14 = scalar_lea.sflag [#allocation3], 1
    %15 = vsyncpa %s14, 0
    loop: start=0, step=1, limit=4
    $region2: #{mod_enc_layer.5} parent=1 // loop_pre_header
      _
    $region3: #{mod_enc_layer.5} parent=1 // loop_header
      %s17 = sphi 0, %s21
      %p18 = scmp.ge.s32.totalorder %s17, 4
      %s27 = sphi 0, %s29
      %s30 = sphi 0, %s27
      %s31 = sphi 0, %s30
      %s47 = sphi 0, %s31
      %s53 = sphi 0, %s55
      %s56 = sphi 0, %s53
      %s57 = sphi 0, %s56
      %s73 = sphi 0, %s57
      %s77 = sphi 0, %s77
      %s79 = sphi 0, %s77
      %s80 = sphi 0, %s79
      %s94 = sphi 0, %s80
      %s98 = sphi 0, %s98
      %s100 = sphi 0, %s98
      %s101 = sphi 0, %s100
      %s115 = sphi 0, %s101
      %s119 = sphi 0, %s119
      %s121 = sphi 0, %s119
      %s122 = sphi 0, %s121
      %s136 = sphi 0, %s122
      %s140 = sphi 0, %s140
      %s142 = sphi 0, %s140
      %s143 = sphi 0, %s142
      %s157 = sphi 0, %s143
      %s161 = sphi 0, %s161
      %s163 = sphi 0, %s161
      %s164 = sphi 0, %s163
      %s178 = sphi 0, %s164
      %s182 = sphi 0, %s182
      %s184 = sphi 0, %s182
      %s185 = sphi 0, %s184
      %s199 = sphi 0, %s185
      %s205 = sphi 0, %s207
      %s208 = sphi 0, %s205
      %s209 = sphi 0, %s208
      %s225 = sphi 0, %s209
    $region4: #{mod_enc_layer.5} parent=1 // loop_header_branch
      %20 = sbr.rel (%p18) target = $region8
    $region5: #{mod_enc_layer.5} parent=1 // loop_body
      %s22 = ssub.s32 %s17, 1
      %s23 = ssub.s32 %s17, 2
      %s24 = sadd.s32 %s17, 1
      %s25 = ssub.s32 %s17, %s24
      %p26 = scmp.eq.s32.totalorder %s25, 0
      %s28 = sadd.s32 %s27, 1
      %s29 = scalar_select %p26, %s27, %s28
      %p32 = pneg %p26
      %p33 = scmp.eq.s32.totalorder %s17, 1
      %p34 = por %p32, %p33
      %p35 = scmp.ne.s32.totalorder %s27, %s30
      %p36 = scmp.eq.s32.totalorder %s17, 0
      %p37 = por %p35, %p36
      %p38 = scmp.ne.s32.totalorder %s27, %s30
      %p39 = scmp.eq.s32.totalorder %s22, 1
      %p40 = por %p38, %p39
      %p41 = scmp.ne.s32.totalorder %s30, %s31
      %p42 = scmp.eq.s32.totalorder %s22, 0
      %p43 = por %p41, %p42
      %p44 = scmp.ne.s32.totalorder %s30, %s31
      %p45 = scmp.eq.s32.totalorder %s23, 1
      %p46 = por %p44, %p45
      %p48 = scmp.ne.s32.totalorder %s31, %s47
      %p49 = scmp.eq.s32.totalorder %s23, 0
      %p50 = por %p48, %p49
      %s51 = ssub.s32 %s17, %s24
      %p52 = scmp.eq.s32.totalorder %s51, 0
      %s54 = sadd.s32 %s53, 1
      %s55 = scalar_select %p52, %s53, %s54
      %p58 = pneg %p52
      %p59 = scmp.eq.s32.totalorder %s17, 1
      %p60 = por %p58, %p59
      %p61 = scmp.ne.s32.totalorder %s53, %s56
      %p62 = scmp.eq.s32.totalorder %s17, 0
      %p63 = por %p61, %p62
      %p64 = scmp.ne.s32.totalorder %s53, %s56
      %p65 = scmp.eq.s32.totalorder %s22, 1
      %p66 = por %p64, %p65
      %p67 = scmp.ne.s32.totalorder %s56, %s57
      %p68 = scmp.eq.s32.totalorder %s22, 0
      %p69 = por %p67, %p68
      %p70 = scmp.ne.s32.totalorder %s56, %s57
      %p71 = scmp.eq.s32.totalorder %s23, 1
      %p72 = por %p70, %p71
      %p74 = scmp.ne.s32.totalorder %s57, %s73
      %p75 = scmp.eq.s32.totalorder %s23, 0
      %p76 = por %p74, %p75
      %s78 = sadd.s32 %s77, 1
      %p81 = scmp.eq.s32.totalorder %s17, 1
      %p82 = scmp.ne.s32.totalorder %s77, %s79
      %p83 = scmp.eq.s32.totalorder %s17, 0
      %p84 = por %p82, %p83
      %p85 = scmp.ne.s32.totalorder %s77, %s79
      %p86 = scmp.eq.s32.totalorder %s22, 1
      %p87 = por %p85, %p86
      %p88 = scmp.ne.s32.totalorder %s79, %s80
      %p89 = scmp.eq.s32.totalorder %s22, 0
      %p90 = por %p88, %p89
      %p91 = scmp.ne.s32.totalorder %s79, %s80
      %p92 = scmp.eq.s32.totalorder %s23, 1
      %p93 = por %p91, %p92
      %p95 = scmp.ne.s32.totalorder %s80, %s94
      %p96 = scmp.eq.s32.totalorder %s23, 0
      %p97 = por %p95, %p96
      %s99 = sadd.s32 %s98, 1
      %p102 = scmp.eq.s32.totalorder %s17, 1
      %p103 = scmp.ne.s32.totalorder %s98, %s100
      %p104 = scmp.eq.s32.totalorder %s17, 0
      %p105 = por %p103, %p104
      %p106 = scmp.ne.s32.totalorder %s98, %s100
      %p107 = scmp.eq.s32.totalorder %s22, 1
      %p108 = por %p106, %p107
      %p109 = scmp.ne.s32.totalorder %s100, %s101
      %p110 = scmp.eq.s32.totalorder %s22, 0
      %p111 = por %p109, %p110
      %p112 = scmp.ne.s32.totalorder %s100, %s101
      %p113 = scmp.eq.s32.totalorder %s23, 1
      %p114 = por %p112, %p113
      %p116 = scmp.ne.s32.totalorder %s101, %s115
      %p117 = scmp.eq.s32.totalorder %s23, 0
      %p118 = por %p116, %p117
      %s120 = sadd.s32 %s119, 1
      %p123 = scmp.eq.s32.totalorder %s17, 1
      %p124 = scmp.ne.s32.totalorder %s119, %s121
      %p125 = scmp.eq.s32.totalorder %s17, 0
      %p126 = por %p124, %p125
      %p127 = scmp.ne.s32.totalorder %s119, %s121
      %p128 = scmp.eq.s32.totalorder %s22, 1
      %p129 = por %p127, %p128
      %p130 = scmp.ne.s32.totalorder %s121, %s122
      %p131 = scmp.eq.s32.totalorder %s22, 0
      %p132 = por %p130, %p131
      %p133 = scmp.ne.s32.totalorder %s121, %s122
      %p134 = scmp.eq.s32.totalorder %s23, 1
      %p135 = por %p133, %p134
      %p137 = scmp.ne.s32.totalorder %s122, %s136
      %p138 = scmp.eq.s32.totalorder %s23, 0
      %p139 = por %p137, %p138
      %s141 = sadd.s32 %s140, 1
      %p144 = scmp.eq.s32.totalorder %s17, 1
      %p145 = scmp.ne.s32.totalorder %s140, %s142
      %p146 = scmp.eq.s32.totalorder %s17, 0
      %p147 = por %p145, %p146
      %p148 = scmp.ne.s32.totalorder %s140, %s142
      %p149 = scmp.eq.s32.totalorder %s22, 1
      %p150 = por %p148, %p149
      %p151 = scmp.ne.s32.totalorder %s142, %s143
      %p152 = scmp.eq.s32.totalorder %s22, 0
      %p153 = por %p151, %p152
      %p154 = scmp.ne.s32.totalorder %s142, %s143
      %p155 = scmp.eq.s32.totalorder %s23, 1
      %p156 = por %p154, %p155
      %p158 = scmp.ne.s32.totalorder %s143, %s157
      %p159 = scmp.eq.s32.totalorder %s23, 0
      %p160 = por %p158, %p159
      %s162 = sadd.s32 %s161, 1
      %p165 = scmp.eq.s32.totalorder %s17, 1
      %p166 = scmp.ne.s32.totalorder %s161, %s163
      %p167 = scmp.eq.s32.totalorder %s17, 0
      %p168 = por %p166, %p167
      %p169 = scmp.ne.s32.totalorder %s161, %s163
      %p170 = scmp.eq.s32.totalorder %s22, 1
      %p171 = por %p169, %p170
      %p172 = scmp.ne.s32.totalorder %s163, %s164
      %p173 = scmp.eq.s32.totalorder %s22, 0
      %p174 = por %p172, %p173
      %p175 = scmp.ne.s32.totalorder %s163, %s164
      %p176 = scmp.eq.s32.totalorder %s23, 1
      %p177 = por %p175, %p176
      %p179 = scmp.ne.s32.totalorder %s164, %s178
      %p180 = scmp.eq.s32.totalorder %s23, 0
      %p181 = por %p179, %p180
      %s183 = sadd.s32 %s182, 1
      %p186 = scmp.eq.s32.totalorder %s17, 1
      %p187 = scmp.ne.s32.totalorder %s182, %s184
      %p188 = scmp.eq.s32.totalorder %s17, 0
      %p189 = por %p187, %p188
      %p190 = scmp.ne.s32.totalorder %s182, %s184
      %p191 = scmp.eq.s32.totalorder %s22, 1
      %p192 = por %p190, %p191
      %p193 = scmp.ne.s32.totalorder %s184, %s185
      %p194 = scmp.eq.s32.totalorder %s22, 0
      %p195 = por %p193, %p194
      %p196 = scmp.ne.s32.totalorder %s184, %s185
      %p197 = scmp.eq.s32.totalorder %s23, 1
      %p198 = por %p196, %p197
      %p200 = scmp.ne.s32.totalorder %s185, %s199
      %p201 = scmp.eq.s32.totalorder %s23, 0
      %p202 = por %p200, %p201
      %s203 = ssub.s32 %s17, %s24
      %p204 = scmp.eq.s32.totalorder %s203, 0
      %s206 = sadd.s32 %s205, 1
      %s207 = scalar_select %p204, %s205, %s206
      %p210 = pneg %p204
      %p211 = scmp.eq.s32.totalorder %s17, 1
      %p212 = por %p210, %p211
      %p213 = scmp.ne.s32.totalorder %s205, %s208
      %p214 = scmp.eq.s32.totalorder %s17, 0
      %p215 = por %p213, %p214
      %p216 = scmp.ne.s32.totalorder %s205, %s208
      %p217 = scmp.eq.s32.totalorder %s22, 1
      %p218 = por %p216, %p217
      %p219 = scmp.ne.s32.totalorder %s208, %s209
      %p220 = scmp.eq.s32.totalorder %s22, 0
      %p221 = por %p219, %p220
      %p222 = scmp.ne.s32.totalorder %s208, %s209
      %p223 = scmp.eq.s32.totalorder %s23, 1
      %p224 = por %p222, %p223
      %p226 = scmp.ne.s32.totalorder %s209, %s225
      %p227 = scmp.eq.s32.totalorder %s23, 0
      %p228 = por %p226, %p227
      %p229 = scmp.le.s32.totalorder 1, %s17
      %p230 = scmp.lt.s32.totalorder %s17, 3
      %p231 = pnand %p229, %p230
      %p232 = pneg %p231
      // Predicated region
      $region9: #{mod_enc_layer.5} parent=5 // pred_check
        _
      $region10: #{mod_enc_layer.5} parent=5 // pred_check_branch
        %234 = sbr.rel (%p231) target = $region12
      $region11: #{mod_enc_layer.5} parent=5 // pred_region
        %s235 = ssub.s32 %s17, 1
        // Predicated region
        $region13: #{mod_enc_layer.5} parent=11 // pred_check
          %p236 = pneg %p90
        $region14: #{mod_enc_layer.5} parent=11 // pred_check_branch
          %238 = sbr.rel (%p236) target = $region16
        $region15: #{mod_enc_layer.5} parent=11 // pred_region
          _
        $region16: #{mod_enc_layer.5} parent=11 // pred_fallthru
          _
        // Predicated region
        $region17: #{mod_enc_layer.5} parent=11 // pred_check
          %p239 = pneg %p111
        $region18: #{mod_enc_layer.5} parent=11 // pred_check_branch
          %241 = sbr.rel (%p239) target = $region20
        $region19: #{mod_enc_layer.5} parent=11 // pred_region
          _
        $region20: #{mod_enc_layer.5} parent=11 // pred_fallthru
          _
        // Predicated region
        $region21: #{mod_enc_layer.5} parent=11 // pred_check
          %p242 = pneg %p132
        $region22: #{mod_enc_layer.5} parent=11 // pred_check_branch
          %244 = sbr.rel (%p242) target = $region24
        $region23: #{mod_enc_layer.5} parent=11 // pred_region
          _
        $region24: #{mod_enc_layer.5} parent=11 // pred_fallthru
          _
        // Predicated region
        $region25: #{mod_enc_layer.5} parent=11 // pred_check
          %p245 = pneg %p153
        $region26: #{mod_enc_layer.5} parent=11 // pred_check_branch
          %247 = sbr.rel (%p245) target = $region28
        $region27: #{mod_enc_layer.5} parent=11 // pred_region
          _
        $region28: #{mod_enc_layer.5} parent=11 // pred_fallthru
          _
        // Predicated region
        $region29: #{mod_enc_layer.5} parent=11 // pred_check
          %p248 = pneg %p174
        $region30: #{mod_enc_layer.5} parent=11 // pred_check_branch
          %250 = sbr.rel (%p248) target = $region32
        $region31: #{mod_enc_layer.5} parent=11 // pred_region
          _
        $region32: #{mod_enc_layer.5} parent=11 // pred_fallthru
          _
        // Predicated region
        $region33: #{mod_enc_layer.5} parent=11 // pred_check
          %p251 = pneg %p195
        $region34: #{mod_enc_layer.5} parent=11 // pred_check_branch
          %253 = sbr.rel (%p251) target = $region36
        $region35: #{mod_enc_layer.5} parent=11 // pred_region
          _
        $region36: #{mod_enc_layer.5} parent=11 // pred_fallthru
          _
      $region12: #{mod_enc_layer.5} parent=5 // pred_fallthru
        _
      %p254 = scmp.lt.s32.totalorder %s17, 2
      // Predicated region
      $region37: #{mod_enc_layer.5} parent=5 // pred_check
        %p255 = pneg %p254
      $region38: #{mod_enc_layer.5} parent=5 // pred_check_branch
        %257 = sbr.rel (%p255) target = $region40
      $region39: #{mod_enc_layer.5} parent=5 // pred_region
        // Predicated region
        $region41: #{mod_enc_layer.5} parent=39 // pred_check
          %p258 = pneg %p37
        $region42: #{mod_enc_layer.5} parent=39 // pred_check_branch
          %260 = sbr.rel (%p258) target = $region44
        $region43: #{mod_enc_layer.5} parent=39 // pred_region
          %s261 = smul.u32 2, %s17
          %p262 = scmp.lt.s32.totalorder %s261, 3
          %s263 = scalar_select %p262, %s261, 3
          %s264 = smul.addr %s263, 8
          %s265 = scalar_lea.vmem %s0, %s264
          %s266 = smul.u32 2, %s17
        $region44: #{mod_enc_layer.5} parent=39 // pred_fallthru
          _
        // Predicated region
        $region45: #{mod_enc_layer.5} parent=39 // pred_check
          %p267 = pneg %p63
        $region46: #{mod_enc_layer.5} parent=39 // pred_check_branch
          %269 = sbr.rel (%p267) target = $region48
        $region47: #{mod_enc_layer.5} parent=39 // pred_region
          %s270 = smul.u32 2, %s17
          %p271 = scmp.lt.s32.totalorder %s270, 3
          %s272 = scalar_select %p271, %s270, 3
          %s273 = smul.addr %s272, 8
          %s274 = scalar_lea.vmem %s1, %s273
          %s275 = smul.u32 2, %s17
        $region48: #{mod_enc_layer.5} parent=39 // pred_fallthru
          _
      $region40: #{mod_enc_layer.5} parent=5 // pred_fallthru
        _
      %p276 = scmp.le.s32.totalorder 1, %s17
      %p277 = scmp.lt.s32.totalorder %s17, 3
      %p278 = pnand %p276, %p277
      %p279 = pneg %p278
      // Predicated region
      $region49: #{mod_enc_layer.5} parent=5 // pred_check
        _
      $region50: #{mod_enc_layer.5} parent=5 // pred_check_branch
        %281 = sbr.rel (%p278) target = $region52
      $region51: #{mod_enc_layer.5} parent=5 // pred_region
        %s282 = ssub.s32 %s17, 1
        %s283 = smul.u32 2, %s22
        %p284 = scmp.lt.s32.totalorder %s283, 3
        %s285 = scalar_select %p284, %s283, 3
        %s286 = smul.addr %s285, 8
        %s287 = scalar_lea.vmem %s0, %s286
        %p288 = pneg %p43
        %p289 = pneg %p40
        %s290 = smul.u32 2, %s22
        %p291 = scmp.lt.s32.totalorder %s290, 3
        %s292 = scalar_select %p291, %s290, 3
        %s293 = smul.addr %s292, 8
        %s294 = scalar_lea.vmem %s1, %s293
        %p295 = pneg %p69
        %p296 = pneg %p66
        %p297 = pneg %p90
        %p298 = pneg %p87
        %p299 = pneg %p111
        %p300 = pneg %p108
        %p301 = pneg %p132
        %p302 = pneg %p129
        %p303 = pneg %p153
        %p304 = pneg %p150
        %p305 = pneg %p174
        %p306 = pneg %p171
        %p307 = pneg %p195
        %p308 = pneg %p192
        %p309 = pneg %p221
        %p310 = pneg %p218
        %s311 = sand.u32 %s208, 1
        %s312 = scalar_lea.sflag [#allocation3], %s311
        %s313 = sand.u32 %s208, 1
        %s314 = smul.addr %s313, 16
        %s315 = scalar_lea.vmem [#allocation2], %s314
        %s316 = smul.u32 2, %s22
        %p317 = scmp.lt.s32.totalorder %s316, 3
        %s318 = scalar_select %p317, %s316, 3
        %s319 = smul.addr %s318, 8
        %s320 = scalar_lea.vmem %s0, %s319
        %s321 = smul.u32 2, %s22
        %s322 = smul.u32 2, %s22
        %p323 = scmp.lt.s32.totalorder %s322, 3
        %s324 = scalar_select %p323, %s322, 3
        %s325 = smul.addr %s324, 8
        %s326 = scalar_lea.vmem %s1, %s325
        %s327 = smul.u32 2, %s22
        %s328 = smul.u32 2, %s22
        %v330 = vld [vmem:[%s320] sm:$0xff]
        %v331 = vld [vmem:[%s320 + $0x8] sm:$0xff]
        %v332 = vld [vmem:[%s326] sm:$0xff]
        %v333 = vld [vmem:[%s326 + $0x8] sm:$0xff]
        %335 = vset.pattern.permute.xlu0 0
        %336 = vperm.xlu0 %335, %v332
        %v337 = vpop.permute.xlu0 %336
        %340 = vset.pattern.permute.xlu0 0
        %341 = vperm.xlu0 %340, %v333
        %v342 = vpop.permute.xlu0 %341
        %v344 = vmul.f32 %v330, %v337
        %v345 = vmul.f32 %v331, %v342
        %v346 = vld [vmem:[%s6] sm:$0x1]
        %v347 = vld [vmem:[%s7] sm:$0x1]
        %vm348 = vcmask 261120
        %v349 = vsel %vm348, %v344, 0.0
        %350 = vadd.xlane.f32.xlu0 %v349
        %v351 = vpop.xlane.xlu0 %350
        %v352 = vsel %vm348, %v345, 0.0
        %353 = vadd.xlane.f32.xlu0 %v352
        %v354 = vpop.xlane.xlu0 %353
        %v355 = vrcp.pop 32.0
        %v356 = vmul.f32 32.0, %v355
        %v357 = vsub.f32 1.0, %v356
        %v358 = vmul.f32 %v355, %v357
        %v359 = vadd.f32 %v355, %v358
        %vm360 = vweird.f32 %v355
        %v361 = vsel %vm360, %v355, %v359
        %v362 = vmul.f32 %v351, %v361
        %v363 = vmul.f32 %v354, %v361
        %v364 = vsub.f32 %v344, %v362
        %v365 = vsub.f32 %v345, %v363
        %v366 = vmul.f32 %v364, %v364
        %v367 = vmul.f32 %v365, %v365
        %v368 = vsel %vm348, %v366, 0.0
        %369 = vadd.xlane.f32.xlu0 %v368
        %v370 = vpop.xlane.xlu0 %369
        %v371 = vsel %vm348, %v367, 0.0
        %372 = vadd.xlane.f32.xlu0 %v371
        %v373 = vpop.xlane.xlu0 %372
        %v374 = vmul.f32 %v370, %v361
        %v375 = vmul.f32 %v373, %v361
        %v376 = vadd.f32 %v374, 1e-06
        %v377 = vadd.f32 %v375, 1e-06
        %v378 = vrsqrt.pop %v376
        %v379 = vmul.f32 %v378, %v376
        %v380 = vmul.f32 %v379, %v378
        %v381 = vmul.f32 0.5, %v380
        %v382 = vsub.f32 1.5, %v381
        %v383 = vmul.f32 %v378, %v382
        %vm384 = vweird.f32 %v376
        %vm385 = vweird.f32 %v378
        %vm386 = vmor %vm384, %vm385
        %v387 = vsel %vm386, %v378, %v383
        %v388 = vrsqrt.pop %v377
        %v389 = vmul.f32 %v388, %v377
        %v390 = vmul.f32 %v389, %v388
        %v391 = vmul.f32 0.5, %v390
        %v392 = vsub.f32 1.5, %v391
        %v393 = vmul.f32 %v388, %v392
        %vm394 = vweird.f32 %v377
        %vm395 = vweird.f32 %v388
        %vm396 = vmor %vm394, %vm395
        %v397 = vsel %vm396, %v388, %v393
        %v398 = vmul.f32 %v364, %v387
        %v399 = vmul.f32 %v365, %v397
        %v401 = vperm.slane %v346, 0
        %v403 = vmul.f32 %v398, %v401
        %v404 = vmul.f32 %v399, %v401
        %v406 = vperm.slane %v347, 0
        %v408 = vadd.f32 %v403, %v406
        %v409 = vadd.f32 %v404, %v406
        %v410 = vld [vmem:[%s2] sm:$0xff]
        %v411 = vld [vmem:[%s2 + $0x8] sm:$0xff]
        %v412 = vld [vmem:[%s2 + $0x10] sm:$0xff]
        %v413 = vld [vmem:[%s2 + $0x18] sm:$0xff]
        %v414 = vpack.c.bf16 %v409, %v408
        %v415 = vpack.c.bf16 %v411, %v410
        %v416 = vpack.c.bf16 %v413, %v412
        %v417 = vld [vmem:[%s3] sm:$0x1]
        %v419 = vperm.slane %v417, 0
        %v422 = vsel %vm348, %v414, 0
        %424 = vmatpush.bf16.msra.mxu0 0
        %425 = vmatpush.bf16.msra.mxu0 0
        %426 = vmatpush.bf16.msra.mxu0 0
        %427 = vmatpush.bf16.msra.mxu0 0
        %428 = vmatpush.bf16.msra.mxu0 0
        %429 = vmatpush.bf16.msra.mxu0 0
        %430 = vmatpush.bf16.msra.mxu0 %v416
        %431 = vmatpush.bf16.msra.mxu0 %v415
        %432 = vmatmul.bf16.gmra.mxu0 %v422
        %v433 = vpop.f32.mrf.mxu0
        %v434 = vadd.f32 %v419, %v433
        %v435 = vpop.f32.mrf.mxu0
        %v436 = vadd.f32 %v419, %v435
        %437 = vdwg.mxu0
        %v438 = vmul.f32 %v434, 0.5
        %v439 = vmul.f32 %v436, 0.5
        %v440 = vmul.f32 %v434, 0.70710677
        %v441 = vmul.f32 %v436, 0.70710677
        %v442 = vmul.f32 %v440, %v440
        %v443 = vmin.f32 16.0, %v442
        %v444 = vmul.f32 %v443, 2.1237322e-06
        %v445 = vadd.f32 %v444, 0.00028619796
        %v446 = vmul.f32 %v443, %v445
        %v447 = vadd.f32 %v446, 0.0036580483
        %v448 = vmul.f32 %v443, %v447
        %v449 = vadd.f32 %v448, 0.05243302
        %v450 = vmul.f32 %v443, %v449
        %v451 = vadd.f32 %v450, 0.18741608
        %v452 = vmul.f32 %v443, %v451
        %v453 = vadd.f32 %v452, 1.1283791
        %v454 = vmul.f32 %v440, %v453
        %v455 = vmul.f32 %v443, 3.8918573e-05
        %v456 = vadd.f32 %v455, 0.001143296
        %v457 = vmul.f32 %v443, %v456
        %v458 = vadd.f32 %v457, 0.014752088
        %v459 = vmul.f32 %v443, %v458
        %v460 = vadd.f32 %v459, 0.112945676
        %v461 = vmul.f32 %v443, %v460
        %v462 = vadd.f32 %v461, 0.4994258
        %v463 = vmul.f32 %v443, %v462
        %v464 = vadd.f32 %v463, 1.0
        %v465 = vrcp.pop %v464
        %v466 = vmul.f32 %v464, %v465
        %v467 = vsub.f32 1.0, %v466
        %v468 = vmul.f32 %v465, %v467
        %v469 = vadd.f32 %v465, %v468
        %vm470 = vweird.f32 %v464
        %vm471 = vweird.f32 %v465
        %vm472 = vmor %vm470, %vm471
        %v473 = vsel %vm472, %v465, %v469
        %v474 = vand.u32 2147483647, %v464
        %vm475 = vcmp.eq.f32.partialorder %v474, 8.507059e+37
        %v476 = vand.u32 %v464, 2147483648
        %v477 = vor.u32 1.1754944e-38, %v476
        %v478 = vsel %vm475, %v477, %v473
        %v479 = vmul.f32 %v454, %v478
        %v480 = vmin.f32 %v479, 1.0
        %v481 = vmax.f32 %v480, -1.0
        %v482 = vmul.f32 %v441, %v441
        %v483 = vmin.f32 16.0, %v482
        %v484 = vmul.f32 %v483, 2.1237322e-06
        %v485 = vadd.f32 %v484, 0.00028619796
        %v486 = vmul.f32 %v483, %v485
        %v487 = vadd.f32 %v486, 0.0036580483
        %v488 = vmul.f32 %v483, %v487
        %v489 = vadd.f32 %v488, 0.05243302
        %v490 = vmul.f32 %v483, %v489
        %v491 = vadd.f32 %v490, 0.18741608
        %v492 = vmul.f32 %v483, %v491
        %v493 = vadd.f32 %v492, 1.1283791
        %v494 = vmul.f32 %v441, %v493
        %v495 = vmul.f32 %v483, 3.8918573e-05
        %v496 = vadd.f32 %v495, 0.001143296
        %v497 = vmul.f32 %v483, %v496
        %v498 = vadd.f32 %v497, 0.014752088
        %v499 = vmul.f32 %v483, %v498
        %v500 = vadd.f32 %v499, 0.112945676
        %v501 = vmul.f32 %v483, %v500
        %v502 = vadd.f32 %v501, 0.4994258
        %v503 = vmul.f32 %v483, %v502
        %v504 = vadd.f32 %v503, 1.0
        %v505 = vrcp.pop %v504
        %v506 = vmul.f32 %v504, %v505
        %v507 = vsub.f32 1.0, %v506
        %v508 = vmul.f32 %v505, %v507
        %v509 = vadd.f32 %v505, %v508
        %vm510 = vweird.f32 %v504
        %vm511 = vweird.f32 %v505
        %vm512 = vmor %vm510, %vm511
        %v513 = vsel %vm512, %v505, %v509
        %v514 = vand.u32 2147483647, %v504
        %vm515 = vcmp.eq.f32.partialorder %v514, 8.507059e+37
        %v516 = vand.u32 %v504, 2147483648
        %v517 = vor.u32 1.1754944e-38, %v516
        %v518 = vsel %vm515, %v517, %v513
        %v519 = vmul.f32 %v494, %v518
        %v520 = vmin.f32 %v519, 1.0
        %v521 = vmax.f32 %v520, -1.0
        %v522 = vadd.f32 %v481, 1.0
        %v523 = vadd.f32 %v521, 1.0
        %v524 = vmul.f32 %v438, %v522
        %v525 = vmul.f32 %v439, %v523
        %v526 = vld [vmem:[%s4] sm:$0xff]
        %v527 = vld [vmem:[%s4 + $0x8] sm:$0xff]
        %v528 = vld [vmem:[%s4 + $0x10] sm:$0xff]
        %v529 = vld [vmem:[%s4 + $0x18] sm:$0xff]
        %v530 = vld [vmem:[%s4 + $0x20] sm:$0xff]
        %v531 = vld [vmem:[%s4 + $0x28] sm:$0xff]
        %v532 = vld [vmem:[%s4 + $0x30] sm:$0xff]
        %v533 = vld [vmem:[%s4 + $0x38] sm:$0xff]
        %v534 = vpack.c.bf16 %v525, %v524
        %v535 = vpack.c.bf16 %v527, %v526
        %v536 = vpack.c.bf16 %v529, %v528
        %v537 = vpack.c.bf16 %v531, %v530
        %v538 = vpack.c.bf16 %v533, %v532
        %v539 = vld [vmem:[%s5] sm:$0x1]
        %v541 = vperm.slane %v539, 0
        %vm543 = vcmask 523264
        %v545 = vsel %vm543, %v534, 0
        %547 = vmatpush.bf16.msra.mxu0 0
        %548 = vmatpush.bf16.msra.mxu0 0
        %549 = vmatpush.bf16.msra.mxu0 0
        %550 = vmatpush.bf16.msra.mxu0 0
        %551 = vmatpush.bf16.msra.mxu0 %v538
        %552 = vmatpush.bf16.msra.mxu0 %v537
        %553 = vmatpush.bf16.msra.mxu0 %v536
        %554 = vmatpush.bf16.msra.mxu0 %v535
        %555 = vmatmul.bf16.gmra.mxu0 %v545
        %v556 = vpop.f32.mrf.mxu0
        %v557 = vadd.f32 %v541, %v556
        %v558 = vpop.f32.mrf.mxu0
        %v559 = vadd.f32 %v541, %v558
        %560 = vdwg.mxu0
        %v561 = vadd.f32 %v557, %v344
        %v562 = vadd.f32 %v559, %v345
        %v563 = vmul.f32 %v561, %v337
        %v564 = vmul.f32 %v562, %v342
        %565 = vst.msk [vmem:[%s315] sm:$0xff] %vm348, %v563
        %566 = vst.msk [vmem:[%s315 + $0x8] sm:$0xff] %vm348, %v564
        %s567 = sand.u32 %s208, 1
        %s568 = scalar_lea.sflag [#allocation3], %s567
        %s569 = sand.u32 %s208, 1
        %s570 = smul.addr %s569, 16
        %s571 = scalar_lea.vmem [#allocation2], %s570
        // Predicated region
        $region53: #{mod_enc_layer.5} parent=51 // pred_check
          %p572 = pneg %p218
        $region54: #{mod_enc_layer.5} parent=51 // pred_check_branch
          %574 = sbr.rel (%p572) target = $region56
        $region55: #{mod_enc_layer.5} parent=51 // pred_region
          %s575 = smul.u32 2, %s22
          %577 = vsyncadd %s568, 0
          %s578 = smul.addr %s575, 8
          %s579 = scalar_lea.hbm %s8, %s578
          %s580 = sshll.u32 %s571, 4
          %s581 = int_to_ptr.vmem [resolvable:$true] %s580
          %s582 = sshll.u32 %s579, 4
          %s583 = int_to_ptr.hbm [resolvable:$true] %s582
          %588 = dma.vmem_to_hbm [thread:$0]  %s581, 256, %s583, %s568, 128, 128, 8
        $region56: #{mod_enc_layer.5} parent=51 // pred_fallthru
          _
      $region52: #{mod_enc_layer.5} parent=5 // pred_fallthru
        _
      %p589 = scmp.le.s32.totalorder 2, %s17
      // Predicated region
      $region57: #{mod_enc_layer.5} parent=5 // pred_check
        %p590 = pneg %p589
      $region58: #{mod_enc_layer.5} parent=5 // pred_check_branch
        %592 = sbr.rel (%p590) target = $region60
      $region59: #{mod_enc_layer.5} parent=5 // pred_region
        %s593 = ssub.s32 %s17, 2
        // Predicated region
        $region61: #{mod_enc_layer.5} parent=59 // pred_check
          %p594 = pneg %p224
        $region62: #{mod_enc_layer.5} parent=59 // pred_check_branch
          %596 = sbr.rel (%p594) target = $region64
        $region63: #{mod_enc_layer.5} parent=59 // pred_region
          %s597 = sand.u32 %s209, 1
          %s598 = scalar_lea.sflag [#allocation3], %s597
          %s599 = sand.u32 %s209, 1
          %s600 = smul.addr %s599, 16
          %s601 = scalar_lea.vmem [#allocation2], %s600
          %603 = dma.done %s598, 256
        $region64: #{mod_enc_layer.5} parent=59 // pred_fallthru
          _
      $region60: #{mod_enc_layer.5} parent=5 // pred_fallthru
        _
    $region6: #{mod_enc_layer.5} parent=1 // loop_footer
      %s21 = sadd.s32 1, %s17
    $region7: #{mod_enc_layer.5} parent=1 // loop_footer_branch
      %16 = sbr.rel target = $region3
    $region8: #{mod_enc_layer.5} parent=1 // loop_exit
      _
    %604 = vsyncpa [#allocation3], 1
    %s605 = scalar_lea.sflag [#allocation3], 1
    %606 = vsyncpa %s605, 1

// kernel: mod_enc_layer.3
$region0: #{mod_enc_layer.3}
  #allocation0 [shape = 'u32[]', space=smem, size = 0x4, offset = 0x4, fixed_abs, tag = 'smem constant byte address 0x4 - core index']
  #allocation1 [shape = 'u32[72,128]{1,0:T(1,128)}', space=vmem, size = 0x9000, scoped, tag = 'internal scratch']
  %s0 = inlined_call_operand.vmem [shape: f32[2,2,8,32], index: 0, kind: input, shape index: {}, may-alias: {0,1}]
  %s1 = inlined_call_operand.vmem [shape: f32[2,2,8,32], index: 1, kind: input, shape index: {}, may-alias: {0,1}]
  %s2 = inlined_call_operand.vmem [shape: bf16[2,8,8], index: 2, kind: input, shape index: {}]
  %s3 = inlined_call_operand.vmem [shape: f32[2,32,32], index: 3, kind: input, shape index: {}]
  %s4 = inlined_call_operand.vmem [shape: f32[2,32,32], index: 4, kind: input, shape index: {}]
  %s5 = inlined_call_operand.vmem [shape: f32[2,32,32], index: 5, kind: input, shape index: {}]
  %s6 = inlined_call_operand.vmem [shape: f32[2,32,32], index: 6, kind: input, shape index: {}]
  %s7 = inlined_call_operand.vmem [shape: f32[2,1,32], index: 7, kind: input, shape index: {}]
  %s8 = inlined_call_operand.vmem [shape: f32[2,1,32], index: 8, kind: input, shape index: {}]
  %s9 = inlined_call_operand.vmem [shape: f32[2,1,32], index: 9, kind: input, shape index: {}]
  %s10 = inlined_call_operand.vmem [shape: f32[2,2,8,32], index: 10, kind: output, shape index: {}]
  %s11 = sld [smem:[#allocation0]]
  $region73: #{mod_enc_layer.3} parent=0
    _
  %s13 = ssub.s32 1, %s11
  %s14 = scalar_select 0, %s13, %s11
  loop: start=0, step=1, limit=4
  $region2: #{mod_enc_layer.3} parent=0 // loop_pre_header
    _
  $region3: #{mod_enc_layer.3} parent=0 // loop_header
    %s16 = sphi 0, %s20
    %p17 = scmp.ge.s32.totalorder %s16, 4
    %s23 = sphi 0, %s35
    %s24 = sphi 0, %s31
    %s25 = sphi 0, %s23
    %s26 = sphi 0, %s24
    %s27 = sphi 0, %s25
    %s28 = sphi 0, %s26
    %s40 = sphi 0, %s42
    %s43 = sphi 0, %s40
    %s44 = sphi 0, %s43
    %s60 = sphi 0, %s44
    %s70 = sphi 0, %s72
    %s73 = sphi 0, %s70
    %s74 = sphi 0, %s73
    %s90 = sphi 0, %s74
    %s96 = sphi 0, %s98
    %s99 = sphi 0, %s96
    %s100 = sphi 0, %s99
    %s116 = sphi 0, %s100
    %s122 = sphi 0, %s124
    %s125 = sphi 0, %s122
    %s126 = sphi 0, %s125
    %s142 = sphi 0, %s126
    %s148 = sphi 0, %s150
    %s151 = sphi 0, %s148
    %s152 = sphi 0, %s151
    %s168 = sphi 0, %s152
    %s174 = sphi 0, %s176
    %s177 = sphi 0, %s174
    %s178 = sphi 0, %s177
    %s194 = sphi 0, %s178
    %s200 = sphi 0, %s202
    %s203 = sphi 0, %s200
    %s204 = sphi 0, %s203
    %s220 = sphi 0, %s204
    %s226 = sphi 0, %s228
    %s229 = sphi 0, %s226
    %s230 = sphi 0, %s229
    %s246 = sphi 0, %s230
    %s252 = sphi 0, %s254
    %s255 = sphi 0, %s252
    %s256 = sphi 0, %s255
    %s272 = sphi 0, %s256
    %s278 = sphi 0, %s280
    %s281 = sphi 0, %s278
    %s282 = sphi 0, %s281
    %s298 = sphi 0, %s282
    %s306 = sphi 0, %s308
    %s309 = sphi 0, %s306
    %s310 = sphi 0, %s309
    %s326 = sphi 0, %s310
  $region4: #{mod_enc_layer.3} parent=0 // loop_header_branch
    %19 = sbr.rel (%p17) target = $region8
  $region5: #{mod_enc_layer.3} parent=0 // loop_body
    %s21 = ssub.s32 %s16, 1
    %s22 = ssub.s32 %s16, 2
    %s29 = sadd.s32 1, %s24
    %p30 = scmp.ge.s32.totalorder %s29, 1
    %s31 = scalar_select %p30, 0, %s29
    %s32 = sadd.s32 1, %s23
    %s33 = scalar_select %p30, %s32, %s23
    %p34 = scmp.ge.s32.totalorder %s33, 2
    %s35 = scalar_select %p34, 0, %s33
    %s36 = ssub.s32 %s23, %s35
    %s37 = ssub.s32 %s24, %s31
    %s38 = sor.u32 %s36, %s37
    %p39 = scmp.eq.s32.totalorder %s38, 0
    %s41 = sadd.s32 %s40, 1
    %s42 = scalar_select %p39, %s40, %s41
    %p45 = pneg %p39
    %p46 = scmp.eq.s32.totalorder %s16, 1
    %p47 = por %p45, %p46
    %p48 = scmp.ne.s32.totalorder %s40, %s43
    %p49 = scmp.eq.s32.totalorder %s16, 0
    %p50 = por %p48, %p49
    %p51 = scmp.ne.s32.totalorder %s40, %s43
    %p52 = scmp.eq.s32.totalorder %s21, 1
    %p53 = por %p51, %p52
    %p54 = scmp.ne.s32.totalorder %s43, %s44
    %p55 = scmp.eq.s32.totalorder %s21, 0
    %p56 = por %p54, %p55
    %p57 = scmp.ne.s32.totalorder %s43, %s44
    %p58 = scmp.eq.s32.totalorder %s22, 1
    %p59 = por %p57, %p58
    %p61 = scmp.ne.s32.totalorder %s44, %s60
    %p62 = scmp.eq.s32.totalorder %s22, 0
    %p63 = por %p61, %p62
    %s64 = ssub.s32 1, %s23
    %s65 = ssub.s32 1, %s35
    %s66 = ssub.s32 %s64, %s65
    %s67 = ssub.s32 %s24, %s31
    %s68 = sor.u32 %s66, %s67
    %p69 = scmp.eq.s32.totalorder %s68, 0
    %s71 = sadd.s32 %s70, 1
    %s72 = scalar_select %p69, %s70, %s71
    %p75 = pneg %p69
    %p76 = scmp.eq.s32.totalorder %s16, 1
    %p77 = por %p75, %p76
    %p78 = scmp.ne.s32.totalorder %s70, %s73
    %p79 = scmp.eq.s32.totalorder %s16, 0
    %p80 = por %p78, %p79
    %p81 = scmp.ne.s32.totalorder %s70, %s73
    %p82 = scmp.eq.s32.totalorder %s21, 1
    %p83 = por %p81, %p82
    %p84 = scmp.ne.s32.totalorder %s73, %s74
    %p85 = scmp.eq.s32.totalorder %s21, 0
    %p86 = por %p84, %p85
    %p87 = scmp.ne.s32.totalorder %s73, %s74
    %p88 = scmp.eq.s32.totalorder %s22, 1
    %p89 = por %p87, %p88
    %p91 = scmp.ne.s32.totalorder %s74, %s90
    %p92 = scmp.eq.s32.totalorder %s22, 0
    %p93 = por %p91, %p92
    %s94 = ssub.s32 %s24, %s31
    %p95 = scmp.eq.s32.totalorder %s94, 0
    %s97 = sadd.s32 %s96, 1
    %s98 = scalar_select %p95, %s96, %s97
    %p101 = pneg %p95
    %p102 = scmp.eq.s32.totalorder %s16, 1
    %p103 = por %p101, %p102
    %p104 = scmp.ne.s32.totalorder %s96, %s99
    %p105 = scmp.eq.s32.totalorder %s16, 0
    %p106 = por %p104, %p105
    %p107 = scmp.ne.s32.totalorder %s96, %s99
    %p108 = scmp.eq.s32.totalorder %s21, 1
    %p109 = por %p107, %p108
    %p110 = scmp.ne.s32.totalorder %s99, %s100
    %p111 = scmp.eq.s32.totalorder %s21, 0
    %p112 = por %p110, %p111
    %p113 = scmp.ne.s32.totalorder %s99, %s100
    %p114 = scmp.eq.s32.totalorder %s22, 1
    %p115 = por %p113, %p114
    %p117 = scmp.ne.s32.totalorder %s100, %s116
    %p118 = scmp.eq.s32.totalorder %s22, 0
    %p119 = por %p117, %p118
    %s120 = ssub.s32 %s23, %s35
    %p121 = scmp.eq.s32.totalorder %s120, 0
    %s123 = sadd.s32 %s122, 1
    %s124 = scalar_select %p121, %s122, %s123
    %p127 = pneg %p121
    %p128 = scmp.eq.s32.totalorder %s16, 1
    %p129 = por %p127, %p128
    %p130 = scmp.ne.s32.totalorder %s122, %s125
    %p131 = scmp.eq.s32.totalorder %s16, 0
    %p132 = por %p130, %p131
    %p133 = scmp.ne.s32.totalorder %s122, %s125
    %p134 = scmp.eq.s32.totalorder %s21, 1
    %p135 = por %p133, %p134
    %p136 = scmp.ne.s32.totalorder %s125, %s126
    %p137 = scmp.eq.s32.totalorder %s21, 0
    %p138 = por %p136, %p137
    %p139 = scmp.ne.s32.totalorder %s125, %s126
    %p140 = scmp.eq.s32.totalorder %s22, 1
    %p141 = por %p139, %p140
    %p143 = scmp.ne.s32.totalorder %s126, %s142
    %p144 = scmp.eq.s32.totalorder %s22, 0
    %p145 = por %p143, %p144
    %s146 = ssub.s32 %s23, %s35
    %p147 = scmp.eq.s32.totalorder %s146, 0
    %s149 = sadd.s32 %s148, 1
    %s150 = scalar_select %p147, %s148, %s149
    %p153 = pneg %p147
    %p154 = scmp.eq.s32.totalorder %s16, 1
    %p155 = por %p153, %p154
    %p156 = scmp.ne.s32.totalorder %s148, %s151
    %p157 = scmp.eq.s32.totalorder %s16, 0
    %p158 = por %p156, %p157
    %p159 = scmp.ne.s32.totalorder %s148, %s151
    %p160 = scmp.eq.s32.totalorder %s21, 1
    %p161 = por %p159, %p160
    %p162 = scmp.ne.s32.totalorder %s151, %s152
    %p163 = scmp.eq.s32.totalorder %s21, 0
    %p164 = por %p162, %p163
    %p165 = scmp.ne.s32.totalorder %s151, %s152
    %p166 = scmp.eq.s32.totalorder %s22, 1
    %p167 = por %p165, %p166
    %p169 = scmp.ne.s32.totalorder %s152, %s168
    %p170 = scmp.eq.s32.totalorder %s22, 0
    %p171 = por %p169, %p170
    %s172 = ssub.s32 %s23, %s35
    %p173 = scmp.eq.s32.totalorder %s172, 0
    %s175 = sadd.s32 %s174, 1
    %s176 = scalar_select %p173, %s174, %s175
    %p179 = pneg %p173
    %p180 = scmp.eq.s32.totalorder %s16, 1
    %p181 = por %p179, %p180
    %p182 = scmp.ne.s32.totalorder %s174, %s177
    %p183 = scmp.eq.s32.totalorder %s16, 0
    %p184 = por %p182, %p183
    %p185 = scmp.ne.s32.totalorder %s174, %s177
    %p186 = scmp.eq.s32.totalorder %s21, 1
    %p187 = por %p185, %p186
    %p188 = scmp.ne.s32.totalorder %s177, %s178
    %p189 = scmp.eq.s32.totalorder %s21, 0
    %p190 = por %p188, %p189
    %p191 = scmp.ne.s32.totalorder %s177, %s178
    %p192 = scmp.eq.s32.totalorder %s22, 1
    %p193 = por %p191, %p192
    %p195 = scmp.ne.s32.totalorder %s178, %s194
    %p196 = scmp.eq.s32.totalorder %s22, 0
    %p197 = por %p195, %p196
    %s198 = ssub.s32 %s23, %s35
    %p199 = scmp.eq.s32.totalorder %s198, 0
    %s201 = sadd.s32 %s200, 1
    %s202 = scalar_select %p199, %s200, %s201
    %p205 = pneg %p199
    %p206 = scmp.eq.s32.totalorder %s16, 1
    %p207 = por %p205, %p206
    %p208 = scmp.ne.s32.totalorder %s200, %s203
    %p209 = scmp.eq.s32.totalorder %s16, 0
    %p210 = por %p208, %p209
    %p211 = scmp.ne.s32.totalorder %s200, %s203
    %p212 = scmp.eq.s32.totalorder %s21, 1
    %p213 = por %p211, %p212
    %p214 = scmp.ne.s32.totalorder %s203, %s204
    %p215 = scmp.eq.s32.totalorder %s21, 0
    %p216 = por %p214, %p215
    %p217 = scmp.ne.s32.totalorder %s203, %s204
    %p218 = scmp.eq.s32.totalorder %s22, 1
    %p219 = por %p217, %p218
    %p221 = scmp.ne.s32.totalorder %s204, %s220
    %p222 = scmp.eq.s32.totalorder %s22, 0
    %p223 = por %p221, %p222
    %s224 = ssub.s32 %s23, %s35
    %p225 = scmp.eq.s32.totalorder %s224, 0
    %s227 = sadd.s32 %s226, 1
    %s228 = scalar_select %p225, %s226, %s227
    %p231 = pneg %p225
    %p232 = scmp.eq.s32.totalorder %s16, 1
    %p233 = por %p231, %p232
    %p234 = scmp.ne.s32.totalorder %s226, %s229
    %p235 = scmp.eq.s32.totalorder %s16, 0
    %p236 = por %p234, %p235
    %p237 = scmp.ne.s32.totalorder %s226, %s229
    %p238 = scmp.eq.s32.totalorder %s21, 1
    %p239 = por %p237, %p238
    %p240 = scmp.ne.s32.totalorder %s229, %s230
    %p241 = scmp.eq.s32.totalorder %s21, 0
    %p242 = por %p240, %p241
    %p243 = scmp.ne.s32.totalorder %s229, %s230
    %p244 = scmp.eq.s32.totalorder %s22, 1
    %p245 = por %p243, %p244
    %p247 = scmp.ne.s32.totalorder %s230, %s246
    %p248 = scmp.eq.s32.totalorder %s22, 0
    %p249 = por %p247, %p248
    %s250 = ssub.s32 %s23, %s35
    %p251 = scmp.eq.s32.totalorder %s250, 0
    %s253 = sadd.s32 %s252, 1
    %s254 = scalar_select %p251, %s252, %s253
    %p257 = pneg %p251
    %p258 = scmp.eq.s32.totalorder %s16, 1
    %p259 = por %p257, %p258
    %p260 = scmp.ne.s32.totalorder %s252, %s255
    %p261 = scmp.eq.s32.totalorder %s16, 0
    %p262 = por %p260, %p261
    %p263 = scmp.ne.s32.totalorder %s252, %s255
    %p264 = scmp.eq.s32.totalorder %s21, 1
    %p265 = por %p263, %p264
    %p266 = scmp.ne.s32.totalorder %s255, %s256
    %p267 = scmp.eq.s32.totalorder %s21, 0
    %p268 = por %p266, %p267
    %p269 = scmp.ne.s32.totalorder %s255, %s256
    %p270 = scmp.eq.s32.totalorder %s22, 1
    %p271 = por %p269, %p270
    %p273 = scmp.ne.s32.totalorder %s256, %s272
    %p274 = scmp.eq.s32.totalorder %s22, 0
    %p275 = por %p273, %p274
    %s276 = ssub.s32 %s23, %s35
    %p277 = scmp.eq.s32.totalorder %s276, 0
    %s279 = sadd.s32 %s278, 1
    %s280 = scalar_select %p277, %s278, %s279
    %p283 = pneg %p277
    %p284 = scmp.eq.s32.totalorder %s16, 1
    %p285 = por %p283, %p284
    %p286 = scmp.ne.s32.totalorder %s278, %s281
    %p287 = scmp.eq.s32.totalorder %s16, 0
    %p288 = por %p286, %p287
    %p289 = scmp.ne.s32.totalorder %s278, %s281
    %p290 = scmp.eq.s32.totalorder %s21, 1
    %p291 = por %p289, %p290
    %p292 = scmp.ne.s32.totalorder %s281, %s282
    %p293 = scmp.eq.s32.totalorder %s21, 0
    %p294 = por %p292, %p293
    %p295 = scmp.ne.s32.totalorder %s281, %s282
    %p296 = scmp.eq.s32.totalorder %s22, 1
    %p297 = por %p295, %p296
    %p299 = scmp.ne.s32.totalorder %s282, %s298
    %p300 = scmp.eq.s32.totalorder %s22, 0
    %p301 = por %p299, %p300
    %s302 = ssub.s32 %s23, %s35
    %s303 = ssub.s32 %s24, %s31
    %s304 = sor.u32 %s302, %s303
    %p305 = scmp.eq.s32.totalorder %s304, 0
    %s307 = sadd.s32 %s306, 1
    %s308 = scalar_select %p305, %s306, %s307
    %p311 = pneg %p305
    %p312 = scmp.eq.s32.totalorder %s16, 1
    %p313 = por %p311, %p312
    %p314 = scmp.ne.s32.totalorder %s306, %s309
    %p315 = scmp.eq.s32.totalorder %s16, 0
    %p316 = por %p314, %p315
    %p317 = scmp.ne.s32.totalorder %s306, %s309
    %p318 = scmp.eq.s32.totalorder %s21, 1
    %p319 = por %p317, %p318
    %p320 = scmp.ne.s32.totalorder %s309, %s310
    %p321 = scmp.eq.s32.totalorder %s21, 0
    %p322 = por %p320, %p321
    %p323 = scmp.ne.s32.totalorder %s309, %s310
    %p324 = scmp.eq.s32.totalorder %s22, 1
    %p325 = por %p323, %p324
    %p327 = scmp.ne.s32.totalorder %s310, %s326
    %p328 = scmp.eq.s32.totalorder %s22, 0
    %p329 = por %p327, %p328
    %p330 = scmp.le.s32.totalorder 1, %s16
    %p331 = scmp.lt.s32.totalorder %s16, 3
    %p332 = pnand %p330, %p331
    %p333 = pneg %p332
    // Predicated region
    $region9: #{mod_enc_layer.3} parent=5 // pred_check
      _
    $region10: #{mod_enc_layer.3} parent=5 // pred_check_branch
      %335 = sbr.rel (%p332) target = $region12
    $region11: #{mod_enc_layer.3} parent=5 // pred_region
      %s336 = ssub.s32 %s16, 1
      // Predicated region
      $region13: #{mod_enc_layer.3} parent=11 // pred_check
        %p337 = pneg %p112
      $region14: #{mod_enc_layer.3} parent=11 // pred_check_branch
        %339 = sbr.rel (%p337) target = $region16
      $region15: #{mod_enc_layer.3} parent=11 // pred_region
        %s340 = smul.u32 2, %s26
        %p341 = scmp.lt.s32.totalorder %s340, 1
        %s342 = scalar_select %p341, %s340, 1
        %s343 = smul.addr %s342, 4
        %s344 = scalar_lea.vmem %s2, %s343
        %s345 = smul.u32 2, %s26
      $region16: #{mod_enc_layer.3} parent=11 // pred_fallthru
        _
    $region12: #{mod_enc_layer.3} parent=5 // pred_fallthru
      _
    %p346 = scmp.lt.s32.totalorder %s16, 2
    // Predicated region
    $region17: #{mod_enc_layer.3} parent=5 // pred_check
      %p347 = pneg %p346
    $region18: #{mod_enc_layer.3} parent=5 // pred_check_branch
      %349 = sbr.rel (%p347) target = $region20
    $region19: #{mod_enc_layer.3} parent=5 // pred_region
      // Predicated region
      $region21: #{mod_enc_layer.3} parent=19 // pred_check
        %p350 = pneg %p50
      $region22: #{mod_enc_layer.3} parent=19 // pred_check_branch
        %352 = sbr.rel (%p350) target = $region24
      $region23: #{mod_enc_layer.3} parent=19 // pred_region
        %s353 = smul.u32 2, %s24
        %p354 = scmp.lt.s32.totalorder %s23, 1
        %s355 = scalar_select %p354, %s23, 1
        %p356 = scmp.lt.s32.totalorder %s353, 1
        %s357 = scalar_select %p356, %s353, 1
        %s358 = smul.addr %s355, 2
        %s359 = sadd.s32 %s357, %s358
        %s360 = smul.addr %s359, 8
        %s361 = scalar_lea.vmem %s0, %s360
        %s362 = smul.u32 2, %s24
      $region24: #{mod_enc_layer.3} parent=19 // pred_fallthru
        _
      // Predicated region
      $region25: #{mod_enc_layer.3} parent=19 // pred_check
        %p363 = pneg %p80
      $region26: #{mod_enc_layer.3} parent=19 // pred_check_branch
        %365 = sbr.rel (%p363) target = $region28
      $region27: #{mod_enc_layer.3} parent=19 // pred_region
        %s366 = ssub.s32 1, %s23
        %s367 = smul.u32 2, %s24
        %p368 = scmp.lt.s32.totalorder %s366, 1
        %s369 = scalar_select %p368, %s366, 1
        %p370 = scmp.lt.s32.totalorder %s367, 1
        %s371 = scalar_select %p370, %s367, 1
        %s372 = smul.addr %s369, 2
        %s373 = sadd.s32 %s371, %s372
        %s374 = smul.addr %s373, 8
        %s375 = scalar_lea.vmem %s1, %s374
        %s376 = ssub.s32 1, %s23
        %s377 = smul.u32 2, %s24
      $region28: #{mod_enc_layer.3} parent=19 // pred_fallthru
        _
      // Predicated region
      $region29: #{mod_enc_layer.3} parent=19 // pred_check
        %p378 = pneg %p132
      $region30: #{mod_enc_layer.3} parent=19 // pred_check_branch
        %380 = sbr.rel (%p378) target = $region32
      $region31: #{mod_enc_layer.3} parent=19 // pred_region
        %p381 = scmp.lt.s32.totalorder %s23, 1
        %s382 = scalar_select %p381, %s23, 1
        %s383 = smul.addr %s382, 4
        %s384 = smul.addr %s383, 8
        %s385 = scalar_lea.vmem %s3, %s384
      $region32: #{mod_enc_layer.3} parent=19 // pred_fallthru
        _
      // Predicated region
      $region33: #{mod_enc_layer.3} parent=19 // pred_check
        %p386 = pneg %p158
      $region34: #{mod_enc_layer.3} parent=19 // pred_check_branch
        %388 = sbr.rel (%p386) target = $region36
      $region35: #{mod_enc_layer.3} parent=19 // pred_region
        %p389 = scmp.lt.s32.totalorder %s23, 1
        %s390 = scalar_select %p389, %s23, 1
        %s391 = smul.addr %s390, 4
        %s392 = smul.addr %s391, 8
        %s393 = scalar_lea.vmem %s4, %s392
      $region36: #{mod_enc_layer.3} parent=19 // pred_fallthru
        _
      // Predicated region
      $region37: #{mod_enc_layer.3} parent=19 // pred_check
        %p394 = pneg %p184
      $region38: #{mod_enc_layer.3} parent=19 // pred_check_branch
        %396 = sbr.rel (%p394) target = $region40
      $region39: #{mod_enc_layer.3} parent=19 // pred_region
        %p397 = scmp.lt.s32.totalorder %s23, 1
        %s398 = scalar_select %p397, %s23, 1
        %s399 = smul.addr %s398, 4
        %s400 = smul.addr %s399, 8
        %s401 = scalar_lea.vmem %s5, %s400
      $region40: #{mod_enc_layer.3} parent=19 // pred_fallthru
        _
      // Predicated region
      $region41: #{mod_enc_layer.3} parent=19 // pred_check
        %p402 = pneg %p210
      $region42: #{mod_enc_layer.3} parent=19 // pred_check_branch
        %404 = sbr.rel (%p402) target = $region44
      $region43: #{mod_enc_layer.3} parent=19 // pred_region
        %p405 = scmp.lt.s32.totalorder %s23, 1
        %s406 = scalar_select %p405, %s23, 1
        %s407 = smul.addr %s406, 4
        %s408 = smul.addr %s407, 8
        %s409 = scalar_lea.vmem %s6, %s408
      $region44: #{mod_enc_layer.3} parent=19 // pred_fallthru
        _
      // Predicated region
      $region45: #{mod_enc_layer.3} parent=19 // pred_check
        %p410 = pneg %p236
      $region46: #{mod_enc_layer.3} parent=19 // pred_check_branch
        %412 = sbr.rel (%p410) target = $region48
      $region47: #{mod_enc_layer.3} parent=19 // pred_region
        %p413 = scmp.lt.s32.totalorder %s23, 1
        %s414 = scalar_select %p413, %s23, 1
        %s415 = scalar_lea.vmem %s7, %s414
      $region48: #{mod_enc_layer.3} parent=19 // pred_fallthru
        _
      // Predicated region
      $region49: #{mod_enc_layer.3} parent=19 // pred_check
        %p416 = pneg %p262
      $region50: #{mod_enc_layer.3} parent=19 // pred_check_branch
        %418 = sbr.rel (%p416) target = $region52
      $region51: #{mod_enc_layer.3} parent=19 // pred_region
        %p419 = scmp.lt.s32.totalorder %s23, 1
        %s420 = scalar_select %p419, %s23, 1
        %s421 = scalar_lea.vmem %s8, %s420
      $region52: #{mod_enc_layer.3} parent=19 // pred_fallthru
        _
      // Predicated region
      $region53: #{mod_enc_layer.3} parent=19 // pred_check
        %p422 = pneg %p288
      $region54: #{mod_enc_layer.3} parent=19 // pred_check_branch
        %424 = sbr.rel (%p422) target = $region56
      $region55: #{mod_enc_layer.3} parent=19 // pred_region
        %p425 = scmp.lt.s32.totalorder %s23, 1
        %s426 = scalar_select %p425, %s23, 1
        %s427 = scalar_lea.vmem %s9, %s426
      $region56: #{mod_enc_layer.3} parent=19 // pred_fallthru
        _
    $region20: #{mod_enc_layer.3} parent=5 // pred_fallthru
      _
    %p428 = scmp.le.s32.totalorder 1, %s16
    %p429 = scmp.lt.s32.totalorder %s16, 3
    %p430 = pnand %p428, %p429
    %p431 = pneg %p430
    // Predicated region
    $region57: #{mod_enc_layer.3} parent=5 // pred_check
      _
    $region58: #{mod_enc_layer.3} parent=5 // pred_check_branch
      %433 = sbr.rel (%p430) target = $region60
    $region59: #{mod_enc_layer.3} parent=5 // pred_region
      %s434 = ssub.s32 %s16, 1
      %s435 = smul.u32 2, %s26
      %p436 = scmp.lt.s32.totalorder %s25, 1
      %s437 = scalar_select %p436, %s25, 1
      %p438 = scmp.lt.s32.totalorder %s435, 1
      %s439 = scalar_select %p438, %s435, 1
      %s440 = smul.addr %s437, 2
      %s441 = sadd.s32 %s439, %s440
      %s442 = smul.addr %s441, 8
      %s443 = scalar_lea.vmem %s0, %s442
      %p444 = pneg %p56
      %p445 = pneg %p53
      %s446 = ssub.s32 1, %s25
      %s447 = smul.u32 2, %s26
      %p448 = scmp.lt.s32.totalorder %s446, 1
      %s449 = scalar_select %p448, %s446, 1
      %p450 = scmp.lt.s32.totalorder %s447, 1
      %s451 = scalar_select %p450, %s447, 1
      %s452 = smul.addr %s449, 2
      %s453 = sadd.s32 %s451, %s452
      %s454 = smul.addr %s453, 8
      %s455 = scalar_lea.vmem %s1, %s454
      %p456 = pneg %p86
      %p457 = pneg %p83
      %s458 = smul.u32 2, %s26
      %p459 = scmp.lt.s32.totalorder %s458, 1
      %s460 = scalar_select %p459, %s458, 1
      %s461 = smul.addr %s460, 4
      %s462 = scalar_lea.vmem %s2, %s461
      %p463 = pneg %p112
      %p464 = pneg %p109
      %p465 = scmp.lt.s32.totalorder %s25, 1
      %s466 = scalar_select %p465, %s25, 1
      %s467 = smul.addr %s466, 4
      %s468 = smul.addr %s467, 8
      %s469 = scalar_lea.vmem %s3, %s468
      %p470 = pneg %p138
      %p471 = pneg %p135
      %p472 = scmp.lt.s32.totalorder %s25, 1
      %s473 = scalar_select %p472, %s25, 1
      %s474 = smul.addr %s473, 4
      %s475 = smul.addr %s474, 8
      %s476 = scalar_lea.vmem %s4, %s475
      %p477 = pneg %p164
      %p478 = pneg %p161
      %p479 = scmp.lt.s32.totalorder %s25, 1
      %s480 = scalar_select %p479, %s25, 1
      %s481 = smul.addr %s480, 4
      %s482 = smul.addr %s481, 8
      %s483 = scalar_lea.vmem %s5, %s482
      %p484 = pneg %p190
      %p485 = pneg %p187
      %p486 = scmp.lt.s32.totalorder %s25, 1
      %s487 = scalar_select %p486, %s25, 1
      %s488 = smul.addr %s487, 4
      %s489 = smul.addr %s488, 8
      %s490 = scalar_lea.vmem %s6, %s489
      %p491 = pneg %p216
      %p492 = pneg %p213
      %p493 = scmp.lt.s32.totalorder %s25, 1
      %s494 = scalar_select %p493, %s25, 1
      %s495 = scalar_lea.vmem %s7, %s494
      %p496 = pneg %p242
      %p497 = pneg %p239
      %p498 = scmp.lt.s32.totalorder %s25, 1
      %s499 = scalar_select %p498, %s25, 1
      %s500 = scalar_lea.vmem %s8, %s499
      %p501 = pneg %p268
      %p502 = pneg %p265
      %p503 = scmp.lt.s32.totalorder %s25, 1
      %s504 = scalar_select %p503, %s25, 1
      %s505 = scalar_lea.vmem %s9, %s504
      %p506 = pneg %p294
      %p507 = pneg %p291
      %p508 = pneg %p322
      %p509 = pneg %p319
      %s510 = smul.u32 2, %s26
      %p511 = scmp.lt.s32.totalorder %s25, 1
      %s512 = scalar_select %p511, %s25, 1
      %p513 = scmp.lt.s32.totalorder %s510, 1
      %s514 = scalar_select %p513, %s510, 1
      %s515 = smul.addr %s512, 2
      %s516 = sadd.s32 %s514, %s515
      %s517 = smul.addr %s516, 8
      %s518 = scalar_lea.vmem %s10, %s517
      %s519 = smul.u32 2, %s26
      %p520 = scmp.lt.s32.totalorder %s25, 1
      %s521 = scalar_select %p520, %s25, 1
      %p522 = scmp.lt.s32.totalorder %s519, 1
      %s523 = scalar_select %p522, %s519, 1
      %s524 = smul.addr %s521, 2
      %s525 = sadd.s32 %s523, %s524
      %s526 = smul.addr %s525, 8
      %s527 = scalar_lea.vmem %s0, %s526
      %s528 = smul.u32 2, %s26
      %s529 = ssub.s32 1, %s25
      %s530 = smul.u32 2, %s26
      %p531 = scmp.lt.s32.totalorder %s529, 1
      %s532 = scalar_select %p531, %s529, 1
      %p533 = scmp.lt.s32.totalorder %s530, 1
      %s534 = scalar_select %p533, %s530, 1
      %s535 = smul.addr %s532, 2
      %s536 = sadd.s32 %s534, %s535
      %s537 = smul.addr %s536, 8
      %s538 = scalar_lea.vmem %s1, %s537
      %s539 = ssub.s32 1, %s25
      %s540 = smul.u32 2, %s26
      %s541 = smul.u32 2, %s26
      %p542 = scmp.lt.s32.totalorder %s541, 1
      %s543 = scalar_select %p542, %s541, 1
      %s544 = smul.addr %s543, 4
      %s545 = scalar_lea.vmem %s2, %s544
      %s546 = smul.u32 2, %s26
      %p547 = scmp.lt.s32.totalorder %s25, 1
      %s548 = scalar_select %p547, %s25, 1
      %s549 = smul.addr %s548, 4
      %s550 = smul.addr %s549, 8
      %s551 = scalar_lea.vmem %s3, %s550
      %p552 = scmp.lt.s32.totalorder %s25, 1
      %s553 = scalar_select %p552, %s25, 1
      %s554 = smul.addr %s553, 4
      %s555 = smul.addr %s554, 8
      %s556 = scalar_lea.vmem %s4, %s555
      %p557 = scmp.lt.s32.totalorder %s25, 1
      %s558 = scalar_select %p557, %s25, 1
      %s559 = smul.addr %s558, 4
      %s560 = smul.addr %s559, 8
      %s561 = scalar_lea.vmem %s5, %s560
      %p562 = scmp.lt.s32.totalorder %s25, 1
      %s563 = scalar_select %p562, %s25, 1
      %s564 = smul.addr %s563, 4
      %s565 = smul.addr %s564, 8
      %s566 = scalar_lea.vmem %s6, %s565
      %p567 = scmp.lt.s32.totalorder %s25, 1
      %s568 = scalar_select %p567, %s25, 1
      %s569 = scalar_lea.vmem %s7, %s568
      %p570 = scmp.lt.s32.totalorder %s25, 1
      %s571 = scalar_select %p570, %s25, 1
      %s572 = scalar_lea.vmem %s8, %s571
      %p573 = scmp.lt.s32.totalorder %s25, 1
      %s574 = scalar_select %p573, %s25, 1
      %s575 = scalar_lea.vmem %s9, %s574
      %s576 = smul.u32 2, %s26
      %p577 = scmp.lt.s32.totalorder %s25, 1
      %s578 = scalar_select %p577, %s25, 1
      %p579 = scmp.lt.s32.totalorder %s576, 1
      %s580 = scalar_select %p579, %s576, 1
      %s581 = smul.addr %s578, 2
      %s582 = sadd.s32 %s580, %s581
      %s583 = smul.addr %s582, 8
      %s584 = scalar_lea.vmem %s10, %s583
      %s585 = smul.u32 2, %s26
      %v587 = vld [vmem:[%s527] sm:$0xff]
      %v588 = vld [vmem:[%s527 + $0x8] sm:$0xff]
      %v589 = vld [vmem:[%s538] sm:$0xff]
      %v590 = vld [vmem:[%s538 + $0x8] sm:$0xff]
      %v591 = vld [vmem:[%s545] sm:$0xf]
      %v592 = vld [vmem:[%s545 + $0x4] sm:$0xf]
      %v593 = vunpack.c.l.bf16 %v591
      %v594 = vunpack.c.l.bf16 %v592
      %v595 = vld [vmem:[%s572] sm:$0x1]
      %v596 = vld [vmem:[%s575] sm:$0x1]
      %vm597 = vcmask 261120
      %v598 = vsel %vm597, %v587, 0.0
      %599 = vadd.xlane.f32.xlu0 %v598
      %v600 = vpop.xlane.xlu0 %599
      %v601 = vsel %vm597, %v588, 0.0
      %602 = vadd.xlane.f32.xlu0 %v601
      %v603 = vpop.xlane.xlu0 %602
      %v604 = vrcp.pop 32.0
      %v605 = vmul.f32 32.0, %v604
      %v606 = vsub.f32 1.0, %v605
      %v607 = vmul.f32 %v604, %v606
      %v608 = vadd.f32 %v604, %v607
      %vm609 = vweird.f32 %v604
      %v610 = vsel %vm609, %v604, %v608
      %v611 = vmul.f32 %v600, %v610
      %v612 = vmul.f32 %v603, %v610
      %v613 = vsub.f32 %v587, %v611
      %v614 = vsub.f32 %v588, %v612
      %v615 = vmul.f32 %v613, %v613
      %v616 = vmul.f32 %v614, %v614
      %v617 = vsel %vm597, %v615, 0.0
      %618 = vadd.xlane.f32.xlu0 %v617
      %v619 = vpop.xlane.xlu0 %618
      %v620 = vsel %vm597, %v616, 0.0
      %621 = vadd.xlane.f32.xlu0 %v620
      %v622 = vpop.xlane.xlu0 %621
      %v623 = vmul.f32 %v619, %v610
      %v624 = vmul.f32 %v622, %v610
      %v625 = vadd.f32 %v623, 1e-06
      %v626 = vadd.f32 %v624, 1e-06
      %v627 = vrsqrt.pop %v625
      %v628 = vmul.f32 %v627, %v625
      %v629 = vmul.f32 %v628, %v627
      %v630 = vmul.f32 0.5, %v629
      %v631 = vsub.f32 1.5, %v630
      %v632 = vmul.f32 %v627, %v631
      %vm633 = vweird.f32 %v625
      %vm634 = vweird.f32 %v627
      %vm635 = vmor %vm633, %vm634
      %v636 = vsel %vm635, %v627, %v632
      %v637 = vrsqrt.pop %v626
      %v638 = vmul.f32 %v637, %v626
      %v639 = vmul.f32 %v638, %v637
      %v640 = vmul.f32 0.5, %v639
      %v641 = vsub.f32 1.5, %v640
      %v642 = vmul.f32 %v637, %v641
      %vm643 = vweird.f32 %v626
      %vm644 = vweird.f32 %v637
      %vm645 = vmor %vm643, %vm644
      %v646 = vsel %vm645, %v637, %v642
      %v647 = vmul.f32 %v613, %v636
      %v648 = vmul.f32 %v614, %v646
      %v650 = vperm.slane %v595, 0
      %v652 = vmul.f32 %v647, %v650
      %v653 = vmul.f32 %v648, %v650
      %v655 = vperm.slane %v596, 0
      %v657 = vadd.f32 %v652, %v655
      %v658 = vadd.f32 %v653, %v655
      %v659 = vld [vmem:[%s551] sm:$0xff]
      %v660 = vld [vmem:[%s551 + $0x8] sm:$0xff]
      %v661 = vld [vmem:[%s551 + $0x10] sm:$0xff]
      %v662 = vld [vmem:[%s551 + $0x18] sm:$0xff]
      %v663 = vpack.c.bf16 %v658, %v657
      %v664 = vpack.c.bf16 %v660, %v659
      %v665 = vpack.c.bf16 %v662, %v661
      %v667 = vsel %vm597, %v663, 0
      %669 = vmatpush.bf16.msra.mxu0 0
      %670 = vmatpush.bf16.msra.mxu0 0
      %671 = vmatpush.bf16.msra.mxu0 0
      %672 = vmatpush.bf16.msra.mxu0 0
      %673 = vmatpush.bf16.msra.mxu0 0
      %674 = vmatpush.bf16.msra.mxu0 0
      %675 = vmatpush.bf16.msra.mxu0 %v665
      %676 = vmatpush.bf16.msra.mxu0 %v664
      %677 = vmatmul.bf16.gmra.mxu0 %v667
      %v678 = vpop.f32.mrf.mxu0
      %v679 = vadd.f32 0.0, %v678
      %v680 = vpop.f32.mrf.mxu0
      %v681 = vadd.f32 0.0, %v680
      %682 = vdwg.mxu0
      %v683 = vmul.f32 %v679, 0.35355338
      %v684 = vmul.f32 %v681, 0.35355338
      %v685 = vld [vmem:[%s556] sm:$0xff]
      %v686 = vld [vmem:[%s556 + $0x8] sm:$0xff]
      %v687 = vld [vmem:[%s556 + $0x10] sm:$0xff]
      %v688 = vld [vmem:[%s556 + $0x18] sm:$0xff]
      %v689 = vpack.c.bf16 %v590, %v589
      %v690 = vpack.c.bf16 %v686, %v685
      %v691 = vpack.c.bf16 %v688, %v687
      %v693 = vsel %vm597, %v689, 0
      %695 = vmatpush.bf16.msra.mxu0 0
      %696 = vmatpush.bf16.msra.mxu0 0
      %697 = vmatpush.bf16.msra.mxu0 0
      %698 = vmatpush.bf16.msra.mxu0 0
      %699 = vmatpush.bf16.msra.mxu0 0
      %700 = vmatpush.bf16.msra.mxu0 0
      %701 = vmatpush.bf16.msra.mxu0 %v691
      %702 = vmatpush.bf16.msra.mxu0 %v690
      %703 = vmatmul.bf16.gmra.mxu0 %v693
      %v704 = vpop.f32.mrf.mxu0
      %v705 = vadd.f32 0.0, %v704
      %v706 = vpop.f32.mrf.mxu0
      %v707 = vadd.f32 0.0, %v706
      %708 = vdwg.mxu0
      %v709 = vld [vmem:[%s561] sm:$0xff]
      %v710 = vld [vmem:[%s561 + $0x8] sm:$0xff]
      %v711 = vld [vmem:[%s561 + $0x10] sm:$0xff]
      %v712 = vld [vmem:[%s561 + $0x18] sm:$0xff]
      %v713 = vpack.c.bf16 %v710, %v709
      %v714 = vpack.c.bf16 %v712, %v711
      %715 = vmatpush.bf16.msra.mxu0 0
      %716 = vmatpush.bf16.msra.mxu0 0
      %717 = vmatpush.bf16.msra.mxu0 0
      %718 = vmatpush.bf16.msra.mxu0 0
      %719 = vmatpush.bf16.msra.mxu0 0
      %720 = vmatpush.bf16.msra.mxu0 0
      %721 = vmatpush.bf16.msra.mxu0 %v714
      %722 = vmatpush.bf16.msra.mxu0 %v713
      %723 = vmatmul.bf16.gmra.mxu0 %v693
      %v724 = vpop.f32.mrf.mxu0
      %v725 = vadd.f32 0.0, %v724
      %v726 = vpop.f32.mrf.mxu0
      %v727 = vadd.f32 0.0, %v726
      %728 = vdwg.mxu0
      %731 = vrot.lane.b32.xlu0 %v683, 120
      %v732 = vpop.permute.xlu0 %731
      %733 = vrot.lane.b32.xlu0 %v684, 120
      %v734 = vpop.permute.xlu0 %733
      %737 = vrot.lane.b32.xlu0 %v683, 112
      %v738 = vpop.permute.xlu0 %737
      %739 = vrot.lane.b32.xlu0 %v684, 112
      %v740 = vpop.permute.xlu0 %739
      %743 = vrot.lane.b32.xlu0 %v683, 104
      %v744 = vpop.permute.xlu0 %743
      %745 = vrot.lane.b32.xlu0 %v684, 104
      %v746 = vpop.permute.xlu0 %745
      %v749 = vrot.slane %v738, 4
      %vm750 = vcmask 1047556
      %v751 = vsel %vm750, %v749, %v683
      %v752 = vrot.slane %v683, 4
      %v753 = vsel %vm750, %v738, %v752
      %v755 = vunpack.c.l.s4 1983009808
      %v756 = vunpack.c.0.s8 %v755
      %v757 = vperm.slane %v751, %v756
      %v759 = vunpack.c.l.s4 1983009808
      %v760 = vunpack.c.0.s8 %v759
      %v761 = vperm.slane %v753, %v760
      %v762 = vrot.slane %v744, 4
      %v763 = vsel %vm750, %v762, %v732
      %v764 = vrot.slane %v732, 4
      %v765 = vsel %vm750, %v744, %v764
      %v767 = vunpack.c.l.s4 1983009808
      %v768 = vunpack.c.0.s8 %v767
      %v769 = vperm.slane %v763, %v768
      %v771 = vunpack.c.l.s4 1983009808
      %v772 = vunpack.c.0.s8 %v771
      %v773 = vperm.slane %v765, %v772
      %v774 = vrot.slane %v769, 4
      %v775 = vsel %vm750, %v774, %v757
      %v776 = vrot.slane %v757, 4
      %v777 = vsel %vm750, %v769, %v776
      %v779 = vunpack.c.l.s4 1934713408
      %v780 = vunpack.c.0.s8 %v779
      %v781 = vperm.slane %v775, %v780
      %v783 = vunpack.c.l.s4 1934713408
      %v784 = vunpack.c.0.s8 %v783
      %v785 = vperm.slane %v777, %v784
      %v786 = vrot.slane %v773, 4
      %v787 = vsel %vm750, %v786, %v761
      %v788 = vrot.slane %v761, 4
      %v789 = vsel %vm750, %v773, %v788
      %v791 = vunpack.c.l.s4 1934713408
      %v792 = vunpack.c.0.s8 %v791
      %v793 = vperm.slane %v787, %v792
      %v795 = vunpack.c.l.s4 1934713408
      %v796 = vunpack.c.0.s8 %v795
      %v797 = vperm.slane %v789, %v796
      %v798 = vrot.slane %v781, 4
      %v799 = vsel %vm750, 0.0, %v798
      %v800 = vrot.slane %v785, 4
      %v801 = vsel %vm750, 0.0, %v800
      %v802 = vrot.slane %v793, 4
      %v803 = vsel %vm750, 0.0, %v802
      %v804 = vrot.slane %v797, 4
      %v805 = vsel %vm750, 0.0, %v804
      %v806 = vrot.slane %v740, 4
      %v807 = vsel %vm750, %v806, %v684
      %v808 = vrot.slane %v684, 4
      %v809 = vsel %vm750, %v740, %v808
      %v811 = vunpack.c.l.s4 1983009808
      %v812 = vunpack.c.0.s8 %v811
      %v813 = vperm.slane %v807, %v812
      %v815 = vunpack.c.l.s4 1983009808
      %v816 = vunpack.c.0.s8 %v815
      %v817 = vperm.slane %v809, %v816
      %v818 = vrot.slane %v746, 4
      %v819 = vsel %vm750, %v818, %v734
      %v820 = vrot.slane %v734, 4
      %v821 = vsel %vm750, %v746, %v820
      %v823 = vunpack.c.l.s4 1983009808
      %v824 = vunpack.c.0.s8 %v823
      %v825 = vperm.slane %v819, %v824
      %v827 = vunpack.c.l.s4 1983009808
      %v828 = vunpack.c.0.s8 %v827
      %v829 = vperm.slane %v821, %v828
      %v830 = vrot.slane %v825, 4
      %v831 = vsel %vm750, %v830, %v813
      %v832 = vrot.slane %v813, 4
      %v833 = vsel %vm750, %v825, %v832
      %v835 = vunpack.c.l.s4 1934713408
      %v836 = vunpack.c.0.s8 %v835
      %v837 = vperm.slane %v831, %v836
      %v839 = vunpack.c.l.s4 1934713408
      %v840 = vunpack.c.0.s8 %v839
      %v841 = vperm.slane %v833, %v840
      %v842 = vrot.slane %v829, 4
      %v843 = vsel %vm750, %v842, %v817
      %v844 = vrot.slane %v817, 4
      %v845 = vsel %vm750, %v829, %v844
      %v847 = vunpack.c.l.s4 1934713408
      %v848 = vunpack.c.0.s8 %v847
      %v849 = vperm.slane %v843, %v848
      %v851 = vunpack.c.l.s4 1934713408
      %v852 = vunpack.c.0.s8 %v851
      %v853 = vperm.slane %v845, %v852
      %v854 = vrot.slane %v837, 4
      %v855 = vsel %vm750, 0.0, %v854
      %v856 = vrot.slane %v841, 4
      %v857 = vsel %vm750, 0.0, %v856
      %v858 = vrot.slane %v849, 4
      %v859 = vsel %vm750, 0.0, %v858
      %v860 = vrot.slane %v853, 4
      %v861 = vsel %vm750, 0.0, %v860
      %v862 = vsel %vm750, %v800, %v781
      %v864 = vunpack.c.l.s4 1983009808
      %v865 = vunpack.c.0.s8 %v864
      %v866 = vperm.slane %v862, %v865
      %v867 = vrot.slane %v801, 4
      %v868 = vsel %vm750, %v867, %v799
      %v870 = vunpack.c.l.s4 1983009808
      %v871 = vunpack.c.0.s8 %v870
      %v872 = vperm.slane %v868, %v871
      %v873 = vsel %vm750, %v804, %v793
      %v875 = vunpack.c.l.s4 1983009808
      %v876 = vunpack.c.0.s8 %v875
      %v877 = vperm.slane %v873, %v876
      %v878 = vrot.slane %v805, 4
      %v879 = vsel %vm750, %v878, %v803
      %v881 = vunpack.c.l.s4 1983009808
      %v882 = vunpack.c.0.s8 %v881
      %v883 = vperm.slane %v879, %v882
      %v884 = vrot.slane %v872, 4
      %v885 = vsel %vm750, %v884, %v866
      %v886 = vrot.slane %v866, 4
      %v887 = vsel %vm750, %v872, %v886
      %v889 = vunpack.c.l.s4 1934713408
      %v890 = vunpack.c.0.s8 %v889
      %v891 = vperm.slane %v885, %v890
      %v893 = vunpack.c.l.s4 1934713408
      %v894 = vunpack.c.0.s8 %v893
      %v895 = vperm.slane %v887, %v894
      %v896 = vrot.slane %v883, 4
      %v897 = vsel %vm750, %v896, %v877
      %v898 = vrot.slane %v877, 4
      %v899 = vsel %vm750, %v883, %v898
      %v901 = vunpack.c.l.s4 1934713408
      %v902 = vunpack.c.0.s8 %v901
      %v903 = vperm.slane %v897, %v902
      %v905 = vunpack.c.l.s4 1934713408
      %v906 = vunpack.c.0.s8 %v905
      %v907 = vperm.slane %v899, %v906
      %v908 = vrot.slane %v903, 4
      %v909 = vsel %vm750, %v908, %v891
      %v910 = vrot.slane %v891, 4
      %v911 = vsel %vm750, %v903, %v910
      %v912 = vrot.slane %v907, 4
      %v913 = vsel %vm750, %v912, %v895
      %v914 = vrot.slane %v895, 4
      %v915 = vsel %vm750, %v907, %v914
      %v916 = vsel %vm750, %v856, %v837
      %v918 = vunpack.c.l.s4 1983009808
      %v919 = vunpack.c.0.s8 %v918
      %v920 = vperm.slane %v916, %v919
      %v921 = vrot.slane %v857, 4
      %v922 = vsel %vm750, %v921, %v855
      %v924 = vunpack.c.l.s4 1983009808
      %v925 = vunpack.c.0.s8 %v924
      %v926 = vperm.slane %v922, %v925
      %v927 = vsel %vm750, %v860, %v849
      %v929 = vunpack.c.l.s4 1983009808
      %v930 = vunpack.c.0.s8 %v929
      %v931 = vperm.slane %v927, %v930
      %v932 = vrot.slane %v861, 4
      %v933 = vsel %vm750, %v932, %v859
      %v935 = vunpack.c.l.s4 1983009808
      %v936 = vunpack.c.0.s8 %v935
      %v937 = vperm.slane %v933, %v936
      %v938 = vrot.slane %v926, 4
      %v939 = vsel %vm750, %v938, %v920
      %v940 = vrot.slane %v920, 4
      %v941 = vsel %vm750, %v926, %v940
      %v943 = vunpack.c.l.s4 1934713408
      %v944 = vunpack.c.0.s8 %v943
      %v945 = vperm.slane %v939, %v944
      %v947 = vunpack.c.l.s4 1934713408
      %v948 = vunpack.c.0.s8 %v947
      %v949 = vperm.slane %v941, %v948
      %v950 = vrot.slane %v937, 4
      %v951 = vsel %vm750, %v950, %v931
      %v952 = vrot.slane %v931, 4
      %v953 = vsel %vm750, %v937, %v952
      %v955 = vunpack.c.l.s4 1934713408
      %v956 = vunpack.c.0.s8 %v955
      %v957 = vperm.slane %v951, %v956
      %v959 = vunpack.c.l.s4 1934713408
      %v960 = vunpack.c.0.s8 %v959
      %v961 = vperm.slane %v953, %v960
      %v962 = vrot.slane %v957, 4
      %v963 = vsel %vm750, %v962, %v945
      %v964 = vrot.slane %v945, 4
      %v965 = vsel %vm750, %v957, %v964
      %v966 = vrot.slane %v961, 4
      %v967 = vsel %vm750, %v966, %v949
      %v968 = vrot.slane %v949, 4
      %v969 = vsel %vm750, %v961, %v968
      %972 = vrot.lane.b32.xlu0 %v705, 120
      %v973 = vpop.permute.xlu0 %972
      %974 = vrot.lane.b32.xlu0 %v707, 120
      %v975 = vpop.permute.xlu0 %974
      %978 = vrot.lane.b32.xlu0 %v705, 112
      %v979 = vpop.permute.xlu0 %978
      %980 = vrot.lane.b32.xlu0 %v707, 112
      %v981 = vpop.permute.xlu0 %980
      %984 = vrot.lane.b32.xlu0 %v705, 104
      %v985 = vpop.permute.xlu0 %984
      %986 = vrot.lane.b32.xlu0 %v707, 104
      %v987 = vpop.permute.xlu0 %986
      %v990 = vrot.slane %v979, 4
      %v991 = vsel %vm750, %v990, %v705
      %v992 = vrot.slane %v705, 4
      %v993 = vsel %vm750, %v979, %v992
      %v995 = vunpack.c.l.s4 1983009808
      %v996 = vunpack.c.0.s8 %v995
      %v997 = vperm.slane %v991, %v996
      %v999 = vunpack.c.l.s4 1983009808
      %v1000 = vunpack.c.0.s8 %v999
      %v1001 = vperm.slane %v993, %v1000
      %v1002 = vrot.slane %v985, 4
      %v1003 = vsel %vm750, %v1002, %v973
      %v1004 = vrot.slane %v973, 4
      %v1005 = vsel %vm750, %v985, %v1004
      %v1007 = vunpack.c.l.s4 1983009808
      %v1008 = vunpack.c.0.s8 %v1007
      %v1009 = vperm.slane %v1003, %v1008
      %v1011 = vunpack.c.l.s4 1983009808
      %v1012 = vunpack.c.0.s8 %v1011
      %v1013 = vperm.slane %v1005, %v1012
      %v1014 = vrot.slane %v1009, 4
      %v1015 = vsel %vm750, %v1014, %v997
      %v1016 = vrot.slane %v997, 4
      %v1017 = vsel %vm750, %v1009, %v1016
      %v1019 = vunpack.c.l.s4 1934713408
      %v1020 = vunpack.c.0.s8 %v1019
      %v1021 = vperm.slane %v1015, %v1020
      %v1023 = vunpack.c.l.s4 1934713408
      %v1024 = vunpack.c.0.s8 %v1023
      %v1025 = vperm.slane %v1017, %v1024
      %v1026 = vrot.slane %v1013, 4
      %v1027 = vsel %vm750, %v1026, %v1001
      %v1028 = vrot.slane %v1001, 4
      %v1029 = vsel %vm750, %v1013, %v1028
      %v1031 = vunpack.c.l.s4 1934713408
      %v1032 = vunpack.c.0.s8 %v1031
      %v1033 = vperm.slane %v1027, %v1032
      %v1035 = vunpack.c.l.s4 1934713408
      %v1036 = vunpack.c.0.s8 %v1035
      %v1037 = vperm.slane %v1029, %v1036
      %v1038 = vrot.slane %v1021, 4
      %v1039 = vsel %vm750, 0.0, %v1038
      %v1040 = vrot.slane %v1025, 4
      %v1041 = vsel %vm750, 0.0, %v1040
      %v1042 = vrot.slane %v1033, 4
      %v1043 = vsel %vm750, 0.0, %v1042
      %v1044 = vrot.slane %v1037, 4
      %v1045 = vsel %vm750, 0.0, %v1044
      %v1046 = vrot.slane %v981, 4
      %v1047 = vsel %vm750, %v1046, %v707
      %v1048 = vrot.slane %v707, 4
      %v1049 = vsel %vm750, %v981, %v1048
      %v1051 = vunpack.c.l.s4 1983009808
      %v1052 = vunpack.c.0.s8 %v1051
      %v1053 = vperm.slane %v1047, %v1052
      %v1055 = vunpack.c.l.s4 1983009808
      %v1056 = vunpack.c.0.s8 %v1055
      %v1057 = vperm.slane %v1049, %v1056
      %v1058 = vrot.slane %v987, 4
      %v1059 = vsel %vm750, %v1058, %v975
      %v1060 = vrot.slane %v975, 4
      %v1061 = vsel %vm750, %v987, %v1060
      %v1063 = vunpack.c.l.s4 1983009808
      %v1064 = vunpack.c.0.s8 %v1063
      %v1065 = vperm.slane %v1059, %v1064
      %v1067 = vunpack.c.l.s4 1983009808
      %v1068 = vunpack.c.0.s8 %v1067
      %v1069 = vperm.slane %v1061, %v1068
      %v1070 = vrot.slane %v1065, 4
      %v1071 = vsel %vm750, %v1070, %v1053
      %v1072 = vrot.slane %v1053, 4
      %v1073 = vsel %vm750, %v1065, %v1072
      %v1075 = vunpack.c.l.s4 1934713408
      %v1076 = vunpack.c.0.s8 %v1075
      %v1077 = vperm.slane %v1071, %v1076
      %v1079 = vunpack.c.l.s4 1934713408
      %v1080 = vunpack.c.0.s8 %v1079
      %v1081 = vperm.slane %v1073, %v1080
      %v1082 = vrot.slane %v1069, 4
      %v1083 = vsel %vm750, %v1082, %v1057
      %v1084 = vrot.slane %v1057, 4
      %v1085 = vsel %vm750, %v1069, %v1084
      %v1087 = vunpack.c.l.s4 1934713408
      %v1088 = vunpack.c.0.s8 %v1087
      %v1089 = vperm.slane %v1083, %v1088
      %v1091 = vunpack.c.l.s4 1934713408
      %v1092 = vunpack.c.0.s8 %v1091
      %v1093 = vperm.slane %v1085, %v1092
      %v1094 = vrot.slane %v1077, 4
      %v1095 = vsel %vm750, 0.0, %v1094
      %v1096 = vrot.slane %v1081, 4
      %v1097 = vsel %vm750, 0.0, %v1096
      %v1098 = vrot.slane %v1089, 4
      %v1099 = vsel %vm750, 0.0, %v1098
      %v1100 = vrot.slane %v1093, 4
      %v1101 = vsel %vm750, 0.0, %v1100
      %v1102 = vsel %vm750, %v1040, %v1021
      %v1104 = vunpack.c.l.s4 1983009808
      %v1105 = vunpack.c.0.s8 %v1104
      %v1106 = vperm.slane %v1102, %v1105
      %v1107 = vrot.slane %v1041, 4
      %v1108 = vsel %vm750, %v1107, %v1039
      %v1110 = vunpack.c.l.s4 1983009808
      %v1111 = vunpack.c.0.s8 %v1110
      %v1112 = vperm.slane %v1108, %v1111
      %v1113 = vsel %vm750, %v1044, %v1033
      %v1115 = vunpack.c.l.s4 1983009808
      %v1116 = vunpack.c.0.s8 %v1115
      %v1117 = vperm.slane %v1113, %v1116
      %v1118 = vrot.slane %v1045, 4
      %v1119 = vsel %vm750, %v1118, %v1043
      %v1121 = vunpack.c.l.s4 1983009808
      %v1122 = vunpack.c.0.s8 %v1121
      %v1123 = vperm.slane %v1119, %v1122
      %v1124 = vrot.slane %v1112, 4
      %v1125 = vsel %vm750, %v1124, %v1106
      %v1126 = vrot.slane %v1106, 4
      %v1127 = vsel %vm750, %v1112, %v1126
      %v1129 = vunpack.c.l.s4 1934713408
      %v1130 = vunpack.c.0.s8 %v1129
      %v1131 = vperm.slane %v1125, %v1130
      %v1133 = vunpack.c.l.s4 1934713408
      %v1134 = vunpack.c.0.s8 %v1133
      %v1135 = vperm.slane %v1127, %v1134
      %v1136 = vrot.slane %v1123, 4
      %v1137 = vsel %vm750, %v1136, %v1117
      %v1138 = vrot.slane %v1117, 4
      %v1139 = vsel %vm750, %v1123, %v1138
      %v1141 = vunpack.c.l.s4 1934713408
      %v1142 = vunpack.c.0.s8 %v1141
      %v1143 = vperm.slane %v1137, %v1142
      %v1145 = vunpack.c.l.s4 1934713408
      %v1146 = vunpack.c.0.s8 %v1145
      %v1147 = vperm.slane %v1139, %v1146
      %v1148 = vrot.slane %v1143, 4
      %v1149 = vsel %vm750, %v1148, %v1131
      %v1150 = vrot.slane %v1131, 4
      %v1151 = vsel %vm750, %v1143, %v1150
      %v1152 = vrot.slane %v1147, 4
      %v1153 = vsel %vm750, %v1152, %v1135
      %v1154 = vrot.slane %v1135, 4
      %v1155 = vsel %vm750, %v1147, %v1154
      %v1156 = vsel %vm750, %v1096, %v1077
      %v1158 = vunpack.c.l.s4 1983009808
      %v1159 = vunpack.c.0.s8 %v1158
      %v1160 = vperm.slane %v1156, %v1159
      %v1161 = vrot.slane %v1097, 4
      %v1162 = vsel %vm750, %v1161, %v1095
      %v1164 = vunpack.c.l.s4 1983009808
      %v1165 = vunpack.c.0.s8 %v1164
      %v1166 = vperm.slane %v1162, %v1165
      %v1167 = vsel %vm750, %v1100, %v1089
      %v1169 = vunpack.c.l.s4 1983009808
      %v1170 = vunpack.c.0.s8 %v1169
      %v1171 = vperm.slane %v1167, %v1170
      %v1172 = vrot.slane %v1101, 4
      %v1173 = vsel %vm750, %v1172, %v1099
      %v1175 = vunpack.c.l.s4 1983009808
      %v1176 = vunpack.c.0.s8 %v1175
      %v1177 = vperm.slane %v1173, %v1176
      %v1178 = vrot.slane %v1166, 4
      %v1179 = vsel %vm750, %v1178, %v1160
      %v1180 = vrot.slane %v1160, 4
      %v1181 = vsel %vm750, %v1166, %v1180
      %v1183 = vunpack.c.l.s4 1934713408
      %v1184 = vunpack.c.0.s8 %v1183
      %v1185 = vperm.slane %v1179, %v1184
      %v1187 = vunpack.c.l.s4 1934713408
      %v1188 = vunpack.c.0.s8 %v1187
      %v1189 = vperm.slane %v1181, %v1188
      %v1190 = vrot.slane %v1177, 4
      %v1191 = vsel %vm750, %v1190, %v1171
      %v1192 = vrot.slane %v1171, 4
      %v1193 = vsel %vm750, %v1177, %v1192
      %v1195 = vunpack.c.l.s4 1934713408
      %v1196 = vunpack.c.0.s8 %v1195
      %v1197 = vperm.slane %v1191, %v1196
      %v1199 = vunpack.c.l.s4 1934713408
      %v1200 = vunpack.c.0.s8 %v1199
      %v1201 = vperm.slane %v1193, %v1200
      %v1202 = vrot.slane %v1197, 4
      %v1203 = vsel %vm750, %v1202, %v1185
      %v1204 = vrot.slane %v1185, 4
      %v1205 = vsel %vm750, %v1197, %v1204
      %v1206 = vrot.slane %v1201, 4
      %v1207 = vsel %vm750, %v1206, %v1189
      %v1208 = vrot.slane %v1189, 4
      %v1209 = vsel %vm750, %v1201, %v1208
      %1212 = vrot.lane.b32.xlu0 %v725, 120
      %v1213 = vpop.permute.xlu0 %1212
      %1214 = vrot.lane.b32.xlu0 %v727, 120
      %v1215 = vpop.permute.xlu0 %1214
      %1218 = vrot.lane.b32.xlu0 %v725, 112
      %v1219 = vpop.permute.xlu0 %1218
      %1220 = vrot.lane.b32.xlu0 %v727, 112
      %v1221 = vpop.permute.xlu0 %1220
      %1224 = vrot.lane.b32.xlu0 %v725, 104
      %v1225 = vpop.permute.xlu0 %1224
      %1226 = vrot.lane.b32.xlu0 %v727, 104
      %v1227 = vpop.permute.xlu0 %1226
      %v1230 = vrot.slane %v1219, 4
      %v1231 = vsel %vm750, %v1230, %v725
      %v1232 = vrot.slane %v725, 4
      %v1233 = vsel %vm750, %v1219, %v1232
      %v1235 = vunpack.c.l.s4 1983009808
      %v1236 = vunpack.c.0.s8 %v1235
      %v1237 = vperm.slane %v1231, %v1236
      %v1239 = vunpack.c.l.s4 1983009808
      %v1240 = vunpack.c.0.s8 %v1239
      %v1241 = vperm.slane %v1233, %v1240
      %v1242 = vrot.slane %v1225, 4
      %v1243 = vsel %vm750, %v1242, %v1213
      %v1244 = vrot.slane %v1213, 4
      %v1245 = vsel %vm750, %v1225, %v1244
      %v1247 = vunpack.c.l.s4 1983009808
      %v1248 = vunpack.c.0.s8 %v1247
      %v1249 = vperm.slane %v1243, %v1248
      %v1251 = vunpack.c.l.s4 1983009808
      %v1252 = vunpack.c.0.s8 %v1251
      %v1253 = vperm.slane %v1245, %v1252
      %v1254 = vrot.slane %v1249, 4
      %v1255 = vsel %vm750, %v1254, %v1237
      %v1256 = vrot.slane %v1237, 4
      %v1257 = vsel %vm750, %v1249, %v1256
      %v1259 = vunpack.c.l.s4 1934713408
      %v1260 = vunpack.c.0.s8 %v1259
      %v1261 = vperm.slane %v1255, %v1260
      %v1263 = vunpack.c.l.s4 1934713408
      %v1264 = vunpack.c.0.s8 %v1263
      %v1265 = vperm.slane %v1257, %v1264
      %v1266 = vrot.slane %v1253, 4
      %v1267 = vsel %vm750, %v1266, %v1241
      %v1268 = vrot.slane %v1241, 4
      %v1269 = vsel %vm750, %v1253, %v1268
      %v1271 = vunpack.c.l.s4 1934713408
      %v1272 = vunpack.c.0.s8 %v1271
      %v1273 = vperm.slane %v1267, %v1272
      %v1275 = vunpack.c.l.s4 1934713408
      %v1276 = vunpack.c.0.s8 %v1275
      %v1277 = vperm.slane %v1269, %v1276
      %v1278 = vrot.slane %v1261, 4
      %v1279 = vsel %vm750, 0.0, %v1278
      %v1280 = vrot.slane %v1265, 4
      %v1281 = vsel %vm750, 0.0, %v1280
      %v1282 = vrot.slane %v1273, 4
      %v1283 = vsel %vm750, 0.0, %v1282
      %v1284 = vrot.slane %v1277, 4
      %v1285 = vsel %vm750, 0.0, %v1284
      %v1286 = vrot.slane %v1221, 4
      %v1287 = vsel %vm750, %v1286, %v727
      %v1288 = vrot.slane %v727, 4
      %v1289 = vsel %vm750, %v1221, %v1288
      %v1291 = vunpack.c.l.s4 1983009808
      %v1292 = vunpack.c.0.s8 %v1291
      %v1293 = vperm.slane %v1287, %v1292
      %v1295 = vunpack.c.l.s4 1983009808
      %v1296 = vunpack.c.0.s8 %v1295
      %v1297 = vperm.slane %v1289, %v1296
      %v1298 = vrot.slane %v1227, 4
      %v1299 = vsel %vm750, %v1298, %v1215
      %v1300 = vrot.slane %v1215, 4
      %v1301 = vsel %vm750, %v1227, %v1300
      %v1303 = vunpack.c.l.s4 1983009808
      %v1304 = vunpack.c.0.s8 %v1303
      %v1305 = vperm.slane %v1299, %v1304
      %v1307 = vunpack.c.l.s4 1983009808
      %v1308 = vunpack.c.0.s8 %v1307
      %v1309 = vperm.slane %v1301, %v1308
      %v1310 = vrot.slane %v1305, 4
      %v1311 = vsel %vm750, %v1310, %v1293
      %v1312 = vrot.slane %v1293, 4
      %v1313 = vsel %vm750, %v1305, %v1312
      %v1315 = vunpack.c.l.s4 1934713408
      %v1316 = vunpack.c.0.s8 %v1315
      %v1317 = vperm.slane %v1311, %v1316
      %v1319 = vunpack.c.l.s4 1934713408
      %v1320 = vunpack.c.0.s8 %v1319
      %v1321 = vperm.slane %v1313, %v1320
      %v1322 = vrot.slane %v1309, 4
      %v1323 = vsel %vm750, %v1322, %v1297
      %v1324 = vrot.slane %v1297, 4
      %v1325 = vsel %vm750, %v1309, %v1324
      %v1327 = vunpack.c.l.s4 1934713408
      %v1328 = vunpack.c.0.s8 %v1327
      %v1329 = vperm.slane %v1323, %v1328
      %v1331 = vunpack.c.l.s4 1934713408
      %v1332 = vunpack.c.0.s8 %v1331
      %v1333 = vperm.slane %v1325, %v1332
      %v1334 = vrot.slane %v1317, 4
      %v1335 = vsel %vm750, 0.0, %v1334
      %v1336 = vrot.slane %v1321, 4
      %v1337 = vsel %vm750, 0.0, %v1336
      %v1338 = vrot.slane %v1329, 4
      %v1339 = vsel %vm750, 0.0, %v1338
      %v1340 = vrot.slane %v1333, 4
      %v1341 = vsel %vm750, 0.0, %v1340
      %v1342 = vsel %vm750, %v1280, %v1261
      %v1344 = vunpack.c.l.s4 1983009808
      %v1345 = vunpack.c.0.s8 %v1344
      %v1346 = vperm.slane %v1342, %v1345
      %v1347 = vrot.slane %v1281, 4
      %v1348 = vsel %vm750, %v1347, %v1279
      %v1350 = vunpack.c.l.s4 1983009808
      %v1351 = vunpack.c.0.s8 %v1350
      %v1352 = vperm.slane %v1348, %v1351
      %v1353 = vsel %vm750, %v1284, %v1273
      %v1355 = vunpack.c.l.s4 1983009808
      %v1356 = vunpack.c.0.s8 %v1355
      %v1357 = vperm.slane %v1353, %v1356
      %v1358 = vrot.slane %v1285, 4
      %v1359 = vsel %vm750, %v1358, %v1283
      %v1361 = vunpack.c.l.s4 1983009808
      %v1362 = vunpack.c.0.s8 %v1361
      %v1363 = vperm.slane %v1359, %v1362
      %v1364 = vrot.slane %v1352, 4
      %v1365 = vsel %vm750, %v1364, %v1346
      %v1366 = vrot.slane %v1346, 4
      %v1367 = vsel %vm750, %v1352, %v1366
      %v1369 = vunpack.c.l.s4 1934713408
      %v1370 = vunpack.c.0.s8 %v1369
      %v1371 = vperm.slane %v1365, %v1370
      %v1373 = vunpack.c.l.s4 1934713408
      %v1374 = vunpack.c.0.s8 %v1373
      %v1375 = vperm.slane %v1367, %v1374
      %v1376 = vrot.slane %v1363, 4
      %v1377 = vsel %vm750, %v1376, %v1357
      %v1378 = vrot.slane %v1357, 4
      %v1379 = vsel %vm750, %v1363, %v1378
      %v1381 = vunpack.c.l.s4 1934713408
      %v1382 = vunpack.c.0.s8 %v1381
      %v1383 = vperm.slane %v1377, %v1382
      %v1385 = vunpack.c.l.s4 1934713408
      %v1386 = vunpack.c.0.s8 %v1385
      %v1387 = vperm.slane %v1379, %v1386
      %v1388 = vrot.slane %v1383, 4
      %v1389 = vsel %vm750, %v1388, %v1371
      %v1390 = vrot.slane %v1371, 4
      %v1391 = vsel %vm750, %v1383, %v1390
      %v1392 = vrot.slane %v1387, 4
      %v1393 = vsel %vm750, %v1392, %v1375
      %v1394 = vrot.slane %v1375, 4
      %v1395 = vsel %vm750, %v1387, %v1394
      %v1396 = vsel %vm750, %v1336, %v1317
      %v1398 = vunpack.c.l.s4 1983009808
      %v1399 = vunpack.c.0.s8 %v1398
      %v1400 = vperm.slane %v1396, %v1399
      %v1401 = vrot.slane %v1337, 4
      %v1402 = vsel %vm750, %v1401, %v1335
      %v1404 = vunpack.c.l.s4 1983009808
      %v1405 = vunpack.c.0.s8 %v1404
      %v1406 = vperm.slane %v1402, %v1405
      %v1407 = vsel %vm750, %v1340, %v1329
      %v1409 = vunpack.c.l.s4 1983009808
      %v1410 = vunpack.c.0.s8 %v1409
      %v1411 = vperm.slane %v1407, %v1410
      %v1412 = vrot.slane %v1341, 4
      %v1413 = vsel %vm750, %v1412, %v1339
      %v1415 = vunpack.c.l.s4 1983009808
      %v1416 = vunpack.c.0.s8 %v1415
      %v1417 = vperm.slane %v1413, %v1416
      %v1418 = vrot.slane %v1406, 4
      %v1419 = vsel %vm750, %v1418, %v1400
      %v1420 = vrot.slane %v1400, 4
      %v1421 = vsel %vm750, %v1406, %v1420
      %v1423 = vunpack.c.l.s4 1934713408
      %v1424 = vunpack.c.0.s8 %v1423
      %v1425 = vperm.slane %v1419, %v1424
      %v1427 = vunpack.c.l.s4 1934713408
      %v1428 = vunpack.c.0.s8 %v1427
      %v1429 = vperm.slane %v1421, %v1428
      %v1430 = vrot.slane %v1417, 4
      %v1431 = vsel %vm750, %v1430, %v1411
      %v1432 = vrot.slane %v1411, 4
      %v1433 = vsel %vm750, %v1417, %v1432
      %v1435 = vunpack.c.l.s4 1934713408
      %v1436 = vunpack.c.0.s8 %v1435
      %v1437 = vperm.slane %v1431, %v1436
      %v1439 = vunpack.c.l.s4 1934713408
      %v1440 = vunpack.c.0.s8 %v1439
      %v1441 = vperm.slane %v1433, %v1440
      %v1442 = vrot.slane %v1437, 4
      %v1443 = vsel %vm750, %v1442, %v1425
      %v1444 = vrot.slane %v1425, 4
      %v1445 = vsel %vm750, %v1437, %v1444
      %v1446 = vrot.slane %v1441, 4
      %v1447 = vsel %vm750, %v1446, %v1429
      %v1448 = vrot.slane %v1429, 4
      %v1449 = vsel %vm750, %v1441, %v1448
      %v1450 = vpack.c.bf16 %v909, %v909
      %v1451 = vpack.c.bf16 %v911, %v911
      %v1452 = vpack.c.bf16 %v913, %v913
      %v1453 = vpack.c.bf16 %v915, %v915
      %v1454 = vpack.c.bf16 %v963, %v963
      %v1455 = vpack.c.bf16 %v965, %v965
      %v1456 = vpack.c.bf16 %v967, %v967
      %v1457 = vpack.c.bf16 %v969, %v969
      %v1458 = vpack.c.bf16 %v1149, %v1149
      %v1459 = vpack.c.bf16 %v1151, %v1151
      %v1460 = vpack.c.bf16 %v1153, %v1153
      %v1461 = vpack.c.bf16 %v1155, %v1155
      %v1462 = vpack.c.bf16 %v1203, %v1203
      %v1463 = vpack.c.bf16 %v1205, %v1205
      %v1464 = vpack.c.bf16 %v1207, %v1207
      %v1465 = vpack.c.bf16 %v1209, %v1209
      %vm1466 = vcmask 64512
      %v1468 = vsel %vm1466, %v1450, 0
      %v1471 = vsel %vm1466, %v1458, 0
      %1473 = vmatpush.bf16.xpose.msra.mxu0 0
      %1474 = vmatpush.bf16.xpose.msra.mxu0 0
      %1475 = vmatpush.bf16.xpose.msra.mxu0 0
      %1476 = vmatpush.bf16.xpose.msra.mxu0 0
      %1477 = vmatpush.bf16.xpose.msra.mxu0 0
      %1478 = vmatpush.bf16.xpose.msra.mxu0 0
      %1479 = vmatpush.bf16.xpose.msra.mxu0 0
      %1480 = vmatpush.bf16.xpose.msra.mxu0 %v1471
      %1481 = vmatmul.bf16.gmra.mxu0 %v1468
      %v1482 = vpop.f32.mrf.mxu0
      %v1483 = vadd.f32 0.0, %v1482
      %v1484 = vpop.f32.mrf.mxu0
      %1485 = vdwg.mxu0
      %v1487 = vsel %vm1466, %v1451, 0
      %v1490 = vsel %vm1466, %v1459, 0
      %1492 = vmatpush.bf16.xpose.msra.mxu0 0
      %1493 = vmatpush.bf16.xpose.msra.mxu0 0
      %1494 = vmatpush.bf16.xpose.msra.mxu0 0
      %1495 = vmatpush.bf16.xpose.msra.mxu0 0
      %1496 = vmatpush.bf16.xpose.msra.mxu0 0
      %1497 = vmatpush.bf16.xpose.msra.mxu0 0
      %1498 = vmatpush.bf16.xpose.msra.mxu0 0
      %1499 = vmatpush.bf16.xpose.msra.mxu0 %v1490
      %1500 = vmatmul.bf16.gmra.mxu0 %v1487
      %v1501 = vpop.f32.mrf.mxu0
      %v1502 = vadd.f32 0.0, %v1501
      %v1503 = vpop.f32.mrf.mxu0
      %1504 = vdwg.mxu0
      %v1506 = vsel %vm1466, %v1452, 0
      %v1509 = vsel %vm1466, %v1460, 0
      %1511 = vmatpush.bf16.xpose.msra.mxu0 0
      %1512 = vmatpush.bf16.xpose.msra.mxu0 0
      %1513 = vmatpush.bf16.xpose.msra.mxu0 0
      %1514 = vmatpush.bf16.xpose.msra.mxu0 0
      %1515 = vmatpush.bf16.xpose.msra.mxu0 0
      %1516 = vmatpush.bf16.xpose.msra.mxu0 0
      %1517 = vmatpush.bf16.xpose.msra.mxu0 0
      %1518 = vmatpush.bf16.xpose.msra.mxu0 %v1509
      %1519 = vmatmul.bf16.gmra.mxu0 %v1506
      %v1520 = vpop.f32.mrf.mxu0
      %v1521 = vadd.f32 0.0, %v1520
      %v1522 = vpop.f32.mrf.mxu0
      %1523 = vdwg.mxu0
      %v1525 = vsel %vm1466, %v1453, 0
      %v1528 = vsel %vm1466, %v1461, 0
      %1530 = vmatpush.bf16.xpose.msra.mxu0 0
      %1531 = vmatpush.bf16.xpose.msra.mxu0 0
      %1532 = vmatpush.bf16.xpose.msra.mxu0 0
      %1533 = vmatpush.bf16.xpose.msra.mxu0 0
      %1534 = vmatpush.bf16.xpose.msra.mxu0 0
      %1535 = vmatpush.bf16.xpose.msra.mxu0 0
      %1536 = vmatpush.bf16.xpose.msra.mxu0 0
      %1537 = vmatpush.bf16.xpose.msra.mxu0 %v1528
      %1538 = vmatmul.bf16.gmra.mxu0 %v1525
      %v1539 = vpop.f32.mrf.mxu0
      %v1540 = vadd.f32 0.0, %v1539
      %v1541 = vpop.f32.mrf.mxu0
      %1542 = vdwg.mxu0
      %v1544 = vsel %vm1466, %v1454, 0
      %v1547 = vsel %vm1466, %v1462, 0
      %1549 = vmatpush.bf16.xpose.msra.mxu0 0
      %1550 = vmatpush.bf16.xpose.msra.mxu0 0
      %1551 = vmatpush.bf16.xpose.msra.mxu0 0
      %1552 = vmatpush.bf16.xpose.msra.mxu0 0
      %1553 = vmatpush.bf16.xpose.msra.mxu0 0
      %1554 = vmatpush.bf16.xpose.msra.mxu0 0
      %1555 = vmatpush.bf16.xpose.msra.mxu0 0
      %1556 = vmatpush.bf16.xpose.msra.mxu0 %v1547
      %1557 = vmatmul.bf16.gmra.mxu0 %v1544
      %v1558 = vpop.f32.mrf.mxu0
      %v1559 = vadd.f32 0.0, %v1558
      %v1560 = vpop.f32.mrf.mxu0
      %1561 = vdwg.mxu0
      %v1563 = vsel %vm1466, %v1455, 0
      %v1566 = vsel %vm1466, %v1463, 0
      %1568 = vmatpush.bf16.xpose.msra.mxu0 0
      %1569 = vmatpush.bf16.xpose.msra.mxu0 0
      %1570 = vmatpush.bf16.xpose.msra.mxu0 0
      %1571 = vmatpush.bf16.xpose.msra.mxu0 0
      %1572 = vmatpush.bf16.xpose.msra.mxu0 0
      %1573 = vmatpush.bf16.xpose.msra.mxu0 0
      %1574 = vmatpush.bf16.xpose.msra.mxu0 0
      %1575 = vmatpush.bf16.xpose.msra.mxu0 %v1566
      %1576 = vmatmul.bf16.gmra.mxu0 %v1563
      %v1577 = vpop.f32.mrf.mxu0
      %v1578 = vadd.f32 0.0, %v1577
      %v1579 = vpop.f32.mrf.mxu0
      %1580 = vdwg.mxu0
      %v1582 = vsel %vm1466, %v1456, 0
      %v1585 = vsel %vm1466, %v1464, 0
      %1587 = vmatpush.bf16.xpose.msra.mxu0 0
      %1588 = vmatpush.bf16.xpose.msra.mxu0 0
      %1589 = vmatpush.bf16.xpose.msra.mxu0 0
      %1590 = vmatpush.bf16.xpose.msra.mxu0 0
      %1591 = vmatpush.bf16.xpose.msra.mxu0 0
      %1592 = vmatpush.bf16.xpose.msra.mxu0 0
      %1593 = vmatpush.bf16.xpose.msra.mxu0 0
      %1594 = vmatpush.bf16.xpose.msra.mxu0 %v1585
      %1595 = vmatmul.bf16.gmra.mxu0 %v1582
      %v1596 = vpop.f32.mrf.mxu0
      %v1597 = vadd.f32 0.0, %v1596
      %v1598 = vpop.f32.mrf.mxu0
      %1599 = vdwg.mxu0
      %v1601 = vsel %vm1466, %v1457, 0
      %v1604 = vsel %vm1466, %v1465, 0
      %1606 = vmatpush.bf16.xpose.msra.mxu0 0
      %1607 = vmatpush.bf16.xpose.msra.mxu0 0
      %1608 = vmatpush.bf16.xpose.msra.mxu0 0
      %1609 = vmatpush.bf16.xpose.msra.mxu0 0
      %1610 = vmatpush.bf16.xpose.msra.mxu0 0
      %1611 = vmatpush.bf16.xpose.msra.mxu0 0
      %1612 = vmatpush.bf16.xpose.msra.mxu0 0
      %1613 = vmatpush.bf16.xpose.msra.mxu0 %v1604
      %1614 = vmatmul.bf16.gmra.mxu0 %v1601
      %v1615 = vpop.f32.mrf.mxu0
      %v1616 = vadd.f32 0.0, %v1615
      %v1617 = vpop.f32.mrf.mxu0
      %1618 = vdwg.mxu0
      %v1619 = vadd.f32 %v1483, %v593
      %v1620 = vadd.f32 %v1502, %v593
      %v1621 = vadd.f32 %v1521, %v593
      %v1622 = vadd.f32 %v1540, %v593
      %v1623 = vadd.f32 %v1559, %v594
      %v1624 = vadd.f32 %v1578, %v594
      %v1625 = vadd.f32 %v1597, %v594
      %v1626 = vadd.f32 %v1616, %v594
      %v1627 = vsel %vm1466, %v1619, -inf
      %1628 = vmax.xlane.f32.xlu0 %v1627
      %v1629 = vpop.xlane.xlu0 %1628
      %v1630 = vsel %vm1466, %v1620, -inf
      %1631 = vmax.xlane.f32.xlu0 %v1630
      %v1632 = vpop.xlane.xlu0 %1631
      %v1633 = vsel %vm1466, %v1621, -inf
      %1634 = vmax.xlane.f32.xlu0 %v1633
      %v1635 = vpop.xlane.xlu0 %1634
      %v1636 = vsel %vm1466, %v1622, -inf
      %1637 = vmax.xlane.f32.xlu0 %v1636
      %v1638 = vpop.xlane.xlu0 %1637
      %v1639 = vsel %vm1466, %v1623, -inf
      %1640 = vmax.xlane.f32.xlu0 %v1639
      %v1641 = vpop.xlane.xlu0 %1640
      %v1642 = vsel %vm1466, %v1624, -inf
      %1643 = vmax.xlane.f32.xlu0 %v1642
      %v1644 = vpop.xlane.xlu0 %1643
      %v1645 = vsel %vm1466, %v1625, -inf
      %1646 = vmax.xlane.f32.xlu0 %v1645
      %v1647 = vpop.xlane.xlu0 %1646
      %v1648 = vsel %vm1466, %v1626, -inf
      %1649 = vmax.xlane.f32.xlu0 %v1648
      %v1650 = vpop.xlane.xlu0 %1649
      %v1651 = vsub.f32 %v1619, %v1629
      %v1652 = vsub.f32 %v1620, %v1632
      %v1653 = vsub.f32 %v1621, %v1635
      %v1654 = vsub.f32 %v1622, %v1638
      %v1655 = vsub.f32 %v1623, %v1641
      %v1656 = vsub.f32 %v1624, %v1644
      %v1657 = vsub.f32 %v1625, %v1647
      %v1658 = vsub.f32 %v1626, %v1650
      %v1659 = vmul.f32 %v1651, 1.442695
      %v1660 = vpow.pop %v1659
      %v1661 = vmul.f32 %v1652, 1.442695
      %v1662 = vpow.pop %v1661
      %v1663 = vmul.f32 %v1653, 1.442695
      %v1664 = vpow.pop %v1663
      %v1665 = vmul.f32 %v1654, 1.442695
      %v1666 = vpow.pop %v1665
      %v1667 = vmul.f32 %v1655, 1.442695
      %v1668 = vpow.pop %v1667
      %v1669 = vmul.f32 %v1656, 1.442695
      %v1670 = vpow.pop %v1669
      %v1671 = vmul.f32 %v1657, 1.442695
      %v1672 = vpow.pop %v1671
      %v1673 = vmul.f32 %v1658, 1.442695
      %v1674 = vpow.pop %v1673
      %v1675 = vsel %vm1466, %v1660, 0.0
      %1676 = vadd.xlane.f32.xlu0 %v1675
      %v1677 = vpop.xlane.xlu0 %1676
      %v1678 = vsel %vm1466, %v1662, 0.0
      %1679 = vadd.xlane.f32.xlu0 %v1678
      %v1680 = vpop.xlane.xlu0 %1679
      %v1681 = vsel %vm1466, %v1664, 0.0
      %1682 = vadd.xlane.f32.xlu0 %v1681
      %v1683 = vpop.xlane.xlu0 %1682
      %v1684 = vsel %vm1466, %v1666, 0.0
      %1685 = vadd.xlane.f32.xlu0 %v1684
      %v1686 = vpop.xlane.xlu0 %1685
      %v1687 = vsel %vm1466, %v1668, 0.0
      %1688 = vadd.xlane.f32.xlu0 %v1687
      %v1689 = vpop.xlane.xlu0 %1688
      %v1690 = vsel %vm1466, %v1670, 0.0
      %1691 = vadd.xlane.f32.xlu0 %v1690
      %v1692 = vpop.xlane.xlu0 %1691
      %v1693 = vsel %vm1466, %v1672, 0.0
      %1694 = vadd.xlane.f32.xlu0 %v1693
      %v1695 = vpop.xlane.xlu0 %1694
      %v1696 = vsel %vm1466, %v1674, 0.0
      %1697 = vadd.xlane.f32.xlu0 %v1696
      %v1698 = vpop.xlane.xlu0 %1697
      %v1699 = vrcp.pop %v1677
      %v1700 = vrcp.pop %v1680
      %v1701 = vrcp.pop %v1683
      %v1702 = vrcp.pop %v1686
      %v1703 = vrcp.pop %v1689
      %v1704 = vrcp.pop %v1692
      %v1705 = vrcp.pop %v1695
      %v1706 = vrcp.pop %v1698
      %v1707 = vmul.f32 %v1660, %v1699
      %v1708 = vmul.f32 %v1662, %v1700
      %v1709 = vmul.f32 %v1664, %v1701
      %v1710 = vmul.f32 %v1666, %v1702
      %v1711 = vmul.f32 %v1668, %v1703
      %v1712 = vmul.f32 %v1670, %v1704
      %v1713 = vmul.f32 %v1672, %v1705
      %v1714 = vmul.f32 %v1674, %v1706
      %v1715 = vpack.c.bf16 %v1707, %v1707
      %v1716 = vpack.c.bf16 %v1708, %v1708
      %v1717 = vpack.c.bf16 %v1709, %v1709
      %v1718 = vpack.c.bf16 %v1710, %v1710
      %v1719 = vpack.c.bf16 %v1711, %v1711
      %v1720 = vpack.c.bf16 %v1712, %v1712
      %v1721 = vpack.c.bf16 %v1713, %v1713
      %v1722 = vpack.c.bf16 %v1714, %v1714
      %v1723 = vpack.c.bf16 %v1389, %v1389
      %v1724 = vpack.c.bf16 %v1391, %v1391
      %v1725 = vpack.c.bf16 %v1393, %v1393
      %v1726 = vpack.c.bf16 %v1395, %v1395
      %v1727 = vpack.c.bf16 %v1443, %v1443
      %v1728 = vpack.c.bf16 %v1445, %v1445
      %v1729 = vpack.c.bf16 %v1447, %v1447
      %v1730 = vpack.c.bf16 %v1449, %v1449
      %v1732 = vsel %vm1466, %v1715, 0
      %vm1734 = vcmask 1043456
      %v1736 = vsel %vm1734, %v1723, 0
      %1738 = vmatpush.bf16.msra.mxu0 0
      %1739 = vmatpush.bf16.msra.mxu0 0
      %1740 = vmatpush.bf16.msra.mxu0 0
      %1741 = vmatpush.bf16.msra.mxu0 0
      %1742 = vmatpush.bf16.msra.mxu0 0
      %1743 = vmatpush.bf16.msra.mxu0 0
      %1744 = vmatpush.bf16.msra.mxu0 0
      %1745 = vmatpush.bf16.msra.mxu0 %v1736
      %1746 = vmatmul.bf16.gmra.mxu0 %v1732
      %v1747 = vpop.f32.mrf.mxu0
      %v1748 = vadd.f32 0.0, %v1747
      %v1749 = vpop.f32.mrf.mxu0
      %1750 = vdwg.mxu0
      %v1752 = vsel %vm1466, %v1716, 0
      %v1755 = vsel %vm1734, %v1724, 0
      %1757 = vmatpush.bf16.msra.mxu0 0
      %1758 = vmatpush.bf16.msra.mxu0 0
      %1759 = vmatpush.bf16.msra.mxu0 0
      %1760 = vmatpush.bf16.msra.mxu0 0
      %1761 = vmatpush.bf16.msra.mxu0 0
      %1762 = vmatpush.bf16.msra.mxu0 0
      %1763 = vmatpush.bf16.msra.mxu0 0
      %1764 = vmatpush.bf16.msra.mxu0 %v1755
      %1765 = vmatmul.bf16.gmra.mxu0 %v1752
      %v1766 = vpop.f32.mrf.mxu0
      %v1767 = vadd.f32 0.0, %v1766
      %v1768 = vpop.f32.mrf.mxu0
      %1769 = vdwg.mxu0
      %v1771 = vsel %vm1466, %v1717, 0
      %v1774 = vsel %vm1734, %v1725, 0
      %1776 = vmatpush.bf16.msra.mxu0 0
      %1777 = vmatpush.bf16.msra.mxu0 0
      %1778 = vmatpush.bf16.msra.mxu0 0
      %1779 = vmatpush.bf16.msra.mxu0 0
      %1780 = vmatpush.bf16.msra.mxu0 0
      %1781 = vmatpush.bf16.msra.mxu0 0
      %1782 = vmatpush.bf16.msra.mxu0 0
      %1783 = vmatpush.bf16.msra.mxu0 %v1774
      %1784 = vmatmul.bf16.gmra.mxu0 %v1771
      %v1785 = vpop.f32.mrf.mxu0
      %v1786 = vadd.f32 0.0, %v1785
      %v1787 = vpop.f32.mrf.mxu0
      %1788 = vdwg.mxu0
      %v1790 = vsel %vm1466, %v1718, 0
      %v1793 = vsel %vm1734, %v1726, 0
      %1795 = vmatpush.bf16.msra.mxu0 0
      %1796 = vmatpush.bf16.msra.mxu0 0
      %1797 = vmatpush.bf16.msra.mxu0 0
      %1798 = vmatpush.bf16.msra.mxu0 0
      %1799 = vmatpush.bf16.msra.mxu0 0
      %1800 = vmatpush.bf16.msra.mxu0 0
      %1801 = vmatpush.bf16.msra.mxu0 0
      %1802 = vmatpush.bf16.msra.mxu0 %v1793
      %1803 = vmatmul.bf16.gmra.mxu0 %v1790
      %v1804 = vpop.f32.mrf.mxu0
      %v1805 = vadd.f32 0.0, %v1804
      %v1806 = vpop.f32.mrf.mxu0
      %1807 = vdwg.mxu0
      %v1809 = vsel %vm1466, %v1719, 0
      %v1812 = vsel %vm1734, %v1727, 0
      %1814 = vmatpush.bf16.msra.mxu0 0
      %1815 = vmatpush.bf16.msra.mxu0 0
      %1816 = vmatpush.bf16.msra.mxu0 0
      %1817 = vmatpush.bf16.msra.mxu0 0
      %1818 = vmatpush.bf16.msra.mxu0 0
      %1819 = vmatpush.bf16.msra.mxu0 0
      %1820 = vmatpush.bf16.msra.mxu0 0
      %1821 = vmatpush.bf16.msra.mxu0 %v1812
      %1822 = vmatmul.bf16.gmra.mxu0 %v1809
      %v1823 = vpop.f32.mrf.mxu0
      %v1824 = vadd.f32 0.0, %v1823
      %v1825 = vpop.f32.mrf.mxu0
      %1826 = vdwg.mxu0
      %v1828 = vsel %vm1466, %v1720, 0
      %v1831 = vsel %vm1734, %v1728, 0
      %1833 = vmatpush.bf16.msra.mxu0 0
      %1834 = vmatpush.bf16.msra.mxu0 0
      %1835 = vmatpush.bf16.msra.mxu0 0
      %1836 = vmatpush.bf16.msra.mxu0 0
      %1837 = vmatpush.bf16.msra.mxu0 0
      %1838 = vmatpush.bf16.msra.mxu0 0
      %1839 = vmatpush.bf16.msra.mxu0 0
      %1840 = vmatpush.bf16.msra.mxu0 %v1831
      %1841 = vmatmul.bf16.gmra.mxu0 %v1828
      %v1842 = vpop.f32.mrf.mxu0
      %v1843 = vadd.f32 0.0, %v1842
      %v1844 = vpop.f32.mrf.mxu0
      %1845 = vdwg.mxu0
      %v1847 = vsel %vm1466, %v1721, 0
      %v1850 = vsel %vm1734, %v1729, 0
      %1852 = vmatpush.bf16.msra.mxu0 0
      %1853 = vmatpush.bf16.msra.mxu0 0
      %1854 = vmatpush.bf16.msra.mxu0 0
      %1855 = vmatpush.bf16.msra.mxu0 0
      %1856 = vmatpush.bf16.msra.mxu0 0
      %1857 = vmatpush.bf16.msra.mxu0 0
      %1858 = vmatpush.bf16.msra.mxu0 0
      %1859 = vmatpush.bf16.msra.mxu0 %v1850
      %1860 = vmatmul.bf16.gmra.mxu0 %v1847
      %v1861 = vpop.f32.mrf.mxu0
      %v1862 = vadd.f32 0.0, %v1861
      %v1863 = vpop.f32.mrf.mxu0
      %1864 = vdwg.mxu0
      %v1866 = vsel %vm1466, %v1722, 0
      %v1869 = vsel %vm1734, %v1730, 0
      %1871 = vmatpush.bf16.msra.mxu0 0
      %1872 = vmatpush.bf16.msra.mxu0 0
      %1873 = vmatpush.bf16.msra.mxu0 0
      %1874 = vmatpush.bf16.msra.mxu0 0
      %1875 = vmatpush.bf16.msra.mxu0 0
      %1876 = vmatpush.bf16.msra.mxu0 0
      %1877 = vmatpush.bf16.msra.mxu0 0
      %1878 = vmatpush.bf16.msra.mxu0 %v1869
      %1879 = vmatmul.bf16.gmra.mxu0 %v1866
      %v1880 = vpop.f32.mrf.mxu0
      %v1881 = vadd.f32 0.0, %v1880
      %v1882 = vpop.f32.mrf.mxu0
      %1883 = vdwg.mxu0
      %v1884 = vrot.slane %v1786, 4
      %v1885 = vsel %vm750, %v1884, %v1748
      %v1886 = vrot.slane %v1748, 4
      %v1887 = vsel %vm750, %v1786, %v1886
      %v1889 = vunpack.c.l.s4 1983009808
      %v1890 = vunpack.c.0.s8 %v1889
      %v1891 = vperm.slane %v1885, %v1890
      %v1893 = vunpack.c.l.s4 1983009808
      %v1894 = vunpack.c.0.s8 %v1893
      %v1895 = vperm.slane %v1887, %v1894
      %v1896 = vrot.slane %v1805, 4
      %v1897 = vsel %vm750, %v1896, %v1767
      %v1898 = vrot.slane %v1767, 4
      %v1899 = vsel %vm750, %v1805, %v1898
      %v1901 = vunpack.c.l.s4 1983009808
      %v1902 = vunpack.c.0.s8 %v1901
      %v1903 = vperm.slane %v1897, %v1902
      %v1905 = vunpack.c.l.s4 1983009808
      %v1906 = vunpack.c.0.s8 %v1905
      %v1907 = vperm.slane %v1899, %v1906
      %v1908 = vrot.slane %v1903, 4
      %v1909 = vsel %vm750, %v1908, %v1891
      %v1910 = vrot.slane %v1891, 4
      %v1911 = vsel %vm750, %v1903, %v1910
      %v1913 = vunpack.c.l.s4 1934713408
      %v1914 = vunpack.c.0.s8 %v1913
      %v1915 = vperm.slane %v1909, %v1914
      %v1917 = vunpack.c.l.s4 1934713408
      %v1918 = vunpack.c.0.s8 %v1917
      %v1919 = vperm.slane %v1911, %v1918
      %v1920 = vrot.slane %v1907, 4
      %v1921 = vsel %vm750, %v1920, %v1895
      %v1922 = vrot.slane %v1895, 4
      %v1923 = vsel %vm750, %v1907, %v1922
      %v1925 = vunpack.c.l.s4 1934713408
      %v1926 = vunpack.c.0.s8 %v1925
      %v1927 = vperm.slane %v1921, %v1926
      %v1929 = vunpack.c.l.s4 1934713408
      %v1930 = vunpack.c.0.s8 %v1929
      %v1931 = vperm.slane %v1923, %v1930
      %v1932 = vrot.slane %v1915, 4
      %v1933 = vsel %vm750, 0.0, %v1932
      %v1934 = vrot.slane %v1919, 4
      %v1935 = vsel %vm750, 0.0, %v1934
      %v1936 = vrot.slane %v1927, 4
      %v1937 = vsel %vm750, 0.0, %v1936
      %v1938 = vrot.slane %v1931, 4
      %v1939 = vsel %vm750, 0.0, %v1938
      %v1940 = vrot.slane %v1862, 4
      %v1941 = vsel %vm750, %v1940, %v1824
      %v1942 = vrot.slane %v1824, 4
      %v1943 = vsel %vm750, %v1862, %v1942
      %v1945 = vunpack.c.l.s4 1983009808
      %v1946 = vunpack.c.0.s8 %v1945
      %v1947 = vperm.slane %v1941, %v1946
      %v1949 = vunpack.c.l.s4 1983009808
      %v1950 = vunpack.c.0.s8 %v1949
      %v1951 = vperm.slane %v1943, %v1950
      %v1952 = vrot.slane %v1881, 4
      %v1953 = vsel %vm750, %v1952, %v1843
      %v1954 = vrot.slane %v1843, 4
      %v1955 = vsel %vm750, %v1881, %v1954
      %v1957 = vunpack.c.l.s4 1983009808
      %v1958 = vunpack.c.0.s8 %v1957
      %v1959 = vperm.slane %v1953, %v1958
      %v1961 = vunpack.c.l.s4 1983009808
      %v1962 = vunpack.c.0.s8 %v1961
      %v1963 = vperm.slane %v1955, %v1962
      %v1964 = vrot.slane %v1959, 4
      %v1965 = vsel %vm750, %v1964, %v1947
      %v1966 = vrot.slane %v1947, 4
      %v1967 = vsel %vm750, %v1959, %v1966
      %v1969 = vunpack.c.l.s4 1934713408
      %v1970 = vunpack.c.0.s8 %v1969
      %v1971 = vperm.slane %v1965, %v1970
      %v1973 = vunpack.c.l.s4 1934713408
      %v1974 = vunpack.c.0.s8 %v1973
      %v1975 = vperm.slane %v1967, %v1974
      %v1976 = vrot.slane %v1963, 4
      %v1977 = vsel %vm750, %v1976, %v1951
      %v1978 = vrot.slane %v1951, 4
      %v1979 = vsel %vm750, %v1963, %v1978
      %v1981 = vunpack.c.l.s4 1934713408
      %v1982 = vunpack.c.0.s8 %v1981
      %v1983 = vperm.slane %v1977, %v1982
      %v1985 = vunpack.c.l.s4 1934713408
      %v1986 = vunpack.c.0.s8 %v1985
      %v1987 = vperm.slane %v1979, %v1986
      %v1988 = vrot.slane %v1971, 4
      %v1989 = vsel %vm750, 0.0, %v1988
      %v1990 = vrot.slane %v1975, 4
      %v1991 = vsel %vm750, 0.0, %v1990
      %v1992 = vrot.slane %v1983, 4
      %v1993 = vsel %vm750, 0.0, %v1992
      %v1994 = vrot.slane %v1987, 4
      %v1995 = vsel %vm750, 0.0, %v1994
      %v1996 = vsel %vm750, %v1934, %v1915
      %v1998 = vunpack.c.l.s4 1983009808
      %v1999 = vunpack.c.0.s8 %v1998
      %v2000 = vperm.slane %v1996, %v1999
      %v2001 = vrot.slane %v1935, 4
      %v2002 = vsel %vm750, %v2001, %v1933
      %v2004 = vunpack.c.l.s4 1983009808
      %v2005 = vunpack.c.0.s8 %v2004
      %v2006 = vperm.slane %v2002, %v2005
      %v2007 = vsel %vm750, %v1938, %v1927
      %v2009 = vunpack.c.l.s4 1983009808
      %v2010 = vunpack.c.0.s8 %v2009
      %v2011 = vperm.slane %v2007, %v2010
      %v2012 = vrot.slane %v1939, 4
      %v2013 = vsel %vm750, %v2012, %v1937
      %v2015 = vunpack.c.l.s4 1983009808
      %v2016 = vunpack.c.0.s8 %v2015
      %v2017 = vperm.slane %v2013, %v2016
      %v2018 = vrot.slane %v2006, 4
      %v2019 = vsel %vm750, %v2018, %v2000
      %v2020 = vrot.slane %v2000, 4
      %v2021 = vsel %vm750, %v2006, %v2020
      %v2023 = vunpack.c.l.s4 1934713408
      %v2024 = vunpack.c.0.s8 %v2023
      %v2025 = vperm.slane %v2019, %v2024
      %v2027 = vunpack.c.l.s4 1934713408
      %v2028 = vunpack.c.0.s8 %v2027
      %v2029 = vperm.slane %v2021, %v2028
      %v2030 = vrot.slane %v2017, 4
      %v2031 = vsel %vm750, %v2030, %v2011
      %v2032 = vrot.slane %v2011, 4
      %v2033 = vsel %vm750, %v2017, %v2032
      %v2035 = vunpack.c.l.s4 1934713408
      %v2036 = vunpack.c.0.s8 %v2035
      %v2037 = vperm.slane %v2031, %v2036
      %v2039 = vunpack.c.l.s4 1934713408
      %v2040 = vunpack.c.0.s8 %v2039
      %v2041 = vperm.slane %v2033, %v2040
      %v2042 = vrot.slane %v2037, 4
      %v2043 = vsel %vm750, %v2042, %v2025
      %v2044 = vrot.slane %v2025, 4
      %v2045 = vsel %vm750, %v2037, %v2044
      %v2046 = vrot.slane %v2041, 4
      %v2047 = vsel %vm750, %v2046, %v2029
      %v2048 = vrot.slane %v2029, 4
      %v2049 = vsel %vm750, %v2041, %v2048
      %v2050 = vsel %vm750, %v1990, %v1971
      %v2052 = vunpack.c.l.s4 1983009808
      %v2053 = vunpack.c.0.s8 %v2052
      %v2054 = vperm.slane %v2050, %v2053
      %v2055 = vrot.slane %v1991, 4
      %v2056 = vsel %vm750, %v2055, %v1989
      %v2058 = vunpack.c.l.s4 1983009808
      %v2059 = vunpack.c.0.s8 %v2058
      %v2060 = vperm.slane %v2056, %v2059
      %v2061 = vsel %vm750, %v1994, %v1983
      %v2063 = vunpack.c.l.s4 1983009808
      %v2064 = vunpack.c.0.s8 %v2063
      %v2065 = vperm.slane %v2061, %v2064
      %v2066 = vrot.slane %v1995, 4
      %v2067 = vsel %vm750, %v2066, %v1993
      %v2069 = vunpack.c.l.s4 1983009808
      %v2070 = vunpack.c.0.s8 %v2069
      %v2071 = vperm.slane %v2067, %v2070
      %v2072 = vrot.slane %v2060, 4
      %v2073 = vsel %vm750, %v2072, %v2054
      %v2074 = vrot.slane %v2054, 4
      %v2075 = vsel %vm750, %v2060, %v2074
      %v2077 = vunpack.c.l.s4 1934713408
      %v2078 = vunpack.c.0.s8 %v2077
      %v2079 = vperm.slane %v2073, %v2078
      %v2081 = vunpack.c.l.s4 1934713408
      %v2082 = vunpack.c.0.s8 %v2081
      %v2083 = vperm.slane %v2075, %v2082
      %v2084 = vrot.slane %v2071, 4
      %v2085 = vsel %vm750, %v2084, %v2065
      %v2086 = vrot.slane %v2065, 4
      %v2087 = vsel %vm750, %v2071, %v2086
      %v2089 = vunpack.c.l.s4 1934713408
      %v2090 = vunpack.c.0.s8 %v2089
      %v2091 = vperm.slane %v2085, %v2090
      %v2093 = vunpack.c.l.s4 1934713408
      %v2094 = vunpack.c.0.s8 %v2093
      %v2095 = vperm.slane %v2087, %v2094
      %v2096 = vrot.slane %v2091, 4
      %v2097 = vsel %vm750, %v2096, %v2079
      %v2098 = vrot.slane %v2079, 4
      %v2099 = vsel %vm750, %v2091, %v2098
      %v2100 = vrot.slane %v2095, 4
      %v2101 = vsel %vm750, %v2100, %v2083
      %v2102 = vrot.slane %v2083, 4
      %v2103 = vsel %vm750, %v2095, %v2102
      %2106 = vrot.lane.b32.xlu0 %v2045, 8
      %v2107 = vpop.permute.xlu0 %2106
      %2108 = vrot.lane.b32.xlu0 %v2099, 8
      %v2109 = vpop.permute.xlu0 %2108
      %2114 = vrot.lane.b32.xlu0 %v2047, 16
      %v2115 = vpop.permute.xlu0 %2114
      %2116 = vrot.lane.b32.xlu0 %v2101, 16
      %v2117 = vpop.permute.xlu0 %2116
      %2122 = vrot.lane.b32.xlu0 %v2049, 24
      %v2123 = vpop.permute.xlu0 %2122
      %2124 = vrot.lane.b32.xlu0 %v2103, 24
      %v2125 = vpop.permute.xlu0 %2124
      %v2128 = vsel %vm1466, %v2043, %v2107
      %v2129 = vsel %vm1466, %v2097, %v2109
      %vm2130 = vcmask 130048
      %v2131 = vsel %vm2130, %v2128, %v2115
      %v2132 = vsel %vm2130, %v2129, %v2117
      %vm2133 = vcmask 195584
      %v2134 = vsel %vm2133, %v2131, %v2123
      %v2135 = vsel %vm2133, %v2132, %v2125
      %v2136 = vld [vmem:[%s566] sm:$0xff]
      %v2137 = vld [vmem:[%s566 + $0x8] sm:$0xff]
      %v2138 = vld [vmem:[%s566 + $0x10] sm:$0xff]
      %v2139 = vld [vmem:[%s566 + $0x18] sm:$0xff]
      %v2140 = vpack.c.bf16 %v2135, %v2134
      %v2141 = vpack.c.bf16 %v2137, %v2136
      %v2142 = vpack.c.bf16 %v2139, %v2138
      %v2143 = vld [vmem:[%s569] sm:$0x1]
      %v2145 = vperm.slane %v2143, 0
      %v2148 = vsel %vm597, %v2140, 0
      %2150 = vmatpush.bf16.msra.mxu0 0
      %2151 = vmatpush.bf16.msra.mxu0 0
      %2152 = vmatpush.bf16.msra.mxu0 0
      %2153 = vmatpush.bf16.msra.mxu0 0
      %2154 = vmatpush.bf16.msra.mxu0 0
      %2155 = vmatpush.bf16.msra.mxu0 0
      %2156 = vmatpush.bf16.msra.mxu0 %v2142
      %2157 = vmatpush.bf16.msra.mxu0 %v2141
      %2158 = vmatmul.bf16.gmra.mxu0 %v2148
      %v2159 = vpop.f32.mrf.mxu0
      %v2160 = vadd.f32 %v2145, %v2159
      %v2161 = vpop.f32.mrf.mxu0
      %v2162 = vadd.f32 %v2145, %v2161
      %2163 = vdwg.mxu0
      %v2164 = vadd.f32 %v2160, %v587
      %v2165 = vadd.f32 %v2162, %v588
      %2166 = vst.msk [vmem:[%s584] sm:$0xff] %vm597, %v2164
      %2167 = vst.msk [vmem:[%s584 + $0x8] sm:$0xff] %vm597, %v2165
      %s2168 = smul.u32 2, %s26
      %p2169 = scmp.lt.s32.totalorder %s25, 1
      %s2170 = scalar_select %p2169, %s25, 1
      %p2171 = scmp.lt.s32.totalorder %s2168, 1
      %s2172 = scalar_select %p2171, %s2168, 1
      %s2173 = smul.addr %s2170, 2
      %s2174 = sadd.s32 %s2172, %s2173
      %s2175 = smul.addr %s2174, 8
      %s2176 = scalar_lea.vmem %s10, %s2175
      // Predicated region
      $region61: #{mod_enc_layer.3} parent=59 // pred_check
        %p2177 = pneg %p319
      $region62: #{mod_enc_layer.3} parent=59 // pred_check_branch
        %2179 = sbr.rel (%p2177) target = $region64
      $region63: #{mod_enc_layer.3} parent=59 // pred_region
        %s2180 = smul.u32 2, %s26
      $region64: #{mod_enc_layer.3} parent=59 // pred_fallthru
        _
    $region60: #{mod_enc_layer.3} parent=5 // pred_fallthru
      _
    %p2181 = scmp.le.s32.totalorder 2, %s16
    // Predicated region
    $region65: #{mod_enc_layer.3} parent=5 // pred_check
      %p2182 = pneg %p2181
    $region66: #{mod_enc_layer.3} parent=5 // pred_check_branch
      %2184 = sbr.rel (%p2182) target = $region68
    $region67: #{mod_enc_layer.3} parent=5 // pred_region
      %s2185 = ssub.s32 %s16, 2
      // Predicated region
      $region69: #{mod_enc_layer.3} parent=67 // pred_check
        %p2186 = pneg %p325
      $region70: #{mod_enc_layer.3} parent=67 // pred_check_branch
        %2188 = sbr.rel (%p2186) target = $region72
      $region71: #{mod_enc_layer.3} parent=67 // pred_region
        %s2189 = smul.u32 2, %s28
        %p2190 = scmp.lt.s32.totalorder %s27, 1
        %s2191 = scalar_select %p2190, %s27, 1
        %p2192 = scmp.lt.s32.totalorder %s2189, 1
        %s2193 = scalar_select %p2192, %s2189, 1
        %s2194 = smul.addr %s2191, 2
        %s2195 = sadd.s32 %s2193, %s2194
        %s2196 = smul.addr %s2195, 8
        %s2197 = scalar_lea.vmem %s10, %s2196
      $region72: #{mod_enc_layer.3} parent=67 // pred_fallthru
        _
    $region68: #{mod_enc_layer.3} parent=5 // pred_fallthru
      _
  $region6: #{mod_enc_layer.3} parent=0 // loop_footer
    %s20 = sadd.s32 1, %s16
  $region7: #{mod_enc_layer.3} parent=0 // loop_footer_branch
    %15 = sbr.rel target = $region3
  $region8: #{mod_enc_layer.3} parent=0 // loop_exit
    _

// kernel: mod_enc_layer.4
$region0: #{mod_enc_layer.4}
  #allocation0 [shape = 'u32[]', space=smem, size = 0x4, offset = 0x4, fixed_abs, tag = 'smem constant byte address 0x4 - core index']
  #allocation1 [shape = 'u32[72,128]{1,0:T(1,128)}', space=vmem, size = 0x9000, scoped, tag = 'internal scratch']
  %s0 = inlined_call_operand.vmem [shape: f32[1,2,16,32], index: 0, kind: input, shape index: {}]
  %s1 = inlined_call_operand.vmem [shape: bf16[2,16,16], index: 1, kind: input, shape index: {}]
  %s2 = inlined_call_operand.vmem [shape: f32[1,32,32], index: 2, kind: input, shape index: {}]
  %s3 = inlined_call_operand.vmem [shape: f32[1,32,32], index: 3, kind: input, shape index: {}]
  %s4 = inlined_call_operand.vmem [shape: f32[1,32,32], index: 4, kind: input, shape index: {}]
  %s5 = inlined_call_operand.vmem [shape: f32[1,32,32], index: 5, kind: input, shape index: {}]
  %s6 = inlined_call_operand.vmem [shape: f32[1,1,32], index: 6, kind: input, shape index: {}]
  %s7 = inlined_call_operand.vmem [shape: f32[1,1,32], index: 7, kind: input, shape index: {}]
  %s8 = inlined_call_operand.vmem [shape: f32[1,1,32], index: 8, kind: input, shape index: {}]
  %s9 = inlined_call_operand.vmem [shape: f32[1,2,16,32], index: 9, kind: output, shape index: {0}]
  %s10 = inlined_call_operand.hbm [shape: bf16[1,2,64,16], index: 10, kind: output, shape index: {1}]
  %11 = xla_tuple %s9, %s10
  %s12 = sld [smem:[#allocation0]]
  $region77: #{mod_enc_layer.4} parent=0
    _
  %s14 = ssub.s32 1, %s12
  %s15 = scalar_select 0, %s14, %s12
  $region1: #{mod_enc_layer.4} parent=0
    #allocation2 [shape = 'u8[32768]{0}', space=vmem, size = 0x8000, scoped, tag = 'output window, operand 1']
    #allocation3 [shape = 's32[2]{0}', space=sflag, size = 0x8, scoped, tag = 'scoped memory for mod_enc_layer.4']
    %16 = vsyncpa [#allocation3], 0
    %s17 = scalar_lea.sflag [#allocation3], 1
    %18 = vsyncpa %s17, 0
    loop: start=0, step=1, limit=4
    $region2: #{mod_enc_layer.4} parent=1 // loop_pre_header
      _
    $region3: #{mod_enc_layer.4} parent=1 // loop_header
      %s20 = sphi 0, %s24
      %p21 = scmp.ge.s32.totalorder %s20, 4
      %s27 = sphi 0, %s39
      %s28 = sphi 0, %s35
      %s29 = sphi 0, %s27
      %s30 = sphi 0, %s28
      %s31 = sphi 0, %s29
      %s32 = sphi 0, %s30
      %s44 = sphi 0, %s46
      %s47 = sphi 0, %s44
      %s48 = sphi 0, %s47
      %s64 = sphi 0, %s48
      %s70 = sphi 0, %s72
      %s73 = sphi 0, %s70
      %s74 = sphi 0, %s73
      %s90 = sphi 0, %s74
      %s96 = sphi 0, %s98
      %s99 = sphi 0, %s96
      %s100 = sphi 0, %s99
      %s116 = sphi 0, %s100
      %s122 = sphi 0, %s124
      %s125 = sphi 0, %s122
      %s126 = sphi 0, %s125
      %s142 = sphi 0, %s126
      %s148 = sphi 0, %s150
      %s151 = sphi 0, %s148
      %s152 = sphi 0, %s151
      %s168 = sphi 0, %s152
      %s174 = sphi 0, %s176
      %s177 = sphi 0, %s174
      %s178 = sphi 0, %s177
      %s194 = sphi 0, %s178
      %s200 = sphi 0, %s202
      %s203 = sphi 0, %s200
      %s204 = sphi 0, %s203
      %s220 = sphi 0, %s204
      %s226 = sphi 0, %s228
      %s229 = sphi 0, %s226
      %s230 = sphi 0, %s229
      %s246 = sphi 0, %s230
      %s252 = sphi 0, %s254
      %s255 = sphi 0, %s252
      %s256 = sphi 0, %s255
      %s272 = sphi 0, %s256
      %s280 = sphi 0, %s282
      %s283 = sphi 0, %s280
      %s284 = sphi 0, %s283
      %s300 = sphi 0, %s284
      %s308 = sphi 0, %s310
      %s311 = sphi 0, %s308
      %s312 = sphi 0, %s311
      %s328 = sphi 0, %s312
    $region4: #{mod_enc_layer.4} parent=1 // loop_header_branch
      %23 = sbr.rel (%p21) target = $region8
    $region5: #{mod_enc_layer.4} parent=1 // loop_body
      %s25 = ssub.s32 %s20, 1
      %s26 = ssub.s32 %s20, 2
      %s33 = sadd.s32 1, %s28
      %p34 = scmp.ge.s32.totalorder %s33, 2
      %s35 = scalar_select %p34, 0, %s33
      %s36 = sadd.s32 1, %s27
      %s37 = scalar_select %p34, %s36, %s27
      %p38 = scmp.ge.s32.totalorder %s37, 1
      %s39 = scalar_select %p38, 0, %s37
      %s40 = ssub.s32 %s27, %s39
      %s41 = ssub.s32 %s28, %s35
      %s42 = sor.u32 %s40, %s41
      %p43 = scmp.eq.s32.totalorder %s42, 0
      %s45 = sadd.s32 %s44, 1
      %s46 = scalar_select %p43, %s44, %s45
      %p49 = pneg %p43
      %p50 = scmp.eq.s32.totalorder %s20, 1
      %p51 = por %p49, %p50
      %p52 = scmp.ne.s32.totalorder %s44, %s47
      %p53 = scmp.eq.s32.totalorder %s20, 0
      %p54 = por %p52, %p53
      %p55 = scmp.ne.s32.totalorder %s44, %s47
      %p56 = scmp.eq.s32.totalorder %s25, 1
      %p57 = por %p55, %p56
      %p58 = scmp.ne.s32.totalorder %s47, %s48
      %p59 = scmp.eq.s32.totalorder %s25, 0
      %p60 = por %p58, %p59
      %p61 = scmp.ne.s32.totalorder %s47, %s48
      %p62 = scmp.eq.s32.totalorder %s26, 1
      %p63 = por %p61, %p62
      %p65 = scmp.ne.s32.totalorder %s48, %s64
      %p66 = scmp.eq.s32.totalorder %s26, 0
      %p67 = por %p65, %p66
      %s68 = ssub.s32 %s28, %s35
      %p69 = scmp.eq.s32.totalorder %s68, 0
      %s71 = sadd.s32 %s70, 1
      %s72 = scalar_select %p69, %s70, %s71
      %p75 = pneg %p69
      %p76 = scmp.eq.s32.totalorder %s20, 1
      %p77 = por %p75, %p76
      %p78 = scmp.ne.s32.totalorder %s70, %s73
      %p79 = scmp.eq.s32.totalorder %s20, 0
      %p80 = por %p78, %p79
      %p81 = scmp.ne.s32.totalorder %s70, %s73
      %p82 = scmp.eq.s32.totalorder %s25, 1
      %p83 = por %p81, %p82
      %p84 = scmp.ne.s32.totalorder %s73, %s74
      %p85 = scmp.eq.s32.totalorder %s25, 0
      %p86 = por %p84, %p85
      %p87 = scmp.ne.s32.totalorder %s73, %s74
      %p88 = scmp.eq.s32.totalorder %s26, 1
      %p89 = por %p87, %p88
      %p91 = scmp.ne.s32.totalorder %s74, %s90
      %p92 = scmp.eq.s32.totalorder %s26, 0
      %p93 = por %p91, %p92
      %s94 = ssub.s32 %s27, %s39
      %p95 = scmp.eq.s32.totalorder %s94, 0
      %s97 = sadd.s32 %s96, 1
      %s98 = scalar_select %p95, %s96, %s97
      %p101 = pneg %p95
      %p102 = scmp.eq.s32.totalorder %s20, 1
      %p103 = por %p101, %p102
      %p104 = scmp.ne.s32.totalorder %s96, %s99
      %p105 = scmp.eq.s32.totalorder %s20, 0
      %p106 = por %p104, %p105
      %p107 = scmp.ne.s32.totalorder %s96, %s99
      %p108 = scmp.eq.s32.totalorder %s25, 1
      %p109 = por %p107, %p108
      %p110 = scmp.ne.s32.totalorder %s99, %s100
      %p111 = scmp.eq.s32.totalorder %s25, 0
      %p112 = por %p110, %p111
      %p113 = scmp.ne.s32.totalorder %s99, %s100
      %p114 = scmp.eq.s32.totalorder %s26, 1
      %p115 = por %p113, %p114
      %p117 = scmp.ne.s32.totalorder %s100, %s116
      %p118 = scmp.eq.s32.totalorder %s26, 0
      %p119 = por %p117, %p118
      %s120 = ssub.s32 %s27, %s39
      %p121 = scmp.eq.s32.totalorder %s120, 0
      %s123 = sadd.s32 %s122, 1
      %s124 = scalar_select %p121, %s122, %s123
      %p127 = pneg %p121
      %p128 = scmp.eq.s32.totalorder %s20, 1
      %p129 = por %p127, %p128
      %p130 = scmp.ne.s32.totalorder %s122, %s125
      %p131 = scmp.eq.s32.totalorder %s20, 0
      %p132 = por %p130, %p131
      %p133 = scmp.ne.s32.totalorder %s122, %s125
      %p134 = scmp.eq.s32.totalorder %s25, 1
      %p135 = por %p133, %p134
      %p136 = scmp.ne.s32.totalorder %s125, %s126
      %p137 = scmp.eq.s32.totalorder %s25, 0
      %p138 = por %p136, %p137
      %p139 = scmp.ne.s32.totalorder %s125, %s126
      %p140 = scmp.eq.s32.totalorder %s26, 1
      %p141 = por %p139, %p140
      %p143 = scmp.ne.s32.totalorder %s126, %s142
      %p144 = scmp.eq.s32.totalorder %s26, 0
      %p145 = por %p143, %p144
      %s146 = ssub.s32 %s27, %s39
      %p147 = scmp.eq.s32.totalorder %s146, 0
      %s149 = sadd.s32 %s148, 1
      %s150 = scalar_select %p147, %s148, %s149
      %p153 = pneg %p147
      %p154 = scmp.eq.s32.totalorder %s20, 1
      %p155 = por %p153, %p154
      %p156 = scmp.ne.s32.totalorder %s148, %s151
      %p157 = scmp.eq.s32.totalorder %s20, 0
      %p158 = por %p156, %p157
      %p159 = scmp.ne.s32.totalorder %s148, %s151
      %p160 = scmp.eq.s32.totalorder %s25, 1
      %p161 = por %p159, %p160
      %p162 = scmp.ne.s32.totalorder %s151, %s152
      %p163 = scmp.eq.s32.totalorder %s25, 0
      %p164 = por %p162, %p163
      %p165 = scmp.ne.s32.totalorder %s151, %s152
      %p166 = scmp.eq.s32.totalorder %s26, 1
      %p167 = por %p165, %p166
      %p169 = scmp.ne.s32.totalorder %s152, %s168
      %p170 = scmp.eq.s32.totalorder %s26, 0
      %p171 = por %p169, %p170
      %s172 = ssub.s32 %s27, %s39
      %p173 = scmp.eq.s32.totalorder %s172, 0
      %s175 = sadd.s32 %s174, 1
      %s176 = scalar_select %p173, %s174, %s175
      %p179 = pneg %p173
      %p180 = scmp.eq.s32.totalorder %s20, 1
      %p181 = por %p179, %p180
      %p182 = scmp.ne.s32.totalorder %s174, %s177
      %p183 = scmp.eq.s32.totalorder %s20, 0
      %p184 = por %p182, %p183
      %p185 = scmp.ne.s32.totalorder %s174, %s177
      %p186 = scmp.eq.s32.totalorder %s25, 1
      %p187 = por %p185, %p186
      %p188 = scmp.ne.s32.totalorder %s177, %s178
      %p189 = scmp.eq.s32.totalorder %s25, 0
      %p190 = por %p188, %p189
      %p191 = scmp.ne.s32.totalorder %s177, %s178
      %p192 = scmp.eq.s32.totalorder %s26, 1
      %p193 = por %p191, %p192
      %p195 = scmp.ne.s32.totalorder %s178, %s194
      %p196 = scmp.eq.s32.totalorder %s26, 0
      %p197 = por %p195, %p196
      %s198 = ssub.s32 %s27, %s39
      %p199 = scmp.eq.s32.totalorder %s198, 0
      %s201 = sadd.s32 %s200, 1
      %s202 = scalar_select %p199, %s200, %s201
      %p205 = pneg %p199
      %p206 = scmp.eq.s32.totalorder %s20, 1
      %p207 = por %p205, %p206
      %p208 = scmp.ne.s32.totalorder %s200, %s203
      %p209 = scmp.eq.s32.totalorder %s20, 0
      %p210 = por %p208, %p209
      %p211 = scmp.ne.s32.totalorder %s200, %s203
      %p212 = scmp.eq.s32.totalorder %s25, 1
      %p213 = por %p211, %p212
      %p214 = scmp.ne.s32.totalorder %s203, %s204
      %p215 = scmp.eq.s32.totalorder %s25, 0
      %p216 = por %p214, %p215
      %p217 = scmp.ne.s32.totalorder %s203, %s204
      %p218 = scmp.eq.s32.totalorder %s26, 1
      %p219 = por %p217, %p218
      %p221 = scmp.ne.s32.totalorder %s204, %s220
      %p222 = scmp.eq.s32.totalorder %s26, 0
      %p223 = por %p221, %p222
      %s224 = ssub.s32 %s27, %s39
      %p225 = scmp.eq.s32.totalorder %s224, 0
      %s227 = sadd.s32 %s226, 1
      %s228 = scalar_select %p225, %s226, %s227
      %p231 = pneg %p225
      %p232 = scmp.eq.s32.totalorder %s20, 1
      %p233 = por %p231, %p232
      %p234 = scmp.ne.s32.totalorder %s226, %s229
      %p235 = scmp.eq.s32.totalorder %s20, 0
      %p236 = por %p234, %p235
      %p237 = scmp.ne.s32.totalorder %s226, %s229
      %p238 = scmp.eq.s32.totalorder %s25, 1
      %p239 = por %p237, %p238
      %p240 = scmp.ne.s32.totalorder %s229, %s230
      %p241 = scmp.eq.s32.totalorder %s25, 0
      %p242 = por %p240, %p241
      %p243 = scmp.ne.s32.totalorder %s229, %s230
      %p244 = scmp.eq.s32.totalorder %s26, 1
      %p245 = por %p243, %p244
      %p247 = scmp.ne.s32.totalorder %s230, %s246
      %p248 = scmp.eq.s32.totalorder %s26, 0
      %p249 = por %p247, %p248
      %s250 = ssub.s32 %s27, %s39
      %p251 = scmp.eq.s32.totalorder %s250, 0
      %s253 = sadd.s32 %s252, 1
      %s254 = scalar_select %p251, %s252, %s253
      %p257 = pneg %p251
      %p258 = scmp.eq.s32.totalorder %s20, 1
      %p259 = por %p257, %p258
      %p260 = scmp.ne.s32.totalorder %s252, %s255
      %p261 = scmp.eq.s32.totalorder %s20, 0
      %p262 = por %p260, %p261
      %p263 = scmp.ne.s32.totalorder %s252, %s255
      %p264 = scmp.eq.s32.totalorder %s25, 1
      %p265 = por %p263, %p264
      %p266 = scmp.ne.s32.totalorder %s255, %s256
      %p267 = scmp.eq.s32.totalorder %s25, 0
      %p268 = por %p266, %p267
      %p269 = scmp.ne.s32.totalorder %s255, %s256
      %p270 = scmp.eq.s32.totalorder %s26, 1
      %p271 = por %p269, %p270
      %p273 = scmp.ne.s32.totalorder %s256, %s272
      %p274 = scmp.eq.s32.totalorder %s26, 0
      %p275 = por %p273, %p274
      %s276 = ssub.s32 %s27, %s39
      %s277 = ssub.s32 %s28, %s35
      %s278 = sor.u32 %s276, %s277
      %p279 = scmp.eq.s32.totalorder %s278, 0
      %s281 = sadd.s32 %s280, 1
      %s282 = scalar_select %p279, %s280, %s281
      %p285 = pneg %p279
      %p286 = scmp.eq.s32.totalorder %s20, 1
      %p287 = por %p285, %p286
      %p288 = scmp.ne.s32.totalorder %s280, %s283
      %p289 = scmp.eq.s32.totalorder %s20, 0
      %p290 = por %p288, %p289
      %p291 = scmp.ne.s32.totalorder %s280, %s283
      %p292 = scmp.eq.s32.totalorder %s25, 1
      %p293 = por %p291, %p292
      %p294 = scmp.ne.s32.totalorder %s283, %s284
      %p295 = scmp.eq.s32.totalorder %s25, 0
      %p296 = por %p294, %p295
      %p297 = scmp.ne.s32.totalorder %s283, %s284
      %p298 = scmp.eq.s32.totalorder %s26, 1
      %p299 = por %p297, %p298
      %p301 = scmp.ne.s32.totalorder %s284, %s300
      %p302 = scmp.eq.s32.totalorder %s26, 0
      %p303 = por %p301, %p302
      %s304 = ssub.s32 %s27, %s39
      %s305 = ssub.s32 %s28, %s35
      %s306 = sor.u32 %s304, %s305
      %p307 = scmp.eq.s32.totalorder %s306, 0
      %s309 = sadd.s32 %s308, 1
      %s310 = scalar_select %p307, %s308, %s309
      %p313 = pneg %p307
      %p314 = scmp.eq.s32.totalorder %s20, 1
      %p315 = por %p313, %p314
      %p316 = scmp.ne.s32.totalorder %s308, %s311
      %p317 = scmp.eq.s32.totalorder %s20, 0
      %p318 = por %p316, %p317
      %p319 = scmp.ne.s32.totalorder %s308, %s311
      %p320 = scmp.eq.s32.totalorder %s25, 1
      %p321 = por %p319, %p320
      %p322 = scmp.ne.s32.totalorder %s311, %s312
      %p323 = scmp.eq.s32.totalorder %s25, 0
      %p324 = por %p322, %p323
      %p325 = scmp.ne.s32.totalorder %s311, %s312
      %p326 = scmp.eq.s32.totalorder %s26, 1
      %p327 = por %p325, %p326
      %p329 = scmp.ne.s32.totalorder %s312, %s328
      %p330 = scmp.eq.s32.totalorder %s26, 0
      %p331 = por %p329, %p330
      %p332 = scmp.le.s32.totalorder 1, %s20
      %p333 = scmp.lt.s32.totalorder %s20, 3
      %p334 = pnand %p332, %p333
      %p335 = pneg %p334
      // Predicated region
      $region9: #{mod_enc_layer.4} parent=5 // pred_check
        _
      $region10: #{mod_enc_layer.4} parent=5 // pred_check_branch
        %337 = sbr.rel (%p334) target = $region12
      $region11: #{mod_enc_layer.4} parent=5 // pred_region
        %s338 = ssub.s32 %s20, 1
        // Predicated region
        $region13: #{mod_enc_layer.4} parent=11 // pred_check
          %p339 = pneg %p112
        $region14: #{mod_enc_layer.4} parent=11 // pred_check_branch
          %341 = sbr.rel (%p339) target = $region16
        $region15: #{mod_enc_layer.4} parent=11 // pred_region
          %p342 = scmp.lt.s32.totalorder %s29, 0
          %s343 = scalar_select %p342, %s29, 0
          %s344 = smul.addr %s343, 4
          %s345 = smul.addr %s344, 8
          %s346 = scalar_lea.vmem %s2, %s345
        $region16: #{mod_enc_layer.4} parent=11 // pred_fallthru
          _
        // Predicated region
        $region17: #{mod_enc_layer.4} parent=11 // pred_check
          %p347 = pneg %p138
        $region18: #{mod_enc_layer.4} parent=11 // pred_check_branch
          %349 = sbr.rel (%p347) target = $region20
        $region19: #{mod_enc_layer.4} parent=11 // pred_region
          %p350 = scmp.lt.s32.totalorder %s29, 0
          %s351 = scalar_select %p350, %s29, 0
          %s352 = smul.addr %s351, 4
          %s353 = smul.addr %s352, 8
          %s354 = scalar_lea.vmem %s3, %s353
        $region20: #{mod_enc_layer.4} parent=11 // pred_fallthru
          _
        // Predicated region
        $region21: #{mod_enc_layer.4} parent=11 // pred_check
          %p355 = pneg %p164
        $region22: #{mod_enc_layer.4} parent=11 // pred_check_branch
          %357 = sbr.rel (%p355) target = $region24
        $region23: #{mod_enc_layer.4} parent=11 // pred_region
          %p358 = scmp.lt.s32.totalorder %s29, 0
          %s359 = scalar_select %p358, %s29, 0
          %s360 = smul.addr %s359, 4
          %s361 = smul.addr %s360, 8
          %s362 = scalar_lea.vmem %s4, %s361
        $region24: #{mod_enc_layer.4} parent=11 // pred_fallthru
          _
        // Predicated region
        $region25: #{mod_enc_layer.4} parent=11 // pred_check
          %p363 = pneg %p190
        $region26: #{mod_enc_layer.4} parent=11 // pred_check_branch
          %365 = sbr.rel (%p363) target = $region28
        $region27: #{mod_enc_layer.4} parent=11 // pred_region
          %p366 = scmp.lt.s32.totalorder %s29, 0
          %s367 = scalar_select %p366, %s29, 0
          %s368 = smul.addr %s367, 4
          %s369 = smul.addr %s368, 8
          %s370 = scalar_lea.vmem %s5, %s369
        $region28: #{mod_enc_layer.4} parent=11 // pred_fallthru
          _
        // Predicated region
        $region29: #{mod_enc_layer.4} parent=11 // pred_check
          %p371 = pneg %p216
        $region30: #{mod_enc_layer.4} parent=11 // pred_check_branch
          %373 = sbr.rel (%p371) target = $region32
        $region31: #{mod_enc_layer.4} parent=11 // pred_region
          %p374 = scmp.lt.s32.totalorder %s29, 0
          %s375 = scalar_select %p374, %s29, 0
          %s376 = scalar_lea.vmem %s6, %s375
        $region32: #{mod_enc_layer.4} parent=11 // pred_fallthru
          _
        // Predicated region
        $region33: #{mod_enc_layer.4} parent=11 // pred_check
          %p377 = pneg %p242
        $region34: #{mod_enc_layer.4} parent=11 // pred_check_branch
          %379 = sbr.rel (%p377) target = $region36
        $region35: #{mod_enc_layer.4} parent=11 // pred_region
          %p380 = scmp.lt.s32.totalorder %s29, 0
          %s381 = scalar_select %p380, %s29, 0
          %s382 = scalar_lea.vmem %s7, %s381
        $region36: #{mod_enc_layer.4} parent=11 // pred_fallthru
          _
        // Predicated region
        $region37: #{mod_enc_layer.4} parent=11 // pred_check
          %p383 = pneg %p268
        $region38: #{mod_enc_layer.4} parent=11 // pred_check_branch
          %385 = sbr.rel (%p383) target = $region40
        $region39: #{mod_enc_layer.4} parent=11 // pred_region
          %p386 = scmp.lt.s32.totalorder %s29, 0
          %s387 = scalar_select %p386, %s29, 0
          %s388 = scalar_lea.vmem %s8, %s387
        $region40: #{mod_enc_layer.4} parent=11 // pred_fallthru
          _
      $region12: #{mod_enc_layer.4} parent=5 // pred_fallthru
        _
      %p389 = scmp.lt.s32.totalorder %s20, 2
      // Predicated region
      $region41: #{mod_enc_layer.4} parent=5 // pred_check
        %p390 = pneg %p389
      $region42: #{mod_enc_layer.4} parent=5 // pred_check_branch
        %392 = sbr.rel (%p390) target = $region44
      $region43: #{mod_enc_layer.4} parent=5 // pred_region
        // Predicated region
        $region45: #{mod_enc_layer.4} parent=43 // pred_check
          %p393 = pneg %p54
        $region46: #{mod_enc_layer.4} parent=43 // pred_check_branch
          %395 = sbr.rel (%p393) target = $region48
        $region47: #{mod_enc_layer.4} parent=43 // pred_region
          %p396 = scmp.lt.s32.totalorder %s27, 0
          %s397 = scalar_select %p396, %s27, 0
          %p398 = scmp.lt.s32.totalorder %s28, 1
          %s399 = scalar_select %p398, %s28, 1
          %s400 = smul.addr %s399, 2
          %s401 = smul.addr %s397, 4
          %s402 = sadd.s32 %s400, %s401
          %s403 = smul.addr %s402, 8
          %s404 = scalar_lea.vmem %s0, %s403
        $region48: #{mod_enc_layer.4} parent=43 // pred_fallthru
          _
        // Predicated region
        $region49: #{mod_enc_layer.4} parent=43 // pred_check
          %p405 = pneg %p80
        $region50: #{mod_enc_layer.4} parent=43 // pred_check_branch
          %407 = sbr.rel (%p405) target = $region52
        $region51: #{mod_enc_layer.4} parent=43 // pred_region
          %p408 = scmp.lt.s32.totalorder %s28, 1
          %s409 = scalar_select %p408, %s28, 1
          %s410 = smul.addr %s409, 2
          %s411 = smul.addr %s410, 4
          %s412 = scalar_lea.vmem %s1, %s411
        $region52: #{mod_enc_layer.4} parent=43 // pred_fallthru
          _
      $region44: #{mod_enc_layer.4} parent=5 // pred_fallthru
        _
      %p413 = scmp.le.s32.totalorder 1, %s20
      %p414 = scmp.lt.s32.totalorder %s20, 3
      %p415 = pnand %p413, %p414
      %p416 = pneg %p415
      // Predicated region
      $region53: #{mod_enc_layer.4} parent=5 // pred_check
        _
      $region54: #{mod_enc_layer.4} parent=5 // pred_check_branch
        %418 = sbr.rel (%p415) target = $region56
      $region55: #{mod_enc_layer.4} parent=5 // pred_region
        %s419 = ssub.s32 %s20, 1
        %p420 = scmp.lt.s32.totalorder %s29, 0
        %s421 = scalar_select %p420, %s29, 0
        %p422 = scmp.lt.s32.totalorder %s30, 1
        %s423 = scalar_select %p422, %s30, 1
        %s424 = smul.addr %s423, 2
        %s425 = smul.addr %s421, 4
        %s426 = sadd.s32 %s424, %s425
        %s427 = smul.addr %s426, 8
        %s428 = scalar_lea.vmem %s0, %s427
        %p429 = pneg %p60
        %p430 = pneg %p57
        %p431 = scmp.lt.s32.totalorder %s30, 1
        %s432 = scalar_select %p431, %s30, 1
        %s433 = smul.addr %s432, 2
        %s434 = smul.addr %s433, 4
        %s435 = scalar_lea.vmem %s1, %s434
        %p436 = pneg %p86
        %p437 = pneg %p83
        %p438 = scmp.lt.s32.totalorder %s29, 0
        %s439 = scalar_select %p438, %s29, 0
        %s440 = smul.addr %s439, 4
        %s441 = smul.addr %s440, 8
        %s442 = scalar_lea.vmem %s2, %s441
        %p443 = pneg %p112
        %p444 = pneg %p109
        %p445 = scmp.lt.s32.totalorder %s29, 0
        %s446 = scalar_select %p445, %s29, 0
        %s447 = smul.addr %s446, 4
        %s448 = smul.addr %s447, 8
        %s449 = scalar_lea.vmem %s3, %s448
        %p450 = pneg %p138
        %p451 = pneg %p135
        %p452 = scmp.lt.s32.totalorder %s29, 0
        %s453 = scalar_select %p452, %s29, 0
        %s454 = smul.addr %s453, 4
        %s455 = smul.addr %s454, 8
        %s456 = scalar_lea.vmem %s4, %s455
        %p457 = pneg %p164
        %p458 = pneg %p161
        %p459 = scmp.lt.s32.totalorder %s29, 0
        %s460 = scalar_select %p459, %s29, 0
        %s461 = smul.addr %s460, 4
        %s462 = smul.addr %s461, 8
        %s463 = scalar_lea.vmem %s5, %s462
        %p464 = pneg %p190
        %p465 = pneg %p187
        %p466 = scmp.lt.s32.totalorder %s29, 0
        %s467 = scalar_select %p466, %s29, 0
        %s468 = scalar_lea.vmem %s6, %s467
        %p469 = pneg %p216
        %p470 = pneg %p213
        %p471 = scmp.lt.s32.totalorder %s29, 0
        %s472 = scalar_select %p471, %s29, 0
        %s473 = scalar_lea.vmem %s7, %s472
        %p474 = pneg %p242
        %p475 = pneg %p239
        %p476 = scmp.lt.s32.totalorder %s29, 0
        %s477 = scalar_select %p476, %s29, 0
        %s478 = scalar_lea.vmem %s8, %s477
        %p479 = pneg %p268
        %p480 = pneg %p265
        %p481 = pneg %p296
        %p482 = pneg %p293
        %p483 = scmp.lt.s32.totalorder %s29, 0
        %s484 = scalar_select %p483, %s29, 0
        %p485 = scmp.lt.s32.totalorder %s30, 1
        %s486 = scalar_select %p485, %s30, 1
        %s487 = smul.addr %s486, 2
        %s488 = smul.addr %s484, 4
        %s489 = sadd.s32 %s487, %s488
        %s490 = smul.addr %s489, 8
        %s491 = scalar_lea.vmem %s9, %s490
        %p492 = pneg %p324
        %p493 = pneg %p321
        %s494 = sand.u32 %s311, 1
        %s495 = scalar_lea.sflag [#allocation3], %s494
        %s496 = sand.u32 %s311, 1
        %s497 = smul.addr %s496, 32
        %s498 = scalar_lea.vmem [#allocation2], %s497
        %p499 = scmp.lt.s32.totalorder %s29, 0
        %s500 = scalar_select %p499, %s29, 0
        %p501 = scmp.lt.s32.totalorder %s30, 1
        %s502 = scalar_select %p501, %s30, 1
        %s503 = smul.addr %s502, 2
        %s504 = smul.addr %s500, 4
        %s505 = sadd.s32 %s503, %s504
        %s506 = smul.addr %s505, 8
        %s507 = scalar_lea.vmem %s0, %s506
        %p508 = scmp.lt.s32.totalorder %s30, 1
        %s509 = scalar_select %p508, %s30, 1
        %s510 = smul.addr %s509, 2
        %s511 = smul.addr %s510, 4
        %s512 = scalar_lea.vmem %s1, %s511
        %p513 = scmp.lt.s32.totalorder %s29, 0
        %s514 = scalar_select %p513, %s29, 0
        %s515 = smul.addr %s514, 4
        %s516 = smul.addr %s515, 8
        %s517 = scalar_lea.vmem %s2, %s516
        %p518 = scmp.lt.s32.totalorder %s29, 0
        %s519 = scalar_select %p518, %s29, 0
        %s520 = smul.addr %s519, 4
        %s521 = smul.addr %s520, 8
        %s522 = scalar_lea.vmem %s3, %s521
        %p523 = scmp.lt.s32.totalorder %s29, 0
        %s524 = scalar_select %p523, %s29, 0
        %s525 = smul.addr %s524, 4
        %s526 = smul.addr %s525, 8
        %s527 = scalar_lea.vmem %s4, %s526
        %p528 = scmp.lt.s32.totalorder %s29, 0
        %s529 = scalar_select %p528, %s29, 0
        %s530 = smul.addr %s529, 4
        %s531 = smul.addr %s530, 8
        %s532 = scalar_lea.vmem %s5, %s531
        %p533 = scmp.lt.s32.totalorder %s29, 0
        %s534 = scalar_select %p533, %s29, 0
        %s535 = scalar_lea.vmem %s6, %s534
        %p536 = scmp.lt.s32.totalorder %s29, 0
        %s537 = scalar_select %p536, %s29, 0
        %s538 = scalar_lea.vmem %s7, %s537
        %p539 = scmp.lt.s32.totalorder %s29, 0
        %s540 = scalar_select %p539, %s29, 0
        %s541 = scalar_lea.vmem %s8, %s540
        %p542 = scmp.lt.s32.totalorder %s29, 0
        %s543 = scalar_select %p542, %s29, 0
        %p544 = scmp.lt.s32.totalorder %s30, 1
        %s545 = scalar_select %p544, %s30, 1
        %s546 = smul.addr %s545, 2
        %s547 = smul.addr %s543, 4
        %s548 = sadd.s32 %s546, %s547
        %s549 = smul.addr %s548, 8
        %s550 = scalar_lea.vmem %s9, %s549
        %v552 = vld [vmem:[%s507] sm:$0xff]
        %v553 = vld [vmem:[%s507 + $0x8] sm:$0xff]
        %v554 = vld [vmem:[%s512] sm:$0xf]
        %v555 = vld [vmem:[%s512 + $0x4] sm:$0xf]
        %v556 = vunpack.c.l.bf16 %v554
        %v557 = vunpack.c.l.bf16 %v555
        %v558 = vld [vmem:[%s538] sm:$0x1]
        %v559 = vld [vmem:[%s541] sm:$0x1]
        %vm560 = vcmask 261120
        %v561 = vsel %vm560, %v552, 0.0
        %562 = vadd.xlane.f32.xlu0 %v561
        %v563 = vpop.xlane.xlu0 %562
        %v564 = vsel %vm560, %v553, 0.0
        %565 = vadd.xlane.f32.xlu0 %v564
        %v566 = vpop.xlane.xlu0 %565
        %v567 = vrcp.pop 32.0
        %v568 = vmul.f32 32.0, %v567
        %v569 = vsub.f32 1.0, %v568
        %v570 = vmul.f32 %v567, %v569
        %v571 = vadd.f32 %v567, %v570
        %vm572 = vweird.f32 %v567
        %v573 = vsel %vm572, %v567, %v571
        %v574 = vmul.f32 %v563, %v573
        %v575 = vmul.f32 %v566, %v573
        %v576 = vsub.f32 %v552, %v574
        %v577 = vsub.f32 %v553, %v575
        %v578 = vmul.f32 %v576, %v576
        %v579 = vmul.f32 %v577, %v577
        %v580 = vsel %vm560, %v578, 0.0
        %581 = vadd.xlane.f32.xlu0 %v580
        %v582 = vpop.xlane.xlu0 %581
        %v583 = vsel %vm560, %v579, 0.0
        %584 = vadd.xlane.f32.xlu0 %v583
        %v585 = vpop.xlane.xlu0 %584
        %v586 = vmul.f32 %v582, %v573
        %v587 = vmul.f32 %v585, %v573
        %v588 = vadd.f32 %v586, 1e-06
        %v589 = vadd.f32 %v587, 1e-06
        %v590 = vrsqrt.pop %v588
        %v591 = vmul.f32 %v590, %v588
        %v592 = vmul.f32 %v591, %v590
        %v593 = vmul.f32 0.5, %v592
        %v594 = vsub.f32 1.5, %v593
        %v595 = vmul.f32 %v590, %v594
        %vm596 = vweird.f32 %v588
        %vm597 = vweird.f32 %v590
        %vm598 = vmor %vm596, %vm597
        %v599 = vsel %vm598, %v590, %v595
        %v600 = vrsqrt.pop %v589
        %v601 = vmul.f32 %v600, %v589
        %v602 = vmul.f32 %v601, %v600
        %v603 = vmul.f32 0.5, %v602
        %v604 = vsub.f32 1.5, %v603
        %v605 = vmul.f32 %v600, %v604
        %vm606 = vweird.f32 %v589
        %vm607 = vweird.f32 %v600
        %vm608 = vmor %vm606, %vm607
        %v609 = vsel %vm608, %v600, %v605
        %v610 = vmul.f32 %v576, %v599
        %v611 = vmul.f32 %v577, %v609
        %v613 = vperm.slane %v558, 0
        %v615 = vmul.f32 %v610, %v613
        %v616 = vmul.f32 %v611, %v613
        %v618 = vperm.slane %v559, 0
        %v620 = vadd.f32 %v615, %v618
        %v621 = vadd.f32 %v616, %v618
        %v622 = vld [vmem:[%s517] sm:$0xff]
        %v623 = vld [vmem:[%s517 + $0x8] sm:$0xff]
        %v624 = vld [vmem:[%s517 + $0x10] sm:$0xff]
        %v625 = vld [vmem:[%s517 + $0x18] sm:$0xff]
        %v626 = vpack.c.bf16 %v621, %v620
        %v627 = vpack.c.bf16 %v623, %v622
        %v628 = vpack.c.bf16 %v625, %v624
        %v630 = vsel %vm560, %v626, 0
        %632 = vmatpush.bf16.msra.mxu0 0
        %633 = vmatpush.bf16.msra.mxu0 0
        %634 = vmatpush.bf16.msra.mxu0 0
        %635 = vmatpush.bf16.msra.mxu0 0
        %636 = vmatpush.bf16.msra.mxu0 0
        %637 = vmatpush.bf16.msra.mxu0 0
        %638 = vmatpush.bf16.msra.mxu0 %v628
        %639 = vmatpush.bf16.msra.mxu0 %v627
        %640 = vmatmul.bf16.gmra.mxu0 %v630
        %v641 = vpop.f32.mrf.mxu0
        %v642 = vadd.f32 0.0, %v641
        %v643 = vpop.f32.mrf.mxu0
        %v644 = vadd.f32 0.0, %v643
        %645 = vdwg.mxu0
        %v646 = vmul.f32 %v642, 0.35355338
        %v647 = vmul.f32 %v644, 0.35355338
        %v648 = vld [vmem:[%s522] sm:$0xff]
        %v649 = vld [vmem:[%s522 + $0x8] sm:$0xff]
        %v650 = vld [vmem:[%s522 + $0x10] sm:$0xff]
        %v651 = vld [vmem:[%s522 + $0x18] sm:$0xff]
        %v652 = vpack.c.bf16 %v553, %v552
        %v653 = vpack.c.bf16 %v649, %v648
        %v654 = vpack.c.bf16 %v651, %v650
        %v656 = vsel %vm560, %v652, 0
        %658 = vmatpush.bf16.msra.mxu0 0
        %659 = vmatpush.bf16.msra.mxu0 0
        %660 = vmatpush.bf16.msra.mxu0 0
        %661 = vmatpush.bf16.msra.mxu0 0
        %662 = vmatpush.bf16.msra.mxu0 0
        %663 = vmatpush.bf16.msra.mxu0 0
        %664 = vmatpush.bf16.msra.mxu0 %v654
        %665 = vmatpush.bf16.msra.mxu0 %v653
        %666 = vmatmul.bf16.gmra.mxu0 %v656
        %v667 = vpop.f32.mrf.mxu0
        %v668 = vadd.f32 0.0, %v667
        %v669 = vpop.f32.mrf.mxu0
        %v670 = vadd.f32 0.0, %v669
        %671 = vdwg.mxu0
        %v672 = vld [vmem:[%s527] sm:$0xff]
        %v673 = vld [vmem:[%s527 + $0x8] sm:$0xff]
        %v674 = vld [vmem:[%s527 + $0x10] sm:$0xff]
        %v675 = vld [vmem:[%s527 + $0x18] sm:$0xff]
        %v676 = vpack.c.bf16 %v673, %v672
        %v677 = vpack.c.bf16 %v675, %v674
        %678 = vmatpush.bf16.msra.mxu0 0
        %679 = vmatpush.bf16.msra.mxu0 0
        %680 = vmatpush.bf16.msra.mxu0 0
        %681 = vmatpush.bf16.msra.mxu0 0
        %682 = vmatpush.bf16.msra.mxu0 0
        %683 = vmatpush.bf16.msra.mxu0 0
        %684 = vmatpush.bf16.msra.mxu0 %v677
        %685 = vmatpush.bf16.msra.mxu0 %v676
        %686 = vmatmul.bf16.gmra.mxu0 %v656
        %v687 = vpop.f32.mrf.mxu0
        %v688 = vadd.f32 0.0, %v687
        %v689 = vpop.f32.mrf.mxu0
        %v690 = vadd.f32 0.0, %v689
        %691 = vdwg.mxu0
        %694 = vrot.lane.b32.xlu0 %v646, 120
        %v695 = vpop.permute.xlu0 %694
        %696 = vrot.lane.b32.xlu0 %v647, 120
        %v697 = vpop.permute.xlu0 %696
        %700 = vrot.lane.b32.xlu0 %v646, 112
        %v701 = vpop.permute.xlu0 %700
        %702 = vrot.lane.b32.xlu0 %v647, 112
        %v703 = vpop.permute.xlu0 %702
        %706 = vrot.lane.b32.xlu0 %v646, 104
        %v707 = vpop.permute.xlu0 %706
        %708 = vrot.lane.b32.xlu0 %v647, 104
        %v709 = vpop.permute.xlu0 %708
        %v712 = vrot.slane %v701, 4
        %vm713 = vcmask 1047556
        %v714 = vsel %vm713, %v712, %v646
        %v715 = vrot.slane %v646, 4
        %v716 = vsel %vm713, %v701, %v715
        %v718 = vunpack.c.l.s4 1983009808
        %v719 = vunpack.c.0.s8 %v718
        %v720 = vperm.slane %v714, %v719
        %v722 = vunpack.c.l.s4 1983009808
        %v723 = vunpack.c.0.s8 %v722
        %v724 = vperm.slane %v716, %v723
        %v725 = vrot.slane %v707, 4
        %v726 = vsel %vm713, %v725, %v695
        %v727 = vrot.slane %v695, 4
        %v728 = vsel %vm713, %v707, %v727
        %v730 = vunpack.c.l.s4 1983009808
        %v731 = vunpack.c.0.s8 %v730
        %v732 = vperm.slane %v726, %v731
        %v734 = vunpack.c.l.s4 1983009808
        %v735 = vunpack.c.0.s8 %v734
        %v736 = vperm.slane %v728, %v735
        %v737 = vrot.slane %v732, 4
        %v738 = vsel %vm713, %v737, %v720
        %v739 = vrot.slane %v720, 4
        %v740 = vsel %vm713, %v732, %v739
        %v742 = vunpack.c.l.s4 1934713408
        %v743 = vunpack.c.0.s8 %v742
        %v744 = vperm.slane %v738, %v743
        %v746 = vunpack.c.l.s4 1934713408
        %v747 = vunpack.c.0.s8 %v746
        %v748 = vperm.slane %v740, %v747
        %v749 = vrot.slane %v736, 4
        %v750 = vsel %vm713, %v749, %v724
        %v751 = vrot.slane %v724, 4
        %v752 = vsel %vm713, %v736, %v751
        %v754 = vunpack.c.l.s4 1934713408
        %v755 = vunpack.c.0.s8 %v754
        %v756 = vperm.slane %v750, %v755
        %v758 = vunpack.c.l.s4 1934713408
        %v759 = vunpack.c.0.s8 %v758
        %v760 = vperm.slane %v752, %v759
        %v761 = vrot.slane %v744, 4
        %v762 = vsel %vm713, 0.0, %v761
        %v763 = vrot.slane %v748, 4
        %v764 = vsel %vm713, 0.0, %v763
        %v765 = vrot.slane %v756, 4
        %v766 = vsel %vm713, 0.0, %v765
        %v767 = vrot.slane %v760, 4
        %v768 = vsel %vm713, 0.0, %v767
        %v769 = vrot.slane %v703, 4
        %v770 = vsel %vm713, %v769, %v647
        %v771 = vrot.slane %v647, 4
        %v772 = vsel %vm713, %v703, %v771
        %v774 = vunpack.c.l.s4 1983009808
        %v775 = vunpack.c.0.s8 %v774
        %v776 = vperm.slane %v770, %v775
        %v778 = vunpack.c.l.s4 1983009808
        %v779 = vunpack.c.0.s8 %v778
        %v780 = vperm.slane %v772, %v779
        %v781 = vrot.slane %v709, 4
        %v782 = vsel %vm713, %v781, %v697
        %v783 = vrot.slane %v697, 4
        %v784 = vsel %vm713, %v709, %v783
        %v786 = vunpack.c.l.s4 1983009808
        %v787 = vunpack.c.0.s8 %v786
        %v788 = vperm.slane %v782, %v787
        %v790 = vunpack.c.l.s4 1983009808
        %v791 = vunpack.c.0.s8 %v790
        %v792 = vperm.slane %v784, %v791
        %v793 = vrot.slane %v788, 4
        %v794 = vsel %vm713, %v793, %v776
        %v795 = vrot.slane %v776, 4
        %v796 = vsel %vm713, %v788, %v795
        %v798 = vunpack.c.l.s4 1934713408
        %v799 = vunpack.c.0.s8 %v798
        %v800 = vperm.slane %v794, %v799
        %v802 = vunpack.c.l.s4 1934713408
        %v803 = vunpack.c.0.s8 %v802
        %v804 = vperm.slane %v796, %v803
        %v805 = vrot.slane %v792, 4
        %v806 = vsel %vm713, %v805, %v780
        %v807 = vrot.slane %v780, 4
        %v808 = vsel %vm713, %v792, %v807
        %v810 = vunpack.c.l.s4 1934713408
        %v811 = vunpack.c.0.s8 %v810
        %v812 = vperm.slane %v806, %v811
        %v814 = vunpack.c.l.s4 1934713408
        %v815 = vunpack.c.0.s8 %v814
        %v816 = vperm.slane %v808, %v815
        %v817 = vrot.slane %v800, 4
        %v818 = vsel %vm713, 0.0, %v817
        %v819 = vrot.slane %v804, 4
        %v820 = vsel %vm713, 0.0, %v819
        %v821 = vrot.slane %v812, 4
        %v822 = vsel %vm713, 0.0, %v821
        %v823 = vrot.slane %v816, 4
        %v824 = vsel %vm713, 0.0, %v823
        %v825 = vsel %vm713, %v763, %v744
        %v827 = vunpack.c.l.s4 1983009808
        %v828 = vunpack.c.0.s8 %v827
        %v829 = vperm.slane %v825, %v828
        %v830 = vrot.slane %v764, 4
        %v831 = vsel %vm713, %v830, %v762
        %v833 = vunpack.c.l.s4 1983009808
        %v834 = vunpack.c.0.s8 %v833
        %v835 = vperm.slane %v831, %v834
        %v836 = vsel %vm713, %v767, %v756
        %v838 = vunpack.c.l.s4 1983009808
        %v839 = vunpack.c.0.s8 %v838
        %v840 = vperm.slane %v836, %v839
        %v841 = vrot.slane %v768, 4
        %v842 = vsel %vm713, %v841, %v766
        %v844 = vunpack.c.l.s4 1983009808
        %v845 = vunpack.c.0.s8 %v844
        %v846 = vperm.slane %v842, %v845
        %v847 = vrot.slane %v835, 4
        %v848 = vsel %vm713, %v847, %v829
        %v849 = vrot.slane %v829, 4
        %v850 = vsel %vm713, %v835, %v849
        %v852 = vunpack.c.l.s4 1934713408
        %v853 = vunpack.c.0.s8 %v852
        %v854 = vperm.slane %v848, %v853
        %v856 = vunpack.c.l.s4 1934713408
        %v857 = vunpack.c.0.s8 %v856
        %v858 = vperm.slane %v850, %v857
        %v859 = vrot.slane %v846, 4
        %v860 = vsel %vm713, %v859, %v840
        %v861 = vrot.slane %v840, 4
        %v862 = vsel %vm713, %v846, %v861
        %v864 = vunpack.c.l.s4 1934713408
        %v865 = vunpack.c.0.s8 %v864
        %v866 = vperm.slane %v860, %v865
        %v868 = vunpack.c.l.s4 1934713408
        %v869 = vunpack.c.0.s8 %v868
        %v870 = vperm.slane %v862, %v869
        %v871 = vrot.slane %v866, 4
        %v872 = vsel %vm713, %v871, %v854
        %v873 = vrot.slane %v854, 4
        %v874 = vsel %vm713, %v866, %v873
        %v875 = vrot.slane %v870, 4
        %v876 = vsel %vm713, %v875, %v858
        %v877 = vrot.slane %v858, 4
        %v878 = vsel %vm713, %v870, %v877
        %v879 = vsel %vm713, %v819, %v800
        %v881 = vunpack.c.l.s4 1983009808
        %v882 = vunpack.c.0.s8 %v881
        %v883 = vperm.slane %v879, %v882
        %v884 = vrot.slane %v820, 4
        %v885 = vsel %vm713, %v884, %v818
        %v887 = vunpack.c.l.s4 1983009808
        %v888 = vunpack.c.0.s8 %v887
        %v889 = vperm.slane %v885, %v888
        %v890 = vsel %vm713, %v823, %v812
        %v892 = vunpack.c.l.s4 1983009808
        %v893 = vunpack.c.0.s8 %v892
        %v894 = vperm.slane %v890, %v893
        %v895 = vrot.slane %v824, 4
        %v896 = vsel %vm713, %v895, %v822
        %v898 = vunpack.c.l.s4 1983009808
        %v899 = vunpack.c.0.s8 %v898
        %v900 = vperm.slane %v896, %v899
        %v901 = vrot.slane %v889, 4
        %v902 = vsel %vm713, %v901, %v883
        %v903 = vrot.slane %v883, 4
        %v904 = vsel %vm713, %v889, %v903
        %v906 = vunpack.c.l.s4 1934713408
        %v907 = vunpack.c.0.s8 %v906
        %v908 = vperm.slane %v902, %v907
        %v910 = vunpack.c.l.s4 1934713408
        %v911 = vunpack.c.0.s8 %v910
        %v912 = vperm.slane %v904, %v911
        %v913 = vrot.slane %v900, 4
        %v914 = vsel %vm713, %v913, %v894
        %v915 = vrot.slane %v894, 4
        %v916 = vsel %vm713, %v900, %v915
        %v918 = vunpack.c.l.s4 1934713408
        %v919 = vunpack.c.0.s8 %v918
        %v920 = vperm.slane %v914, %v919
        %v922 = vunpack.c.l.s4 1934713408
        %v923 = vunpack.c.0.s8 %v922
        %v924 = vperm.slane %v916, %v923
        %v925 = vrot.slane %v920, 4
        %v926 = vsel %vm713, %v925, %v908
        %v927 = vrot.slane %v908, 4
        %v928 = vsel %vm713, %v920, %v927
        %v929 = vrot.slane %v924, 4
        %v930 = vsel %vm713, %v929, %v912
        %v931 = vrot.slane %v912, 4
        %v932 = vsel %vm713, %v924, %v931
        %935 = vrot.lane.b32.xlu0 %v668, 120
        %v936 = vpop.permute.xlu0 %935
        %937 = vrot.lane.b32.xlu0 %v670, 120
        %v938 = vpop.permute.xlu0 %937
        %941 = vrot.lane.b32.xlu0 %v668, 112
        %v942 = vpop.permute.xlu0 %941
        %943 = vrot.lane.b32.xlu0 %v670, 112
        %v944 = vpop.permute.xlu0 %943
        %947 = vrot.lane.b32.xlu0 %v668, 104
        %v948 = vpop.permute.xlu0 %947
        %949 = vrot.lane.b32.xlu0 %v670, 104
        %v950 = vpop.permute.xlu0 %949
        %v953 = vrot.slane %v942, 4
        %v954 = vsel %vm713, %v953, %v668
        %v955 = vrot.slane %v668, 4
        %v956 = vsel %vm713, %v942, %v955
        %v958 = vunpack.c.l.s4 1983009808
        %v959 = vunpack.c.0.s8 %v958
        %v960 = vperm.slane %v954, %v959
        %v962 = vunpack.c.l.s4 1983009808
        %v963 = vunpack.c.0.s8 %v962
        %v964 = vperm.slane %v956, %v963
        %v965 = vrot.slane %v948, 4
        %v966 = vsel %vm713, %v965, %v936
        %v967 = vrot.slane %v936, 4
        %v968 = vsel %vm713, %v948, %v967
        %v970 = vunpack.c.l.s4 1983009808
        %v971 = vunpack.c.0.s8 %v970
        %v972 = vperm.slane %v966, %v971
        %v974 = vunpack.c.l.s4 1983009808
        %v975 = vunpack.c.0.s8 %v974
        %v976 = vperm.slane %v968, %v975
        %v977 = vrot.slane %v972, 4
        %v978 = vsel %vm713, %v977, %v960
        %v979 = vrot.slane %v960, 4
        %v980 = vsel %vm713, %v972, %v979
        %v982 = vunpack.c.l.s4 1934713408
        %v983 = vunpack.c.0.s8 %v982
        %v984 = vperm.slane %v978, %v983
        %v986 = vunpack.c.l.s4 1934713408
        %v987 = vunpack.c.0.s8 %v986
        %v988 = vperm.slane %v980, %v987
        %v989 = vrot.slane %v976, 4
        %v990 = vsel %vm713, %v989, %v964
        %v991 = vrot.slane %v964, 4
        %v992 = vsel %vm713, %v976, %v991
        %v994 = vunpack.c.l.s4 1934713408
        %v995 = vunpack.c.0.s8 %v994
        %v996 = vperm.slane %v990, %v995
        %v998 = vunpack.c.l.s4 1934713408
        %v999 = vunpack.c.0.s8 %v998
        %v1000 = vperm.slane %v992, %v999
        %v1001 = vrot.slane %v984, 4
        %v1002 = vsel %vm713, 0.0, %v1001
        %v1003 = vrot.slane %v988, 4
        %v1004 = vsel %vm713, 0.0, %v1003
        %v1005 = vrot.slane %v996, 4
        %v1006 = vsel %vm713, 0.0, %v1005
        %v1007 = vrot.slane %v1000, 4
        %v1008 = vsel %vm713, 0.0, %v1007
        %v1009 = vrot.slane %v944, 4
        %v1010 = vsel %vm713, %v1009, %v670
        %v1011 = vrot.slane %v670, 4
        %v1012 = vsel %vm713, %v944, %v1011
        %v1014 = vunpack.c.l.s4 1983009808
        %v1015 = vunpack.c.0.s8 %v1014
        %v1016 = vperm.slane %v1010, %v1015
        %v1018 = vunpack.c.l.s4 1983009808
        %v1019 = vunpack.c.0.s8 %v1018
        %v1020 = vperm.slane %v1012, %v1019
        %v1021 = vrot.slane %v950, 4
        %v1022 = vsel %vm713, %v1021, %v938
        %v1023 = vrot.slane %v938, 4
        %v1024 = vsel %vm713, %v950, %v1023
        %v1026 = vunpack.c.l.s4 1983009808
        %v1027 = vunpack.c.0.s8 %v1026
        %v1028 = vperm.slane %v1022, %v1027
        %v1030 = vunpack.c.l.s4 1983009808
        %v1031 = vunpack.c.0.s8 %v1030
        %v1032 = vperm.slane %v1024, %v1031
        %v1033 = vrot.slane %v1028, 4
        %v1034 = vsel %vm713, %v1033, %v1016
        %v1035 = vrot.slane %v1016, 4
        %v1036 = vsel %vm713, %v1028, %v1035
        %v1038 = vunpack.c.l.s4 1934713408
        %v1039 = vunpack.c.0.s8 %v1038
        %v1040 = vperm.slane %v1034, %v1039
        %v1042 = vunpack.c.l.s4 1934713408
        %v1043 = vunpack.c.0.s8 %v1042
        %v1044 = vperm.slane %v1036, %v1043
        %v1045 = vrot.slane %v1032, 4
        %v1046 = vsel %vm713, %v1045, %v1020
        %v1047 = vrot.slane %v1020, 4
        %v1048 = vsel %vm713, %v1032, %v1047
        %v1050 = vunpack.c.l.s4 1934713408
        %v1051 = vunpack.c.0.s8 %v1050
        %v1052 = vperm.slane %v1046, %v1051
        %v1054 = vunpack.c.l.s4 1934713408
        %v1055 = vunpack.c.0.s8 %v1054
        %v1056 = vperm.slane %v1048, %v1055
        %v1057 = vrot.slane %v1040, 4
        %v1058 = vsel %vm713, 0.0, %v1057
        %v1059 = vrot.slane %v1044, 4
        %v1060 = vsel %vm713, 0.0, %v1059
        %v1061 = vrot.slane %v1052, 4
        %v1062 = vsel %vm713, 0.0, %v1061
        %v1063 = vrot.slane %v1056, 4
        %v1064 = vsel %vm713, 0.0, %v1063
        %v1065 = vsel %vm713, %v1003, %v984
        %v1067 = vunpack.c.l.s4 1983009808
        %v1068 = vunpack.c.0.s8 %v1067
        %v1069 = vperm.slane %v1065, %v1068
        %v1070 = vrot.slane %v1004, 4
        %v1071 = vsel %vm713, %v1070, %v1002
        %v1073 = vunpack.c.l.s4 1983009808
        %v1074 = vunpack.c.0.s8 %v1073
        %v1075 = vperm.slane %v1071, %v1074
        %v1076 = vsel %vm713, %v1007, %v996
        %v1078 = vunpack.c.l.s4 1983009808
        %v1079 = vunpack.c.0.s8 %v1078
        %v1080 = vperm.slane %v1076, %v1079
        %v1081 = vrot.slane %v1008, 4
        %v1082 = vsel %vm713, %v1081, %v1006
        %v1084 = vunpack.c.l.s4 1983009808
        %v1085 = vunpack.c.0.s8 %v1084
        %v1086 = vperm.slane %v1082, %v1085
        %v1087 = vrot.slane %v1075, 4
        %v1088 = vsel %vm713, %v1087, %v1069
        %v1089 = vrot.slane %v1069, 4
        %v1090 = vsel %vm713, %v1075, %v1089
        %v1092 = vunpack.c.l.s4 1934713408
        %v1093 = vunpack.c.0.s8 %v1092
        %v1094 = vperm.slane %v1088, %v1093
        %v1096 = vunpack.c.l.s4 1934713408
        %v1097 = vunpack.c.0.s8 %v1096
        %v1098 = vperm.slane %v1090, %v1097
        %v1099 = vrot.slane %v1086, 4
        %v1100 = vsel %vm713, %v1099, %v1080
        %v1101 = vrot.slane %v1080, 4
        %v1102 = vsel %vm713, %v1086, %v1101
        %v1104 = vunpack.c.l.s4 1934713408
        %v1105 = vunpack.c.0.s8 %v1104
        %v1106 = vperm.slane %v1100, %v1105
        %v1108 = vunpack.c.l.s4 1934713408
        %v1109 = vunpack.c.0.s8 %v1108
        %v1110 = vperm.slane %v1102, %v1109
        %v1111 = vrot.slane %v1106, 4
        %v1112 = vsel %vm713, %v1111, %v1094
        %v1113 = vrot.slane %v1094, 4
        %v1114 = vsel %vm713, %v1106, %v1113
        %v1115 = vrot.slane %v1110, 4
        %v1116 = vsel %vm713, %v1115, %v1098
        %v1117 = vrot.slane %v1098, 4
        %v1118 = vsel %vm713, %v1110, %v1117
        %v1119 = vsel %vm713, %v1059, %v1040
        %v1121 = vunpack.c.l.s4 1983009808
        %v1122 = vunpack.c.0.s8 %v1121
        %v1123 = vperm.slane %v1119, %v1122
        %v1124 = vrot.slane %v1060, 4
        %v1125 = vsel %vm713, %v1124, %v1058
        %v1127 = vunpack.c.l.s4 1983009808
        %v1128 = vunpack.c.0.s8 %v1127
        %v1129 = vperm.slane %v1125, %v1128
        %v1130 = vsel %vm713, %v1063, %v1052
        %v1132 = vunpack.c.l.s4 1983009808
        %v1133 = vunpack.c.0.s8 %v1132
        %v1134 = vperm.slane %v1130, %v1133
        %v1135 = vrot.slane %v1064, 4
        %v1136 = vsel %vm713, %v1135, %v1062
        %v1138 = vunpack.c.l.s4 1983009808
        %v1139 = vunpack.c.0.s8 %v1138
        %v1140 = vperm.slane %v1136, %v1139
        %v1141 = vrot.slane %v1129, 4
        %v1142 = vsel %vm713, %v1141, %v1123
        %v1143 = vrot.slane %v1123, 4
        %v1144 = vsel %vm713, %v1129, %v1143
        %v1146 = vunpack.c.l.s4 1934713408
        %v1147 = vunpack.c.0.s8 %v1146
        %v1148 = vperm.slane %v1142, %v1147
        %v1150 = vunpack.c.l.s4 1934713408
        %v1151 = vunpack.c.0.s8 %v1150
        %v1152 = vperm.slane %v1144, %v1151
        %v1153 = vrot.slane %v1140, 4
        %v1154 = vsel %vm713, %v1153, %v1134
        %v1155 = vrot.slane %v1134, 4
        %v1156 = vsel %vm713, %v1140, %v1155
        %v1158 = vunpack.c.l.s4 1934713408
        %v1159 = vunpack.c.0.s8 %v1158
        %v1160 = vperm.slane %v1154, %v1159
        %v1162 = vunpack.c.l.s4 1934713408
        %v1163 = vunpack.c.0.s8 %v1162
        %v1164 = vperm.slane %v1156, %v1163
        %v1165 = vrot.slane %v1160, 4
        %v1166 = vsel %vm713, %v1165, %v1148
        %v1167 = vrot.slane %v1148, 4
        %v1168 = vsel %vm713, %v1160, %v1167
        %v1169 = vrot.slane %v1164, 4
        %v1170 = vsel %vm713, %v1169, %v1152
        %v1171 = vrot.slane %v1152, 4
        %v1172 = vsel %vm713, %v1164, %v1171
        %1175 = vrot.lane.b32.xlu0 %v688, 120
        %v1176 = vpop.permute.xlu0 %1175
        %1177 = vrot.lane.b32.xlu0 %v690, 120
        %v1178 = vpop.permute.xlu0 %1177
        %1181 = vrot.lane.b32.xlu0 %v688, 112
        %v1182 = vpop.permute.xlu0 %1181
        %1183 = vrot.lane.b32.xlu0 %v690, 112
        %v1184 = vpop.permute.xlu0 %1183
        %1187 = vrot.lane.b32.xlu0 %v688, 104
        %v1188 = vpop.permute.xlu0 %1187
        %1189 = vrot.lane.b32.xlu0 %v690, 104
        %v1190 = vpop.permute.xlu0 %1189
        %v1193 = vrot.slane %v1182, 4
        %v1194 = vsel %vm713, %v1193, %v688
        %v1195 = vrot.slane %v688, 4
        %v1196 = vsel %vm713, %v1182, %v1195
        %v1198 = vunpack.c.l.s4 1983009808
        %v1199 = vunpack.c.0.s8 %v1198
        %v1200 = vperm.slane %v1194, %v1199
        %v1202 = vunpack.c.l.s4 1983009808
        %v1203 = vunpack.c.0.s8 %v1202
        %v1204 = vperm.slane %v1196, %v1203
        %v1205 = vrot.slane %v1188, 4
        %v1206 = vsel %vm713, %v1205, %v1176
        %v1207 = vrot.slane %v1176, 4
        %v1208 = vsel %vm713, %v1188, %v1207
        %v1210 = vunpack.c.l.s4 1983009808
        %v1211 = vunpack.c.0.s8 %v1210
        %v1212 = vperm.slane %v1206, %v1211
        %v1214 = vunpack.c.l.s4 1983009808
        %v1215 = vunpack.c.0.s8 %v1214
        %v1216 = vperm.slane %v1208, %v1215
        %v1217 = vrot.slane %v1212, 4
        %v1218 = vsel %vm713, %v1217, %v1200
        %v1219 = vrot.slane %v1200, 4
        %v1220 = vsel %vm713, %v1212, %v1219
        %v1222 = vunpack.c.l.s4 1934713408
        %v1223 = vunpack.c.0.s8 %v1222
        %v1224 = vperm.slane %v1218, %v1223
        %v1226 = vunpack.c.l.s4 1934713408
        %v1227 = vunpack.c.0.s8 %v1226
        %v1228 = vperm.slane %v1220, %v1227
        %v1229 = vrot.slane %v1216, 4
        %v1230 = vsel %vm713, %v1229, %v1204
        %v1231 = vrot.slane %v1204, 4
        %v1232 = vsel %vm713, %v1216, %v1231
        %v1234 = vunpack.c.l.s4 1934713408
        %v1235 = vunpack.c.0.s8 %v1234
        %v1236 = vperm.slane %v1230, %v1235
        %v1238 = vunpack.c.l.s4 1934713408
        %v1239 = vunpack.c.0.s8 %v1238
        %v1240 = vperm.slane %v1232, %v1239
        %v1241 = vrot.slane %v1224, 4
        %v1242 = vsel %vm713, 0.0, %v1241
        %v1243 = vrot.slane %v1228, 4
        %v1244 = vsel %vm713, 0.0, %v1243
        %v1245 = vrot.slane %v1236, 4
        %v1246 = vsel %vm713, 0.0, %v1245
        %v1247 = vrot.slane %v1240, 4
        %v1248 = vsel %vm713, 0.0, %v1247
        %v1249 = vrot.slane %v1184, 4
        %v1250 = vsel %vm713, %v1249, %v690
        %v1251 = vrot.slane %v690, 4
        %v1252 = vsel %vm713, %v1184, %v1251
        %v1254 = vunpack.c.l.s4 1983009808
        %v1255 = vunpack.c.0.s8 %v1254
        %v1256 = vperm.slane %v1250, %v1255
        %v1258 = vunpack.c.l.s4 1983009808
        %v1259 = vunpack.c.0.s8 %v1258
        %v1260 = vperm.slane %v1252, %v1259
        %v1261 = vrot.slane %v1190, 4
        %v1262 = vsel %vm713, %v1261, %v1178
        %v1263 = vrot.slane %v1178, 4
        %v1264 = vsel %vm713, %v1190, %v1263
        %v1266 = vunpack.c.l.s4 1983009808
        %v1267 = vunpack.c.0.s8 %v1266
        %v1268 = vperm.slane %v1262, %v1267
        %v1270 = vunpack.c.l.s4 1983009808
        %v1271 = vunpack.c.0.s8 %v1270
        %v1272 = vperm.slane %v1264, %v1271
        %v1273 = vrot.slane %v1268, 4
        %v1274 = vsel %vm713, %v1273, %v1256
        %v1275 = vrot.slane %v1256, 4
        %v1276 = vsel %vm713, %v1268, %v1275
        %v1278 = vunpack.c.l.s4 1934713408
        %v1279 = vunpack.c.0.s8 %v1278
        %v1280 = vperm.slane %v1274, %v1279
        %v1282 = vunpack.c.l.s4 1934713408
        %v1283 = vunpack.c.0.s8 %v1282
        %v1284 = vperm.slane %v1276, %v1283
        %v1285 = vrot.slane %v1272, 4
        %v1286 = vsel %vm713, %v1285, %v1260
        %v1287 = vrot.slane %v1260, 4
        %v1288 = vsel %vm713, %v1272, %v1287
        %v1290 = vunpack.c.l.s4 1934713408
        %v1291 = vunpack.c.0.s8 %v1290
        %v1292 = vperm.slane %v1286, %v1291
        %v1294 = vunpack.c.l.s4 1934713408
        %v1295 = vunpack.c.0.s8 %v1294
        %v1296 = vperm.slane %v1288, %v1295
        %v1297 = vrot.slane %v1280, 4
        %v1298 = vsel %vm713, 0.0, %v1297
        %v1299 = vrot.slane %v1284, 4
        %v1300 = vsel %vm713, 0.0, %v1299
        %v1301 = vrot.slane %v1292, 4
        %v1302 = vsel %vm713, 0.0, %v1301
        %v1303 = vrot.slane %v1296, 4
        %v1304 = vsel %vm713, 0.0, %v1303
        %v1305 = vsel %vm713, %v1243, %v1224
        %v1307 = vunpack.c.l.s4 1983009808
        %v1308 = vunpack.c.0.s8 %v1307
        %v1309 = vperm.slane %v1305, %v1308
        %v1310 = vrot.slane %v1244, 4
        %v1311 = vsel %vm713, %v1310, %v1242
        %v1313 = vunpack.c.l.s4 1983009808
        %v1314 = vunpack.c.0.s8 %v1313
        %v1315 = vperm.slane %v1311, %v1314
        %v1316 = vsel %vm713, %v1247, %v1236
        %v1318 = vunpack.c.l.s4 1983009808
        %v1319 = vunpack.c.0.s8 %v1318
        %v1320 = vperm.slane %v1316, %v1319
        %v1321 = vrot.slane %v1248, 4
        %v1322 = vsel %vm713, %v1321, %v1246
        %v1324 = vunpack.c.l.s4 1983009808
        %v1325 = vunpack.c.0.s8 %v1324
        %v1326 = vperm.slane %v1322, %v1325
        %v1327 = vrot.slane %v1315, 4
        %v1328 = vsel %vm713, %v1327, %v1309
        %v1329 = vrot.slane %v1309, 4
        %v1330 = vsel %vm713, %v1315, %v1329
        %v1332 = vunpack.c.l.s4 1934713408
        %v1333 = vunpack.c.0.s8 %v1332
        %v1334 = vperm.slane %v1328, %v1333
        %v1336 = vunpack.c.l.s4 1934713408
        %v1337 = vunpack.c.0.s8 %v1336
        %v1338 = vperm.slane %v1330, %v1337
        %v1339 = vrot.slane %v1326, 4
        %v1340 = vsel %vm713, %v1339, %v1320
        %v1341 = vrot.slane %v1320, 4
        %v1342 = vsel %vm713, %v1326, %v1341
        %v1344 = vunpack.c.l.s4 1934713408
        %v1345 = vunpack.c.0.s8 %v1344
        %v1346 = vperm.slane %v1340, %v1345
        %v1348 = vunpack.c.l.s4 1934713408
        %v1349 = vunpack.c.0.s8 %v1348
        %v1350 = vperm.slane %v1342, %v1349
        %v1351 = vrot.slane %v1346, 4
        %v1352 = vsel %vm713, %v1351, %v1334
        %v1353 = vrot.slane %v1334, 4
        %v1354 = vsel %vm713, %v1346, %v1353
        %v1355 = vrot.slane %v1350, 4
        %v1356 = vsel %vm713, %v1355, %v1338
        %v1357 = vrot.slane %v1338, 4
        %v1358 = vsel %vm713, %v1350, %v1357
        %v1359 = vsel %vm713, %v1299, %v1280
        %v1361 = vunpack.c.l.s4 1983009808
        %v1362 = vunpack.c.0.s8 %v1361
        %v1363 = vperm.slane %v1359, %v1362
        %v1364 = vrot.slane %v1300, 4
        %v1365 = vsel %vm713, %v1364, %v1298
        %v1367 = vunpack.c.l.s4 1983009808
        %v1368 = vunpack.c.0.s8 %v1367
        %v1369 = vperm.slane %v1365, %v1368
        %v1370 = vsel %vm713, %v1303, %v1292
        %v1372 = vunpack.c.l.s4 1983009808
        %v1373 = vunpack.c.0.s8 %v1372
        %v1374 = vperm.slane %v1370, %v1373
        %v1375 = vrot.slane %v1304, 4
        %v1376 = vsel %vm713, %v1375, %v1302
        %v1378 = vunpack.c.l.s4 1983009808
        %v1379 = vunpack.c.0.s8 %v1378
        %v1380 = vperm.slane %v1376, %v1379
        %v1381 = vrot.slane %v1369, 4
        %v1382 = vsel %vm713, %v1381, %v1363
        %v1383 = vrot.slane %v1363, 4
        %v1384 = vsel %vm713, %v1369, %v1383
        %v1386 = vunpack.c.l.s4 1934713408
        %v1387 = vunpack.c.0.s8 %v1386
        %v1388 = vperm.slane %v1382, %v1387
        %v1390 = vunpack.c.l.s4 1934713408
        %v1391 = vunpack.c.0.s8 %v1390
        %v1392 = vperm.slane %v1384, %v1391
        %v1393 = vrot.slane %v1380, 4
        %v1394 = vsel %vm713, %v1393, %v1374
        %v1395 = vrot.slane %v1374, 4
        %v1396 = vsel %vm713, %v1380, %v1395
        %v1398 = vunpack.c.l.s4 1934713408
        %v1399 = vunpack.c.0.s8 %v1398
        %v1400 = vperm.slane %v1394, %v1399
        %v1402 = vunpack.c.l.s4 1934713408
        %v1403 = vunpack.c.0.s8 %v1402
        %v1404 = vperm.slane %v1396, %v1403
        %v1405 = vrot.slane %v1400, 4
        %v1406 = vsel %vm713, %v1405, %v1388
        %v1407 = vrot.slane %v1388, 4
        %v1408 = vsel %vm713, %v1400, %v1407
        %v1409 = vrot.slane %v1404, 4
        %v1410 = vsel %vm713, %v1409, %v1392
        %v1411 = vrot.slane %v1392, 4
        %v1412 = vsel %vm713, %v1404, %v1411
        %v1413 = vpack.c.bf16 %v872, %v872
        %v1414 = vpack.c.bf16 %v926, %v926
        %v1415 = vpack.c.bf16 %v874, %v874
        %v1416 = vpack.c.bf16 %v928, %v928
        %v1417 = vpack.c.bf16 %v876, %v876
        %v1418 = vpack.c.bf16 %v930, %v930
        %v1419 = vpack.c.bf16 %v878, %v878
        %v1420 = vpack.c.bf16 %v932, %v932
        %v1421 = vpack.c.bf16 %v1112, %v1112
        %v1422 = vpack.c.bf16 %v1166, %v1166
        %v1423 = vpack.c.bf16 %v1114, %v1114
        %v1424 = vpack.c.bf16 %v1168, %v1168
        %v1425 = vpack.c.bf16 %v1116, %v1116
        %v1426 = vpack.c.bf16 %v1170, %v1170
        %v1427 = vpack.c.bf16 %v1118, %v1118
        %v1428 = vpack.c.bf16 %v1172, %v1172
        %v1431 = vunpack.c.l.b16 %v1413
        %v1432 = vunpack.c.l.b16 %v1414
        %v1433 = vpack.c.b16 %v1432, %v1431
        %v1436 = vunpack.c.l.b16 %v1421
        %v1437 = vunpack.c.l.b16 %v1422
        %v1438 = vpack.c.b16 %v1437, %v1436
        %vm1439 = vcmask 64512
        %v1441 = vsel %vm1439, %v1433, 0
        %v1444 = vsel %vm1439, %v1438, 0
        %1446 = vmatpush.bf16.xpose.msra.mxu0 0
        %1447 = vmatpush.bf16.xpose.msra.mxu0 0
        %1448 = vmatpush.bf16.xpose.msra.mxu0 0
        %1449 = vmatpush.bf16.xpose.msra.mxu0 0
        %1450 = vmatpush.bf16.xpose.msra.mxu0 0
        %1451 = vmatpush.bf16.xpose.msra.mxu0 0
        %1452 = vmatpush.bf16.xpose.msra.mxu0 0
        %1453 = vmatpush.bf16.xpose.msra.mxu0 %v1444
        %1454 = vmatmul.bf16.gmra.mxu0 %v1441
        %v1455 = vpop.f32.mrf.mxu0
        %v1456 = vadd.f32 0.0, %v1455
        %v1457 = vpop.f32.mrf.mxu0
        %v1458 = vadd.f32 0.0, %v1457
        %1459 = vdwg.mxu0
        %v1462 = vunpack.c.l.b16 %v1415
        %v1463 = vunpack.c.l.b16 %v1416
        %v1464 = vpack.c.b16 %v1463, %v1462
        %v1467 = vunpack.c.l.b16 %v1423
        %v1468 = vunpack.c.l.b16 %v1424
        %v1469 = vpack.c.b16 %v1468, %v1467
        %v1471 = vsel %vm1439, %v1464, 0
        %v1474 = vsel %vm1439, %v1469, 0
        %1476 = vmatpush.bf16.xpose.msra.mxu0 0
        %1477 = vmatpush.bf16.xpose.msra.mxu0 0
        %1478 = vmatpush.bf16.xpose.msra.mxu0 0
        %1479 = vmatpush.bf16.xpose.msra.mxu0 0
        %1480 = vmatpush.bf16.xpose.msra.mxu0 0
        %1481 = vmatpush.bf16.xpose.msra.mxu0 0
        %1482 = vmatpush.bf16.xpose.msra.mxu0 0
        %1483 = vmatpush.bf16.xpose.msra.mxu0 %v1474
        %1484 = vmatmul.bf16.gmra.mxu0 %v1471
        %v1485 = vpop.f32.mrf.mxu0
        %v1486 = vadd.f32 0.0, %v1485
        %v1487 = vpop.f32.mrf.mxu0
        %v1488 = vadd.f32 0.0, %v1487
        %1489 = vdwg.mxu0
        %v1492 = vunpack.c.l.b16 %v1417
        %v1493 = vunpack.c.l.b16 %v1418
        %v1494 = vpack.c.b16 %v1493, %v1492
        %v1497 = vunpack.c.l.b16 %v1425
        %v1498 = vunpack.c.l.b16 %v1426
        %v1499 = vpack.c.b16 %v1498, %v1497
        %v1501 = vsel %vm1439, %v1494, 0
        %v1504 = vsel %vm1439, %v1499, 0
        %1506 = vmatpush.bf16.xpose.msra.mxu0 0
        %1507 = vmatpush.bf16.xpose.msra.mxu0 0
        %1508 = vmatpush.bf16.xpose.msra.mxu0 0
        %1509 = vmatpush.bf16.xpose.msra.mxu0 0
        %1510 = vmatpush.bf16.xpose.msra.mxu0 0
        %1511 = vmatpush.bf16.xpose.msra.mxu0 0
        %1512 = vmatpush.bf16.xpose.msra.mxu0 0
        %1513 = vmatpush.bf16.xpose.msra.mxu0 %v1504
        %1514 = vmatmul.bf16.gmra.mxu0 %v1501
        %v1515 = vpop.f32.mrf.mxu0
        %v1516 = vadd.f32 0.0, %v1515
        %v1517 = vpop.f32.mrf.mxu0
        %v1518 = vadd.f32 0.0, %v1517
        %1519 = vdwg.mxu0
        %v1522 = vunpack.c.l.b16 %v1419
        %v1523 = vunpack.c.l.b16 %v1420
        %v1524 = vpack.c.b16 %v1523, %v1522
        %v1527 = vunpack.c.l.b16 %v1427
        %v1528 = vunpack.c.l.b16 %v1428
        %v1529 = vpack.c.b16 %v1528, %v1527
        %v1531 = vsel %vm1439, %v1524, 0
        %v1534 = vsel %vm1439, %v1529, 0
        %1536 = vmatpush.bf16.xpose.msra.mxu0 0
        %1537 = vmatpush.bf16.xpose.msra.mxu0 0
        %1538 = vmatpush.bf16.xpose.msra.mxu0 0
        %1539 = vmatpush.bf16.xpose.msra.mxu0 0
        %1540 = vmatpush.bf16.xpose.msra.mxu0 0
        %1541 = vmatpush.bf16.xpose.msra.mxu0 0
        %1542 = vmatpush.bf16.xpose.msra.mxu0 0
        %1543 = vmatpush.bf16.xpose.msra.mxu0 %v1534
        %1544 = vmatmul.bf16.gmra.mxu0 %v1531
        %v1545 = vpop.f32.mrf.mxu0
        %v1546 = vadd.f32 0.0, %v1545
        %v1547 = vpop.f32.mrf.mxu0
        %v1548 = vadd.f32 0.0, %v1547
        %1549 = vdwg.mxu0
        %v1550 = vadd.f32 %v1456, %v556
        %v1551 = vadd.f32 %v1458, %v557
        %v1552 = vadd.f32 %v1486, %v556
        %v1553 = vadd.f32 %v1488, %v557
        %v1554 = vadd.f32 %v1516, %v556
        %v1555 = vadd.f32 %v1518, %v557
        %v1556 = vadd.f32 %v1546, %v556
        %v1557 = vadd.f32 %v1548, %v557
        %vm1558 = vcmask 130048
        %v1559 = vsel %vm1558, %v1550, -inf
        %1560 = vmax.xlane.f32.xlu0 %v1559
        %v1561 = vpop.xlane.xlu0 %1560
        %v1562 = vsel %vm1558, %v1551, -inf
        %1563 = vmax.xlane.f32.xlu0 %v1562
        %v1564 = vpop.xlane.xlu0 %1563
        %v1565 = vsel %vm1558, %v1552, -inf
        %1566 = vmax.xlane.f32.xlu0 %v1565
        %v1567 = vpop.xlane.xlu0 %1566
        %v1568 = vsel %vm1558, %v1553, -inf
        %1569 = vmax.xlane.f32.xlu0 %v1568
        %v1570 = vpop.xlane.xlu0 %1569
        %v1571 = vsel %vm1558, %v1554, -inf
        %1572 = vmax.xlane.f32.xlu0 %v1571
        %v1573 = vpop.xlane.xlu0 %1572
        %v1574 = vsel %vm1558, %v1555, -inf
        %1575 = vmax.xlane.f32.xlu0 %v1574
        %v1576 = vpop.xlane.xlu0 %1575
        %v1577 = vsel %vm1558, %v1556, -inf
        %1578 = vmax.xlane.f32.xlu0 %v1577
        %v1579 = vpop.xlane.xlu0 %1578
        %v1580 = vsel %vm1558, %v1557, -inf
        %1581 = vmax.xlane.f32.xlu0 %v1580
        %v1582 = vpop.xlane.xlu0 %1581
        %v1583 = vsub.f32 %v1550, %v1561
        %v1584 = vsub.f32 %v1551, %v1564
        %v1585 = vsub.f32 %v1552, %v1567
        %v1586 = vsub.f32 %v1553, %v1570
        %v1587 = vsub.f32 %v1554, %v1573
        %v1588 = vsub.f32 %v1555, %v1576
        %v1589 = vsub.f32 %v1556, %v1579
        %v1590 = vsub.f32 %v1557, %v1582
        %v1591 = vmul.f32 %v1583, 1.442695
        %v1592 = vpow.pop %v1591
        %v1593 = vmul.f32 %v1584, 1.442695
        %v1594 = vpow.pop %v1593
        %v1595 = vmul.f32 %v1585, 1.442695
        %v1596 = vpow.pop %v1595
        %v1597 = vmul.f32 %v1586, 1.442695
        %v1598 = vpow.pop %v1597
        %v1599 = vmul.f32 %v1587, 1.442695
        %v1600 = vpow.pop %v1599
        %v1601 = vmul.f32 %v1588, 1.442695
        %v1602 = vpow.pop %v1601
        %v1603 = vmul.f32 %v1589, 1.442695
        %v1604 = vpow.pop %v1603
        %v1605 = vmul.f32 %v1590, 1.442695
        %v1606 = vpow.pop %v1605
        %v1607 = vsel %vm1558, %v1592, 0.0
        %1608 = vadd.xlane.f32.xlu0 %v1607
        %v1609 = vpop.xlane.xlu0 %1608
        %v1610 = vsel %vm1558, %v1594, 0.0
        %1611 = vadd.xlane.f32.xlu0 %v1610
        %v1612 = vpop.xlane.xlu0 %1611
        %v1613 = vsel %vm1558, %v1596, 0.0
        %1614 = vadd.xlane.f32.xlu0 %v1613
        %v1615 = vpop.xlane.xlu0 %1614
        %v1616 = vsel %vm1558, %v1598, 0.0
        %1617 = vadd.xlane.f32.xlu0 %v1616
        %v1618 = vpop.xlane.xlu0 %1617
        %v1619 = vsel %vm1558, %v1600, 0.0
        %1620 = vadd.xlane.f32.xlu0 %v1619
        %v1621 = vpop.xlane.xlu0 %1620
        %v1622 = vsel %vm1558, %v1602, 0.0
        %1623 = vadd.xlane.f32.xlu0 %v1622
        %v1624 = vpop.xlane.xlu0 %1623
        %v1625 = vsel %vm1558, %v1604, 0.0
        %1626 = vadd.xlane.f32.xlu0 %v1625
        %v1627 = vpop.xlane.xlu0 %1626
        %v1628 = vsel %vm1558, %v1606, 0.0
        %1629 = vadd.xlane.f32.xlu0 %v1628
        %v1630 = vpop.xlane.xlu0 %1629
        %v1631 = vrcp.pop %v1609
        %v1632 = vrcp.pop %v1612
        %v1633 = vrcp.pop %v1615
        %v1634 = vrcp.pop %v1618
        %v1635 = vrcp.pop %v1621
        %v1636 = vrcp.pop %v1624
        %v1637 = vrcp.pop %v1627
        %v1638 = vrcp.pop %v1630
        %v1639 = vmul.f32 %v1592, %v1631
        %v1640 = vmul.f32 %v1594, %v1632
        %v1641 = vmul.f32 %v1596, %v1633
        %v1642 = vmul.f32 %v1598, %v1634
        %v1643 = vmul.f32 %v1600, %v1635
        %v1644 = vmul.f32 %v1602, %v1636
        %v1645 = vmul.f32 %v1604, %v1637
        %v1646 = vmul.f32 %v1606, %v1638
        %v1647 = vpack.c.bf16 %v1639, %v1639
        %v1648 = vpack.c.bf16 %v1640, %v1640
        %v1649 = vpack.c.bf16 %v1641, %v1641
        %v1650 = vpack.c.bf16 %v1642, %v1642
        %v1651 = vpack.c.bf16 %v1643, %v1643
        %v1652 = vpack.c.bf16 %v1644, %v1644
        %v1653 = vpack.c.bf16 %v1645, %v1645
        %v1654 = vpack.c.bf16 %v1646, %v1646
        %v1655 = vpack.c.bf16 %v1352, %v1352
        %v1656 = vpack.c.bf16 %v1406, %v1406
        %v1657 = vpack.c.bf16 %v1354, %v1354
        %v1658 = vpack.c.bf16 %v1408, %v1408
        %v1659 = vpack.c.bf16 %v1356, %v1356
        %v1660 = vpack.c.bf16 %v1410, %v1410
        %v1661 = vpack.c.bf16 %v1358, %v1358
        %v1662 = vpack.c.bf16 %v1412, %v1412
        %v1665 = vunpack.c.l.b16 %v1647
        %v1666 = vunpack.c.l.b16 %v1648
        %v1667 = vpack.c.b16 %v1666, %v1665
        %v1670 = vunpack.c.l.b16 %v1655
        %v1671 = vunpack.c.l.b16 %v1656
        %v1672 = vpack.c.b16 %v1671, %v1670
        %v1675 = vsel %vm1558, %v1667, 0
        %1677 = vmatpush.bf16.msra.mxu0 0
        %1678 = vmatpush.bf16.msra.mxu0 0
        %1679 = vmatpush.bf16.msra.mxu0 0
        %1680 = vmatpush.bf16.msra.mxu0 0
        %1681 = vmatpush.bf16.msra.mxu0 0
        %1682 = vmatpush.bf16.msra.mxu0 0
        %1683 = vmatpush.bf16.msra.mxu0 0
        %1684 = vmatpush.bf16.msra.mxu0 %v1672
        %1685 = vmatmul.bf16.gmra.mxu0 %v1675
        %v1686 = vpop.f32.mrf.mxu0
        %v1687 = vadd.f32 0.0, %v1686
        %v1688 = vpop.f32.mrf.mxu0
        %v1689 = vadd.f32 0.0, %v1688
        %1690 = vdwg.mxu0
        %v1693 = vunpack.c.l.b16 %v1649
        %v1694 = vunpack.c.l.b16 %v1650
        %v1695 = vpack.c.b16 %v1694, %v1693
        %v1698 = vunpack.c.l.b16 %v1657
        %v1699 = vunpack.c.l.b16 %v1658
        %v1700 = vpack.c.b16 %v1699, %v1698
        %v1703 = vsel %vm1558, %v1695, 0
        %1705 = vmatpush.bf16.msra.mxu0 0
        %1706 = vmatpush.bf16.msra.mxu0 0
        %1707 = vmatpush.bf16.msra.mxu0 0
        %1708 = vmatpush.bf16.msra.mxu0 0
        %1709 = vmatpush.bf16.msra.mxu0 0
        %1710 = vmatpush.bf16.msra.mxu0 0
        %1711 = vmatpush.bf16.msra.mxu0 0
        %1712 = vmatpush.bf16.msra.mxu0 %v1700
        %1713 = vmatmul.bf16.gmra.mxu0 %v1703
        %v1714 = vpop.f32.mrf.mxu0
        %v1715 = vadd.f32 0.0, %v1714
        %v1716 = vpop.f32.mrf.mxu0
        %v1717 = vadd.f32 0.0, %v1716
        %1718 = vdwg.mxu0
        %v1721 = vunpack.c.l.b16 %v1651
        %v1722 = vunpack.c.l.b16 %v1652
        %v1723 = vpack.c.b16 %v1722, %v1721
        %v1726 = vunpack.c.l.b16 %v1659
        %v1727 = vunpack.c.l.b16 %v1660
        %v1728 = vpack.c.b16 %v1727, %v1726
        %v1731 = vsel %vm1558, %v1723, 0
        %1733 = vmatpush.bf16.msra.mxu0 0
        %1734 = vmatpush.bf16.msra.mxu0 0
        %1735 = vmatpush.bf16.msra.mxu0 0
        %1736 = vmatpush.bf16.msra.mxu0 0
        %1737 = vmatpush.bf16.msra.mxu0 0
        %1738 = vmatpush.bf16.msra.mxu0 0
        %1739 = vmatpush.bf16.msra.mxu0 0
        %1740 = vmatpush.bf16.msra.mxu0 %v1728
        %1741 = vmatmul.bf16.gmra.mxu0 %v1731
        %v1742 = vpop.f32.mrf.mxu0
        %v1743 = vadd.f32 0.0, %v1742
        %v1744 = vpop.f32.mrf.mxu0
        %v1745 = vadd.f32 0.0, %v1744
        %1746 = vdwg.mxu0
        %v1749 = vunpack.c.l.b16 %v1653
        %v1750 = vunpack.c.l.b16 %v1654
        %v1751 = vpack.c.b16 %v1750, %v1749
        %v1754 = vunpack.c.l.b16 %v1661
        %v1755 = vunpack.c.l.b16 %v1662
        %v1756 = vpack.c.b16 %v1755, %v1754
        %v1759 = vsel %vm1558, %v1751, 0
        %1761 = vmatpush.bf16.msra.mxu0 0
        %1762 = vmatpush.bf16.msra.mxu0 0
        %1763 = vmatpush.bf16.msra.mxu0 0
        %1764 = vmatpush.bf16.msra.mxu0 0
        %1765 = vmatpush.bf16.msra.mxu0 0
        %1766 = vmatpush.bf16.msra.mxu0 0
        %1767 = vmatpush.bf16.msra.mxu0 0
        %1768 = vmatpush.bf16.msra.mxu0 %v1756
        %1769 = vmatmul.bf16.gmra.mxu0 %v1759
        %v1770 = vpop.f32.mrf.mxu0
        %v1771 = vadd.f32 0.0, %v1770
        %v1772 = vpop.f32.mrf.mxu0
        %v1773 = vadd.f32 0.0, %v1772
        %1774 = vdwg.mxu0
        %v1775 = vrot.slane %v1743, 4
        %v1776 = vsel %vm713, %v1775, %v1687
        %v1777 = vrot.slane %v1687, 4
        %v1778 = vsel %vm713, %v1743, %v1777
        %v1780 = vunpack.c.l.s4 1983009808
        %v1781 = vunpack.c.0.s8 %v1780
        %v1782 = vperm.slane %v1776, %v1781
        %v1784 = vunpack.c.l.s4 1983009808
        %v1785 = vunpack.c.0.s8 %v1784
        %v1786 = vperm.slane %v1778, %v1785
        %v1787 = vrot.slane %v1771, 4
        %v1788 = vsel %vm713, %v1787, %v1715
        %v1789 = vrot.slane %v1715, 4
        %v1790 = vsel %vm713, %v1771, %v1789
        %v1792 = vunpack.c.l.s4 1983009808
        %v1793 = vunpack.c.0.s8 %v1792
        %v1794 = vperm.slane %v1788, %v1793
        %v1796 = vunpack.c.l.s4 1983009808
        %v1797 = vunpack.c.0.s8 %v1796
        %v1798 = vperm.slane %v1790, %v1797
        %v1799 = vrot.slane %v1794, 4
        %v1800 = vsel %vm713, %v1799, %v1782
        %v1801 = vrot.slane %v1782, 4
        %v1802 = vsel %vm713, %v1794, %v1801
        %v1804 = vunpack.c.l.s4 1934713408
        %v1805 = vunpack.c.0.s8 %v1804
        %v1806 = vperm.slane %v1800, %v1805
        %v1808 = vunpack.c.l.s4 1934713408
        %v1809 = vunpack.c.0.s8 %v1808
        %v1810 = vperm.slane %v1802, %v1809
        %v1811 = vrot.slane %v1798, 4
        %v1812 = vsel %vm713, %v1811, %v1786
        %v1813 = vrot.slane %v1786, 4
        %v1814 = vsel %vm713, %v1798, %v1813
        %v1816 = vunpack.c.l.s4 1934713408
        %v1817 = vunpack.c.0.s8 %v1816
        %v1818 = vperm.slane %v1812, %v1817
        %v1820 = vunpack.c.l.s4 1934713408
        %v1821 = vunpack.c.0.s8 %v1820
        %v1822 = vperm.slane %v1814, %v1821
        %v1823 = vrot.slane %v1806, 4
        %v1824 = vsel %vm713, 0.0, %v1823
        %v1825 = vrot.slane %v1810, 4
        %v1826 = vsel %vm713, 0.0, %v1825
        %v1827 = vrot.slane %v1818, 4
        %v1828 = vsel %vm713, 0.0, %v1827
        %v1829 = vrot.slane %v1822, 4
        %v1830 = vsel %vm713, 0.0, %v1829
        %v1831 = vrot.slane %v1745, 4
        %v1832 = vsel %vm713, %v1831, %v1689
        %v1833 = vrot.slane %v1689, 4
        %v1834 = vsel %vm713, %v1745, %v1833
        %v1836 = vunpack.c.l.s4 1983009808
        %v1837 = vunpack.c.0.s8 %v1836
        %v1838 = vperm.slane %v1832, %v1837
        %v1840 = vunpack.c.l.s4 1983009808
        %v1841 = vunpack.c.0.s8 %v1840
        %v1842 = vperm.slane %v1834, %v1841
        %v1843 = vrot.slane %v1773, 4
        %v1844 = vsel %vm713, %v1843, %v1717
        %v1845 = vrot.slane %v1717, 4
        %v1846 = vsel %vm713, %v1773, %v1845
        %v1848 = vunpack.c.l.s4 1983009808
        %v1849 = vunpack.c.0.s8 %v1848
        %v1850 = vperm.slane %v1844, %v1849
        %v1852 = vunpack.c.l.s4 1983009808
        %v1853 = vunpack.c.0.s8 %v1852
        %v1854 = vperm.slane %v1846, %v1853
        %v1855 = vrot.slane %v1850, 4
        %v1856 = vsel %vm713, %v1855, %v1838
        %v1857 = vrot.slane %v1838, 4
        %v1858 = vsel %vm713, %v1850, %v1857
        %v1860 = vunpack.c.l.s4 1934713408
        %v1861 = vunpack.c.0.s8 %v1860
        %v1862 = vperm.slane %v1856, %v1861
        %v1864 = vunpack.c.l.s4 1934713408
        %v1865 = vunpack.c.0.s8 %v1864
        %v1866 = vperm.slane %v1858, %v1865
        %v1867 = vrot.slane %v1854, 4
        %v1868 = vsel %vm713, %v1867, %v1842
        %v1869 = vrot.slane %v1842, 4
        %v1870 = vsel %vm713, %v1854, %v1869
        %v1872 = vunpack.c.l.s4 1934713408
        %v1873 = vunpack.c.0.s8 %v1872
        %v1874 = vperm.slane %v1868, %v1873
        %v1876 = vunpack.c.l.s4 1934713408
        %v1877 = vunpack.c.0.s8 %v1876
        %v1878 = vperm.slane %v1870, %v1877
        %v1879 = vrot.slane %v1862, 4
        %v1880 = vsel %vm713, 0.0, %v1879
        %v1881 = vrot.slane %v1866, 4
        %v1882 = vsel %vm713, 0.0, %v1881
        %v1883 = vrot.slane %v1874, 4
        %v1884 = vsel %vm713, 0.0, %v1883
        %v1885 = vrot.slane %v1878, 4
        %v1886 = vsel %vm713, 0.0, %v1885
        %v1887 = vsel %vm713, %v1825, %v1806
        %v1889 = vunpack.c.l.s4 1983009808
        %v1890 = vunpack.c.0.s8 %v1889
        %v1891 = vperm.slane %v1887, %v1890
        %v1892 = vrot.slane %v1826, 4
        %v1893 = vsel %vm713, %v1892, %v1824
        %v1895 = vunpack.c.l.s4 1983009808
        %v1896 = vunpack.c.0.s8 %v1895
        %v1897 = vperm.slane %v1893, %v1896
        %v1898 = vsel %vm713, %v1829, %v1818
        %v1900 = vunpack.c.l.s4 1983009808
        %v1901 = vunpack.c.0.s8 %v1900
        %v1902 = vperm.slane %v1898, %v1901
        %v1903 = vrot.slane %v1830, 4
        %v1904 = vsel %vm713, %v1903, %v1828
        %v1906 = vunpack.c.l.s4 1983009808
        %v1907 = vunpack.c.0.s8 %v1906
        %v1908 = vperm.slane %v1904, %v1907
        %v1909 = vrot.slane %v1897, 4
        %v1910 = vsel %vm713, %v1909, %v1891
        %v1911 = vrot.slane %v1891, 4
        %v1912 = vsel %vm713, %v1897, %v1911
        %v1914 = vunpack.c.l.s4 1934713408
        %v1915 = vunpack.c.0.s8 %v1914
        %v1916 = vperm.slane %v1910, %v1915
        %v1918 = vunpack.c.l.s4 1934713408
        %v1919 = vunpack.c.0.s8 %v1918
        %v1920 = vperm.slane %v1912, %v1919
        %v1921 = vrot.slane %v1908, 4
        %v1922 = vsel %vm713, %v1921, %v1902
        %v1923 = vrot.slane %v1902, 4
        %v1924 = vsel %vm713, %v1908, %v1923
        %v1926 = vunpack.c.l.s4 1934713408
        %v1927 = vunpack.c.0.s8 %v1926
        %v1928 = vperm.slane %v1922, %v1927
        %v1930 = vunpack.c.l.s4 1934713408
        %v1931 = vunpack.c.0.s8 %v1930
        %v1932 = vperm.slane %v1924, %v1931
        %v1933 = vrot.slane %v1928, 4
        %v1934 = vsel %vm713, %v1933, %v1916
        %v1935 = vrot.slane %v1916, 4
        %v1936 = vsel %vm713, %v1928, %v1935
        %v1937 = vrot.slane %v1932, 4
        %v1938 = vsel %vm713, %v1937, %v1920
        %v1939 = vrot.slane %v1920, 4
        %v1940 = vsel %vm713, %v1932, %v1939
        %v1941 = vsel %vm713, %v1881, %v1862
        %v1943 = vunpack.c.l.s4 1983009808
        %v1944 = vunpack.c.0.s8 %v1943
        %v1945 = vperm.slane %v1941, %v1944
        %v1946 = vrot.slane %v1882, 4
        %v1947 = vsel %vm713, %v1946, %v1880
        %v1949 = vunpack.c.l.s4 1983009808
        %v1950 = vunpack.c.0.s8 %v1949
        %v1951 = vperm.slane %v1947, %v1950
        %v1952 = vsel %vm713, %v1885, %v1874
        %v1954 = vunpack.c.l.s4 1983009808
        %v1955 = vunpack.c.0.s8 %v1954
        %v1956 = vperm.slane %v1952, %v1955
        %v1957 = vrot.slane %v1886, 4
        %v1958 = vsel %vm713, %v1957, %v1884
        %v1960 = vunpack.c.l.s4 1983009808
        %v1961 = vunpack.c.0.s8 %v1960
        %v1962 = vperm.slane %v1958, %v1961
        %v1963 = vrot.slane %v1951, 4
        %v1964 = vsel %vm713, %v1963, %v1945
        %v1965 = vrot.slane %v1945, 4
        %v1966 = vsel %vm713, %v1951, %v1965
        %v1968 = vunpack.c.l.s4 1934713408
        %v1969 = vunpack.c.0.s8 %v1968
        %v1970 = vperm.slane %v1964, %v1969
        %v1972 = vunpack.c.l.s4 1934713408
        %v1973 = vunpack.c.0.s8 %v1972
        %v1974 = vperm.slane %v1966, %v1973
        %v1975 = vrot.slane %v1962, 4
        %v1976 = vsel %vm713, %v1975, %v1956
        %v1977 = vrot.slane %v1956, 4
        %v1978 = vsel %vm713, %v1962, %v1977
        %v1980 = vunpack.c.l.s4 1934713408
        %v1981 = vunpack.c.0.s8 %v1980
        %v1982 = vperm.slane %v1976, %v1981
        %v1984 = vunpack.c.l.s4 1934713408
        %v1985 = vunpack.c.0.s8 %v1984
        %v1986 = vperm.slane %v1978, %v1985
        %v1987 = vrot.slane %v1982, 4
        %v1988 = vsel %vm713, %v1987, %v1970
        %v1989 = vrot.slane %v1970, 4
        %v1990 = vsel %vm713, %v1982, %v1989
        %v1991 = vrot.slane %v1986, 4
        %v1992 = vsel %vm713, %v1991, %v1974
        %v1993 = vrot.slane %v1974, 4
        %v1994 = vsel %vm713, %v1986, %v1993
        %1997 = vrot.lane.b32.xlu0 %v1936, 8
        %v1998 = vpop.permute.xlu0 %1997
        %1999 = vrot.lane.b32.xlu0 %v1990, 8
        %v2000 = vpop.permute.xlu0 %1999
        %2005 = vrot.lane.b32.xlu0 %v1938, 16
        %v2006 = vpop.permute.xlu0 %2005
        %2007 = vrot.lane.b32.xlu0 %v1992, 16
        %v2008 = vpop.permute.xlu0 %2007
        %2013 = vrot.lane.b32.xlu0 %v1940, 24
        %v2014 = vpop.permute.xlu0 %2013
        %2015 = vrot.lane.b32.xlu0 %v1994, 24
        %v2016 = vpop.permute.xlu0 %2015
        %v2019 = vsel %vm1439, %v1934, %v1998
        %v2020 = vsel %vm1439, %v1988, %v2000
        %v2021 = vsel %vm1558, %v2019, %v2006
        %v2022 = vsel %vm1558, %v2020, %v2008
        %vm2023 = vcmask 195584
        %v2024 = vsel %vm2023, %v2021, %v2014
        %v2025 = vsel %vm2023, %v2022, %v2016
        %v2026 = vld [vmem:[%s532] sm:$0xff]
        %v2027 = vld [vmem:[%s532 + $0x8] sm:$0xff]
        %v2028 = vld [vmem:[%s532 + $0x10] sm:$0xff]
        %v2029 = vld [vmem:[%s532 + $0x18] sm:$0xff]
        %v2030 = vpack.c.bf16 %v2025, %v2024
        %v2031 = vpack.c.bf16 %v2027, %v2026
        %v2032 = vpack.c.bf16 %v2029, %v2028
        %v2033 = vld [vmem:[%s535] sm:$0x1]
        %v2035 = vperm.slane %v2033, 0
        %v2038 = vsel %vm560, %v2030, 0
        %2040 = vmatpush.bf16.msra.mxu0 0
        %2041 = vmatpush.bf16.msra.mxu0 0
        %2042 = vmatpush.bf16.msra.mxu0 0
        %2043 = vmatpush.bf16.msra.mxu0 0
        %2044 = vmatpush.bf16.msra.mxu0 0
        %2045 = vmatpush.bf16.msra.mxu0 0
        %2046 = vmatpush.bf16.msra.mxu0 %v2032
        %2047 = vmatpush.bf16.msra.mxu0 %v2031
        %2048 = vmatmul.bf16.gmra.mxu0 %v2038
        %v2049 = vpop.f32.mrf.mxu0
        %v2050 = vadd.f32 %v2035, %v2049
        %v2051 = vpop.f32.mrf.mxu0
        %v2052 = vadd.f32 %v2035, %v2051
        %2053 = vdwg.mxu0
        %v2054 = vadd.f32 %v2050, %v552
        %v2055 = vadd.f32 %v2052, %v553
        %2056 = vst.msk [vmem:[%s550] sm:$0xff] %vm560, %v2054
        %2057 = vst.msk [vmem:[%s550 + $0x8] sm:$0xff] %vm560, %v2055
        %vm2058 = vcmask 125952
        %2059 = vst.msk [vmem:[%s498] sm:$0xf] %vm2058, %v1647
        %2060 = vst.msk [vmem:[%s498 + $0x4] sm:$0xf] %vm2058, %v1648
        %2061 = vst.msk [vmem:[%s498 + $0x8] sm:$0xf] %vm2058, %v1649
        %2062 = vst.msk [vmem:[%s498 + $0xc] sm:$0xf] %vm2058, %v1650
        %2063 = vst.msk [vmem:[%s498 + $0x10] sm:$0xf] %vm2058, %v1651
        %2064 = vst.msk [vmem:[%s498 + $0x14] sm:$0xf] %vm2058, %v1652
        %2065 = vst.msk [vmem:[%s498 + $0x18] sm:$0xf] %vm2058, %v1653
        %2066 = vst.msk [vmem:[%s498 + $0x1c] sm:$0xf] %vm2058, %v1654
        %p2067 = scmp.lt.s32.totalorder %s29, 0
        %s2068 = scalar_select %p2067, %s29, 0
        %p2069 = scmp.lt.s32.totalorder %s30, 1
        %s2070 = scalar_select %p2069, %s30, 1
        %s2071 = smul.addr %s2070, 2
        %s2072 = smul.addr %s2068, 4
        %s2073 = sadd.s32 %s2071, %s2072
        %s2074 = smul.addr %s2073, 8
        %s2075 = scalar_lea.vmem %s9, %s2074
        %s2076 = sand.u32 %s311, 1
        %s2077 = scalar_lea.sflag [#allocation3], %s2076
        %s2078 = sand.u32 %s311, 1
        %s2079 = smul.addr %s2078, 32
        %s2080 = scalar_lea.vmem [#allocation2], %s2079
        // Predicated region
        $region57: #{mod_enc_layer.4} parent=55 // pred_check
          %p2081 = pneg %p293
        $region58: #{mod_enc_layer.4} parent=55 // pred_check_branch
          %2083 = sbr.rel (%p2081) target = $region60
        $region59: #{mod_enc_layer.4} parent=55 // pred_region
          _
        $region60: #{mod_enc_layer.4} parent=55 // pred_fallthru
          _
        // Predicated region
        $region61: #{mod_enc_layer.4} parent=55 // pred_check
          %p2084 = pneg %p321
        $region62: #{mod_enc_layer.4} parent=55 // pred_check_branch
          %2086 = sbr.rel (%p2084) target = $region64
        $region63: #{mod_enc_layer.4} parent=55 // pred_region
          %2088 = vsyncadd %s2077, 0
          %s2089 = smul.addr %s30, 8
          %s2090 = smul.addr %s29, 16
          %s2091 = sadd.s32 %s2089, %s2090
          %s2092 = smul.addr %s2091, 4
          %s2093 = scalar_lea.hbm %s10, %s2092
          %s2094 = sshll.u32 %s2080, 4
          %s2095 = int_to_ptr.vmem [resolvable:$true] %s2094
          %s2096 = sshll.u32 %s2093, 4
          %s2097 = int_to_ptr.hbm [resolvable:$true] %s2096
          %2102 = dma.vmem_to_hbm [thread:$0]  %s2095, 512, %s2097, %s2077, 64, 64, 4
        $region64: #{mod_enc_layer.4} parent=55 // pred_fallthru
          _
      $region56: #{mod_enc_layer.4} parent=5 // pred_fallthru
        _
      %p2103 = scmp.le.s32.totalorder 2, %s20
      // Predicated region
      $region65: #{mod_enc_layer.4} parent=5 // pred_check
        %p2104 = pneg %p2103
      $region66: #{mod_enc_layer.4} parent=5 // pred_check_branch
        %2106 = sbr.rel (%p2104) target = $region68
      $region67: #{mod_enc_layer.4} parent=5 // pred_region
        %s2107 = ssub.s32 %s20, 2
        // Predicated region
        $region69: #{mod_enc_layer.4} parent=67 // pred_check
          %p2108 = pneg %p299
        $region70: #{mod_enc_layer.4} parent=67 // pred_check_branch
          %2110 = sbr.rel (%p2108) target = $region72
        $region71: #{mod_enc_layer.4} parent=67 // pred_region
          %p2111 = scmp.lt.s32.totalorder %s31, 0
          %s2112 = scalar_select %p2111, %s31, 0
          %p2113 = scmp.lt.s32.totalorder %s32, 1
          %s2114 = scalar_select %p2113, %s32, 1
          %s2115 = smul.addr %s2114, 2
          %s2116 = smul.addr %s2112, 4
          %s2117 = sadd.s32 %s2115, %s2116
          %s2118 = smul.addr %s2117, 8
          %s2119 = scalar_lea.vmem %s9, %s2118
        $region72: #{mod_enc_layer.4} parent=67 // pred_fallthru
          _
        // Predicated region
        $region73: #{mod_enc_layer.4} parent=67 // pred_check
          %p2120 = pneg %p327
        $region74: #{mod_enc_layer.4} parent=67 // pred_check_branch
          %2122 = sbr.rel (%p2120) target = $region76
        $region75: #{mod_enc_layer.4} parent=67 // pred_region
          %s2123 = sand.u32 %s312, 1
          %s2124 = scalar_lea.sflag [#allocation3], %s2123
          %s2125 = sand.u32 %s312, 1
          %s2126 = smul.addr %s2125, 32
          %s2127 = scalar_lea.vmem [#allocation2], %s2126
          %2129 = dma.done %s2124, 512
        $region76: #{mod_enc_layer.4} parent=67 // pred_fallthru
          _
      $region68: #{mod_enc_layer.4} parent=5 // pred_fallthru
        _
    $region6: #{mod_enc_layer.4} parent=1 // loop_footer
      %s24 = sadd.s32 1, %s20
    $region7: #{mod_enc_layer.4} parent=1 // loop_footer_branch
      %19 = sbr.rel target = $region3
    $region8: #{mod_enc_layer.4} parent=1 // loop_exit
      _
    %2130 = vsyncpa [#allocation3], 1
    %s2131 = scalar_lea.sflag [#allocation3], 1
    %2132 = vsyncpa %s2131, 1

</llo_original>
